<compile_context>
chip_gen: v7x
topology: tpu7x:2x2x1
jax: 0.10.0
libtpu: 0.0.40
codegen_flags: <defaults>
</compile_context>

<pallas_src>
import functools
import math

import jax
import jax.numpy as jnp
from jax.experimental import pallas as pl
from jax.experimental.pallas import tpu as pltpu

DRN = 0.4
NEG_SLOPE = 0.01                        # torch.nn.LeakyReLU default
BN_SCALE = 1.0 / math.sqrt(1.0 + 1e-5)  # eval-mode BatchNorm1d, fresh running stats
OUT_W = 128                             # lane-dense padded output width


def _leaky(x):
    return jnp.where(x > 0, x, NEG_SLOPE * x)


def _safe_recip(x):
    """1/x where x>0 else 0, on the EUP (approx reciprocal), NaN/Inf free."""
    pos = x > 0
    return jnp.where(pos, pl.reciprocal(jnp.where(pos, x, 1.0), approx=True), 0.0)


def _ec_layer(pt, feat, coord, m, Wi, Wj, wcos, wsin, b1, W2, b2):
    """Pairwise-dense EIRCGNN / EdgeConv layer on a (bt, N, .) block.

    pt, m: (bt, N, 1); feat: (bt, N, f); coord: (bt, N, 2).
    Wi = W1[:f]-W1[2f:3f], Wj = W1[f:2f]+W1[2f:3f]  (first Linear, pre-split),
    wcos / wsin: cos/sin rows of W1; b1: (1, H); W2: (H, H+1); b2: (1, H+1).
    Returns (agg_pt, feat_out(H), coord_out(2)).
    """
    bt, N, f = feat.shape
    H = Wi.shape[1]
    dot = functools.partial(jnp.dot, preferred_element_type=jnp.float32)
    pair = functools.partial(jnp.einsum, "bic,bjc->bij",
                             preferred_element_type=jnp.float32)

    a0 = coord[..., 0:1]
    a1 = coord[..., 1:2]
    r2 = a0 * a0 + a1 * a1                                  # (bt, N, 1)
    coord_perp = jnp.concatenate([a1, -a0], axis=-1)        # (bt, N, 2)
    ones1 = jnp.ones_like(r2)

    # pairwise bilinear terms via batched einsums (no transposes, no one-hots)
    dotp = pair(coord, coord)          # a0_i a0_j + a1_i a1_j          (bt,N,N)
    cross = pair(coord_perp, coord)    # a1_i a0_j - a0_i a1_j
    r2j = pair(ones1, r2)              # r2_j broadcast over i
    mj = pair(ones1, m)                # m_j  broadcast over i

    # radius graph (inclusive, self-loops kept, same as torch_cluster.radius);
    # both endpoints must be valid particles
    d2 = r2 + r2j - 2.0 * dotp
    adj = jnp.where(d2 <= DRN * DRN, 1.0, 0.0) * m * mj     # (bt, N, N)

    # relative rotation cos/sin, guarded against zero-norm (padded) particles
    nrm2 = r2 * r2j
    inv_n = jnp.where(nrm2 > 0, jax.lax.rsqrt(jnp.where(nrm2 > 0, nrm2, 1.0)), 0.0)
    cos_ij = dotp * inv_n
    sin_ij = cross * inv_n

    # first Linear of the edge MLP as per-node partial matmuls:
    #   mlp_in @ W1 = feat_i@(W1a-W1c) + feat_j@(W1b+W1c) + cos*w1_cos + sin*w1_sin
    feat2 = feat.reshape(bt * N, f)
    Fi = dot(feat2, Wi).reshape(bt, N, H)
    Fj = dot(feat2, Wj).reshape(bt, N, H)

    h = (Fi[:, :, None, :] + Fj[:, None, :, :]
         + cos_ij[..., None] * wcos + sin_ij[..., None] * wsin + b1)   # (bt,N,N,H)
    act = _leaky(h * BN_SCALE)

    # pt-weighted aggregation, exactly as EdgeConv.aggregate:
    #   w_e = pt_i / sum_{j in N(i)} pt_i
    deg = jnp.sum(adj, axis=-1, keepdims=True)              # (bt, N, 1)
    denom = pt * deg
    w = (_safe_recip(denom) * pt) * adj                     # (bt, N, N)
    sum_w = jnp.sum(w, axis=-1, keepdims=True)              # (bt, N, 1)

    # second Linear commutes with the linear aggregation: aggregate first,
    # then one small matmul over nodes instead of one per edge.
    agg_act = jnp.sum(w[..., None] * act, axis=2)           # (bt, N, H)
    agg_msg = (dot(agg_act.reshape(bt * N, H), W2).reshape(bt, N, W2.shape[1])
               + sum_w * b2)                                # (bt, N, H+1)

    agg_pt = pt * sum_w
    agg_a0 = a0 * sum_w
    agg_a1 = a1 * sum_w

    # rotate aggregated coordinates by exp(2*pi*i*gamma)
    gamma = agg_msg[..., -1:]
    cg = jnp.cos(2.0 * jnp.pi * gamma)
    sg = jnp.sin(2.0 * jnp.pi * gamma)
    rot0 = agg_a0 * cg - agg_a1 * sg
    rot1 = agg_a0 * sg + agg_a1 * cg
    coord_out = jnp.concatenate([rot0, rot1], axis=-1)      # (bt, N, 2)

    return agg_pt, agg_msg[..., :-1], coord_out


def _smeftnet_kernel(inp_ref,
                     e0wi, e0wj, e0wc, e0ws, e0b1, e0w2, e0b2,
                     e1wi, e1wj, e1wc, e1ws, e1b1, e1w2, e1b2,
                     rw1, rb1, rw2, rb2, rw3, rb3,
                     out_ref):
    dot = functools.partial(jnp.dot, preferred_element_type=jnp.float32)

    inp = inp_ref[...]                       # (bt, N, 3) = [pt, angle0, angle1]
    bt, N, _ = inp.shape

    pt = inp[..., 0:1]
    a0 = inp[..., 1:2]
    a1 = inp[..., 2:3]
    m = jnp.where(jnp.abs(a0) + jnp.abs(a1) != 0, 1.0, 0.0)     # validity mask
    pt = pt * m
    feat = jnp.sqrt(a0 * a0 + a1 * a1) * m                      # |angle|, f = 1
    coord = jnp.concatenate([a0 * m, a1 * m], axis=-1)          # (bt, N, 2)

    # ---- two EIRCGNN layers, fully resident in VMEM / vregs ----------------
    pt, feat, coord = _ec_layer(pt, feat, coord, m,
                                e0wi[...], e0wj[...], e0wc[...], e0ws[...],
                                e0b1[...], e0w2[...], e0b2[...])
    pt, feat, coord = _ec_layer(pt, feat, coord, m,
                                e1wi[...], e1wj[...], e1wc[...], e1ws[...],
                                e1b1[...], e1w2[...], e1b2[...])

    # ---- pt-weighted readout + MLP, batched over all events of the block ---
    pt = pt * m
    denom = jnp.sum(pt, axis=1, keepdims=True)                  # (bt, 1, 1)
    w = _safe_recip(denom) * pt                                 # (bt, N, 1)
    pooled_feat = jnp.sum(w * feat, axis=1)                     # (bt, 10)
    pooled_coord = jnp.sum(w * coord, axis=1)                   # (bt, 2)

    h = _leaky((dot(pooled_feat, rw1[...]) + rb1[...]) * BN_SCALE)
    h = _leaky((dot(h, rw2[...]) + rb2[...]) * BN_SCALE)
    logit = dot(h, rw3[...]) + rb3[...]                         # (bt, 1)
    prob = 1.0 / (1.0 + jnp.exp(-logit))                        # Sigmoid

    # lane-dense padded output slab (one unmasked store per block)
    res = jnp.concatenate(
        [prob, pooled_coord, jnp.zeros((bt, OUT_W - 3), jnp.float32)], axis=-1)
    out_ref[:, 0, :] = res


# ----------------------------------------------------------------------------- glue
def _split_w1(W1, f):
    """Split the edge-MLP first Linear into per-node / cos / sin pieces."""
    Wi = W1[:f] - W1[2 * f:3 * f]
    Wj = W1[f:2 * f] + W1[2 * f:3 * f]
    wcos = W1[3 * f:3 * f + 1]
    wsin = W1[3 * f + 1:3 * f + 2]
    return Wi, Wj, wcos, wsin


def init_params(key):
    """Deterministic synthetic weights matching SMEFTNet default shapes:
       conv_params=((0.0,[10,10]),(0.0,[10,10])) -> EC MLPs [5,10,11] & [32,10,11];
       readout_params=(0.0,[32,32]) -> readout MLP [10,32,32,1]."""
    def lin(k, i, o):
        kw, kb = jax.random.split(k)
        s = 1.0 / math.sqrt(i)
        return (jax.random.uniform(kw, (i, o), jnp.float32, -s, s),
                jax.random.uniform(kb, (1, o), jnp.float32, -s, s))

    ks = jax.random.split(key, 7)
    p = {}
    p["ec0_w1"], p["ec0_b1"] = lin(ks[0], 5, 10)
    p["ec0_w2"], p["ec0_b2"] = lin(ks[1], 10, 11)
    p["ec1_w1"], p["ec1_b1"] = lin(ks[2], 32, 10)
    p["ec1_w2"], p["ec1_b2"] = lin(ks[3], 10, 11)
    p["ro_w1"], p["ro_b1"] = lin(ks[4], 10, 32)
    p["ro_w2"], p["ro_b2"] = lin(ks[5], 32, 32)
    p["ro_w3"], p["ro_b3"] = lin(ks[6], 32, 1)
    return p


def smeftnet_forward(pt, angles, params):
    """pt: (B, N) f32, angles: (B, N, 2) f32 -> (B, 3) f32
       output columns = [sigmoid(readout MLP), rotated_angle0, rotated_angle1]."""
    B, N = pt.shape
    inp = jnp.concatenate([pt[..., None], angles], axis=-1).astype(jnp.float32)

    # events per grid step: amortize per-step overhead, but keep >=2 grid steps
    # so a parallel batch axis can use both TensorCores when available.
    bt = 8 if B >= 16 else max(1, B // 2)
    Bpad = ((B + bt - 1) // bt) * bt
    if Bpad != B:
        inp = jnp.pad(inp, ((0, Bpad - B), (0, 0), (0, 0)))

    e0 = _split_w1(params["ec0_w1"], 1)
    e1 = _split_w1(params["ec1_w1"], 10)
    weights = (
        e0[0], e0[1], e0[2], e0[3], params["ec0_b1"], params["ec0_w2"], params["ec0_b2"],
        e1[0], e1[1], e1[2], e1[3], params["ec1_b1"], params["ec1_w2"], params["ec1_b2"],
        params["ro_w1"], params["ro_b1"], params["ro_w2"], params["ro_b2"],
        params["ro_w3"], params["ro_b3"],
    )

    def full(arr):
        nd = arr.ndim
        return pl.BlockSpec(arr.shape, lambda b, _nd=nd: (0,) * _nd)

    out = pl.pallas_call(
        _smeftnet_kernel,
        out_shape=jax.ShapeDtypeStruct((Bpad, 1, OUT_W), jnp.float32),
        grid=(Bpad // bt,),
        in_specs=[pl.BlockSpec((bt, N, 3), lambda b: (b, 0, 0))]
                 + [full(w) for w in weights],
        out_specs=pl.BlockSpec((bt, 1, OUT_W), lambda b: (b, 0, 0)),
        compiler_params=pltpu.CompilerParams(dimension_semantics=("parallel",)),
    )(inp, *weights)

    return out.reshape(Bpad, OUT_W)[:B, :3]


if __name__ == "__main__":
    key = jax.random.PRNGKey(0)
    k_pt, k_ang, k_par = jax.random.split(key, 3)

    B, N = 2, 8
    pt = jax.random.uniform(k_pt, (B, N), jnp.float32, 0.1, 1.0)
    angles = 0.5 * jax.random.normal(k_ang, (B, N, 2), jnp.float32)
    # a couple of zero-angle (masked-out) particles in event 1, like ragged torch input
    angles = angles.at[1, N - 2:].set(0.0)

    params = init_params(k_par)

    out = smeftnet_forward(pt, angles, params)
    out = jax.block_until_ready(out)
    assert out.shape == (B, 3), out.shape
    assert not bool(jnp.isnan(out).any())
    print("KERNEL_OK")
</pallas_src>

<mosaic_0001>
module attributes {stable_mosaic.version = 11 : i64} {
  func.func @_smeftnet_kernel(%arg0: i32, %arg1: memref<1x8x3xf32, #tpu.memory_space<vmem>>, %arg2: memref<1x10xf32, #tpu.memory_space<vmem>>, %arg3: memref<1x10xf32, #tpu.memory_space<vmem>>, %arg4: memref<1x10xf32, #tpu.memory_space<vmem>>, %arg5: memref<1x10xf32, #tpu.memory_space<vmem>>, %arg6: memref<1x10xf32, #tpu.memory_space<vmem>>, %arg7: memref<10x11xf32, #tpu.memory_space<vmem>>, %arg8: memref<1x11xf32, #tpu.memory_space<vmem>>, %arg9: memref<10x10xf32, #tpu.memory_space<vmem>>, %arg10: memref<10x10xf32, #tpu.memory_space<vmem>>, %arg11: memref<1x10xf32, #tpu.memory_space<vmem>>, %arg12: memref<1x10xf32, #tpu.memory_space<vmem>>, %arg13: memref<1x10xf32, #tpu.memory_space<vmem>>, %arg14: memref<10x11xf32, #tpu.memory_space<vmem>>, %arg15: memref<1x11xf32, #tpu.memory_space<vmem>>, %arg16: memref<10x32xf32, #tpu.memory_space<vmem>>, %arg17: memref<1x32xf32, #tpu.memory_space<vmem>>, %arg18: memref<32x32xf32, #tpu.memory_space<vmem>>, %arg19: memref<1x32xf32, #tpu.memory_space<vmem>>, %arg20: memref<32x1xf32, #tpu.memory_space<vmem>>, %arg21: memref<1x1xf32, #tpu.memory_space<vmem>>, %arg22: memref<1x1x128xf32, #tpu.memory_space<vmem>>) attributes {dimension_semantics = [#tpu.dimension_semantics<parallel>], iteration_bounds = array<i64: 2>, scalar_prefetch = 0 : i64, scratch_operands = 0 : i64, tpu.core_type = #tpu.core_type<tc>, window_params = [{transform_indices = @transform_0, window_bounds = array<i64: 1, 8, 3>}, {pipeline_mode = #tpu.pipeline_mode<synchronous>, transform_indices = @transform_1, window_bounds = array<i64: 1, 10>}, {pipeline_mode = #tpu.pipeline_mode<synchronous>, transform_indices = @transform_2, window_bounds = array<i64: 1, 10>}, {pipeline_mode = #tpu.pipeline_mode<synchronous>, transform_indices = @transform_3, window_bounds = array<i64: 1, 10>}, {pipeline_mode = #tpu.pipeline_mode<synchronous>, transform_indices = @transform_4, window_bounds = array<i64: 1, 10>}, {pipeline_mode = #tpu.pipeline_mode<synchronous>, transform_indices = @transform_5, window_bounds = array<i64: 1, 10>}, {pipeline_mode = #tpu.pipeline_mode<synchronous>, transform_indices = @transform_6, window_bounds = array<i64: 10, 11>}, {pipeline_mode = #tpu.pipeline_mode<synchronous>, transform_indices = @transform_7, window_bounds = array<i64: 1, 11>}, {pipeline_mode = #tpu.pipeline_mode<synchronous>, transform_indices = @transform_8, window_bounds = array<i64: 10, 10>}, {pipeline_mode = #tpu.pipeline_mode<synchronous>, transform_indices = @transform_9, window_bounds = array<i64: 10, 10>}, {pipeline_mode = #tpu.pipeline_mode<synchronous>, transform_indices = @transform_10, window_bounds = array<i64: 1, 10>}, {pipeline_mode = #tpu.pipeline_mode<synchronous>, transform_indices = @transform_11, window_bounds = array<i64: 1, 10>}, {pipeline_mode = #tpu.pipeline_mode<synchronous>, transform_indices = @transform_12, window_bounds = array<i64: 1, 10>}, {pipeline_mode = #tpu.pipeline_mode<synchronous>, transform_indices = @transform_13, window_bounds = array<i64: 10, 11>}, {pipeline_mode = #tpu.pipeline_mode<synchronous>, transform_indices = @transform_14, window_bounds = array<i64: 1, 11>}, {pipeline_mode = #tpu.pipeline_mode<synchronous>, transform_indices = @transform_15, window_bounds = array<i64: 10, 32>}, {pipeline_mode = #tpu.pipeline_mode<synchronous>, transform_indices = @transform_16, window_bounds = array<i64: 1, 32>}, {pipeline_mode = #tpu.pipeline_mode<synchronous>, transform_indices = @transform_17, window_bounds = array<i64: 32, 32>}, {pipeline_mode = #tpu.pipeline_mode<synchronous>, transform_indices = @transform_18, window_bounds = array<i64: 1, 32>}, {pipeline_mode = #tpu.pipeline_mode<synchronous>, transform_indices = @transform_19, window_bounds = array<i64: 32, 1>}, {pipeline_mode = #tpu.pipeline_mode<synchronous>, transform_indices = @transform_20, window_bounds = array<i64: 1, 1>}, {transform_indices = @transform_21, window_bounds = array<i64: 1, 1, 128>}]} {
    %c0 = arith.constant 0 : index
    %c0_0 = arith.constant 0 : index
    %c0_1 = arith.constant 0 : index
    %0 = vector.load %arg1[%c0, %c0_0, %c0_1] : memref<1x8x3xf32, #tpu.memory_space<vmem>>, vector<1x8x3xf32>
    %1 = vector.extract_strided_slice %0 {offsets = [0, 0, 0], sizes = [1, 8, 1], strides = [1, 1, 1]} : vector<1x8x3xf32> to vector<1x8x1xf32>
    %2 = vector.extract_strided_slice %0 {offsets = [0, 0, 1], sizes = [1, 8, 1], strides = [1, 1, 1]} : vector<1x8x3xf32> to vector<1x8x1xf32>
    %3 = vector.extract_strided_slice %0 {offsets = [0, 0, 2], sizes = [1, 8, 1], strides = [1, 1, 1]} : vector<1x8x3xf32> to vector<1x8x1xf32>
    %4 = math.absf %2 : vector<1x8x1xf32>
    %5 = math.absf %3 : vector<1x8x1xf32>
    %6 = arith.addf %4, %5 : vector<1x8x1xf32>
    %cst = arith.constant 0.000000e+00 : f32
    %7 = vector.broadcast %cst : f32 to vector<1x8x1xf32>
    %8 = arith.cmpf one, %6, %7 : vector<1x8x1xf32>
    %cst_2 = arith.constant 1.000000e+00 : f32
    %cst_3 = arith.constant 0.000000e+00 : f32
    %9 = vector.broadcast %cst_2 : f32 to vector<1x8x1xf32>
    %10 = vector.broadcast %cst_3 : f32 to vector<1x8x1xf32>
    %11 = arith.select %8, %9, %10 : vector<1x8x1xi1>, vector<1x8x1xf32>
    %12 = arith.mulf %1, %11 : vector<1x8x1xf32>
    %13 = arith.mulf %2, %2 : vector<1x8x1xf32>
    %14 = arith.mulf %3, %3 : vector<1x8x1xf32>
    %15 = arith.addf %13, %14 : vector<1x8x1xf32>
    %16 = math.sqrt %15 : vector<1x8x1xf32>
    %17 = arith.mulf %16, %11 : vector<1x8x1xf32>
    %18 = arith.mulf %2, %11 : vector<1x8x1xf32>
    %19 = arith.mulf %3, %11 : vector<1x8x1xf32>
    %20 = tpu.concatenate %18, %19 in 2 : vector<1x8x1xf32>, vector<1x8x1xf32> -> vector<1x8x2xf32>
    %c0_4 = arith.constant 0 : index
    %c0_5 = arith.constant 0 : index
    %21 = vector.load %arg2[%c0_4, %c0_5] : memref<1x10xf32, #tpu.memory_space<vmem>>, vector<1x10xf32>
    %c0_6 = arith.constant 0 : index
    %c0_7 = arith.constant 0 : index
    %22 = vector.load %arg3[%c0_6, %c0_7] : memref<1x10xf32, #tpu.memory_space<vmem>>, vector<1x10xf32>
    %c0_8 = arith.constant 0 : index
    %c0_9 = arith.constant 0 : index
    %23 = vector.load %arg4[%c0_8, %c0_9] : memref<1x10xf32, #tpu.memory_space<vmem>>, vector<1x10xf32>
    %c0_10 = arith.constant 0 : index
    %c0_11 = arith.constant 0 : index
    %24 = vector.load %arg5[%c0_10, %c0_11] : memref<1x10xf32, #tpu.memory_space<vmem>>, vector<1x10xf32>
    %c0_12 = arith.constant 0 : index
    %c0_13 = arith.constant 0 : index
    %25 = vector.load %arg6[%c0_12, %c0_13] : memref<1x10xf32, #tpu.memory_space<vmem>>, vector<1x10xf32>
    %c0_14 = arith.constant 0 : index
    %c0_15 = arith.constant 0 : index
    %26 = vector.load %arg7[%c0_14, %c0_15] : memref<10x11xf32, #tpu.memory_space<vmem>>, vector<10x11xf32>
    %c0_16 = arith.constant 0 : index
    %c0_17 = arith.constant 0 : index
    %27 = vector.load %arg8[%c0_16, %c0_17] : memref<1x11xf32, #tpu.memory_space<vmem>>, vector<1x11xf32>
    %28 = vector.extract_strided_slice %20 {offsets = [0, 0, 0], sizes = [1, 8, 1], strides = [1, 1, 1]} : vector<1x8x2xf32> to vector<1x8x1xf32>
    %29 = vector.extract_strided_slice %20 {offsets = [0, 0, 1], sizes = [1, 8, 1], strides = [1, 1, 1]} : vector<1x8x2xf32> to vector<1x8x1xf32>
    %30 = arith.mulf %28, %28 : vector<1x8x1xf32>
    %31 = arith.mulf %29, %29 : vector<1x8x1xf32>
    %32 = arith.addf %30, %31 : vector<1x8x1xf32>
    %cst_18 = arith.constant 0.000000e+00 : f32
    %33 = vector.broadcast %cst_18 : f32 to vector<1x8x1xf32>
    %34 = arith.subf %33, %28 : vector<1x8x1xf32>
    %35 = tpu.concatenate %29, %34 in 2 : vector<1x8x1xf32>, vector<1x8x1xf32> -> vector<1x8x2xf32>
    %cst_19 = arith.constant 1.000000e+00 : f32
    %36 = vector.broadcast %cst_19 : f32 to vector<1x8x1xf32>
    "tpu.trace_start"() <{level = 10 : i32, message = "bic,bjc->bij"}> : () -> ()
    %cst_20 = arith.constant dense<0.000000e+00> : vector<1x8x8xf32>
    %37 = tpu.matmul %20, %20, %cst_20 {dimension_numbers = #tpu.dot_dimension_numbers<[2], [2], [1], [1], [0, 0, 0, 1, 1, 1], [0], [0]>} : vector<1x8x2xf32>, vector<1x8x2xf32>, vector<1x8x8xf32> -> vector<1x8x8xf32>
    %cst_21 = arith.constant dense<0.000000e+00> : vector<1x8x8xf32>
    %38 = tpu.matmul %35, %20, %cst_21 {dimension_numbers = #tpu.dot_dimension_numbers<[2], [2], [1], [1], [0, 0, 0, 1, 1, 1], [0], [0]>} : vector<1x8x2xf32>, vector<1x8x2xf32>, vector<1x8x8xf32> -> vector<1x8x8xf32>
    %cst_22 = arith.constant dense<0.000000e+00> : vector<1x8x8xf32>
    %39 = tpu.matmul %36, %32, %cst_22 {dimension_numbers = #tpu.dot_dimension_numbers<[2], [2], [1], [1], [0, 0, 0, 1, 1, 1], [0], [0]>} : vector<1x8x1xf32>, vector<1x8x1xf32>, vector<1x8x8xf32> -> vector<1x8x8xf32>
    %cst_23 = arith.constant dense<0.000000e+00> : vector<1x8x8xf32>
    %40 = tpu.matmul %36, %11, %cst_23 {dimension_numbers = #tpu.dot_dimension_numbers<[2], [2], [1], [1], [0, 0, 0, 1, 1, 1], [0], [0]>} : vector<1x8x1xf32>, vector<1x8x1xf32>, vector<1x8x8xf32> -> vector<1x8x8xf32>
    "tpu.trace_stop"() : () -> ()
    %41 = vector.broadcast %32 : vector<1x8x1xf32> to vector<1x8x8xf32>
    %42 = arith.addf %41, %39 : vector<1x8x8xf32>
    %cst_24 = arith.constant 2.000000e+00 : f32
    %43 = vector.broadcast %cst_24 : f32 to vector<1x8x8xf32>
    %44 = arith.mulf %43, %37 : vector<1x8x8xf32>
    %45 = arith.subf %42, %44 : vector<1x8x8xf32>
    %cst_25 = arith.constant 1.600000e-01 : f32
    %46 = vector.broadcast %cst_25 : f32 to vector<1x8x8xf32>
    %47 = arith.cmpf ole, %45, %46 : vector<1x8x8xf32>
    %cst_26 = arith.constant 1.000000e+00 : f32
    %cst_27 = arith.constant 0.000000e+00 : f32
    %48 = vector.broadcast %cst_26 : f32 to vector<1x8x8xf32>
    %49 = vector.broadcast %cst_27 : f32 to vector<1x8x8xf32>
    %50 = arith.select %47, %48, %49 : vector<1x8x8xi1>, vector<1x8x8xf32>
    %51 = vector.broadcast %11 : vector<1x8x1xf32> to vector<1x8x8xf32>
    %52 = arith.mulf %50, %51 : vector<1x8x8xf32>
    %53 = arith.mulf %52, %40 : vector<1x8x8xf32>
    %54 = vector.broadcast %32 : vector<1x8x1xf32> to vector<1x8x8xf32>
    %55 = arith.mulf %54, %39 : vector<1x8x8xf32>
    %cst_28 = arith.constant 0.000000e+00 : f32
    %56 = vector.broadcast %cst_28 : f32 to vector<1x8x8xf32>
    %57 = arith.cmpf ogt, %55, %56 : vector<1x8x8xf32>
    %cst_29 = arith.constant 0.000000e+00 : f32
    %58 = vector.broadcast %cst_29 : f32 to vector<1x8x8xf32>
    %59 = arith.cmpf ogt, %55, %58 : vector<1x8x8xf32>
    %cst_30 = arith.constant 1.000000e+00 : f32
    %60 = vector.broadcast %cst_30 : f32 to vector<1x8x8xf32>
    %61 = arith.select %59, %55, %60 : vector<1x8x8xi1>, vector<1x8x8xf32>
    %62 = math.rsqrt %61 : vector<1x8x8xf32>
    %cst_31 = arith.constant 0.000000e+00 : f32
    %63 = vector.broadcast %cst_31 : f32 to vector<1x8x8xf32>
    %64 = arith.select %57, %62, %63 : vector<1x8x8xi1>, vector<1x8x8xf32>
    %65 = arith.mulf %37, %64 : vector<1x8x8xf32>
    %66 = arith.mulf %38, %64 : vector<1x8x8xf32>
    %67 = vector.shape_cast %17 : vector<1x8x1xf32> to vector<8x1xf32>
    %cst_32 = arith.constant dense<0.000000e+00> : vector<8x10xf32>
    %68 = tpu.matmul %67, %21, %cst_32 {dimension_numbers = #tpu.dot_dimension_numbers<[1], [0], [0], [1], [0, 0, 1, 1], [], []>} : vector<8x1xf32>, vector<1x10xf32>, vector<8x10xf32> -> vector<8x10xf32>
    %69 = vector.shape_cast %68 : vector<8x10xf32> to vector<1x8x10xf32>
    %cst_33 = arith.constant dense<0.000000e+00> : vector<8x10xf32>
    %70 = tpu.matmul %67, %22, %cst_33 {dimension_numbers = #tpu.dot_dimension_numbers<[1], [0], [0], [1], [0, 0, 1, 1], [], []>} : vector<8x1xf32>, vector<1x10xf32>, vector<8x10xf32> -> vector<8x10xf32>
    %71 = vector.shape_cast %70 : vector<8x10xf32> to vector<1x8x10xf32>
    %72 = vector.shape_cast %69 : vector<1x8x10xf32> to vector<1x8x1x10xf32>
    %73 = vector.shape_cast %71 : vector<1x8x10xf32> to vector<1x1x8x10xf32>
    %74 = vector.broadcast %72 : vector<1x8x1x10xf32> to vector<1x8x8x10xf32>
    %75 = vector.broadcast %73 : vector<1x1x8x10xf32> to vector<1x8x8x10xf32>
    %76 = arith.addf %74, %75 : vector<1x8x8x10xf32>
    %77 = vector.shape_cast %65 : vector<1x8x8xf32> to vector<1x8x8x1xf32>
    %78 = vector.shape_cast %23 : vector<1x10xf32> to vector<1x1x1x10xf32>
    %79 = vector.broadcast %77 : vector<1x8x8x1xf32> to vector<1x8x8x10xf32>
    %80 = vector.broadcast %78 : vector<1x1x1x10xf32> to vector<1x8x8x10xf32>
    %81 = arith.mulf %79, %80 : vector<1x8x8x10xf32>
    %82 = arith.addf %76, %81 : vector<1x8x8x10xf32>
    %83 = vector.shape_cast %66 : vector<1x8x8xf32> to vector<1x8x8x1xf32>
    %84 = vector.shape_cast %24 : vector<1x10xf32> to vector<1x1x1x10xf32>
    %85 = vector.broadcast %83 : vector<1x8x8x1xf32> to vector<1x8x8x10xf32>
    %86 = vector.broadcast %84 : vector<1x1x1x10xf32> to vector<1x8x8x10xf32>
    %87 = arith.mulf %85, %86 : vector<1x8x8x10xf32>
    %88 = arith.addf %82, %87 : vector<1x8x8x10xf32>
    %89 = vector.shape_cast %25 : vector<1x10xf32> to vector<1x1x1x10xf32>
    %90 = vector.broadcast %89 : vector<1x1x1x10xf32> to vector<1x8x8x10xf32>
    %91 = arith.addf %88, %90 : vector<1x8x8x10xf32>
    %cst_34 = arith.constant 0.999994993 : f32
    %92 = vector.broadcast %cst_34 : f32 to vector<1x8x8x10xf32>
    %93 = arith.mulf %91, %92 : vector<1x8x8x10xf32>
    %cst_35 = arith.constant 0.000000e+00 : f32
    %94 = vector.broadcast %cst_35 : f32 to vector<1x8x8x10xf32>
    %95 = arith.cmpf ogt, %93, %94 : vector<1x8x8x10xf32>
    %cst_36 = arith.constant 0.00999999977 : f32
    %96 = vector.broadcast %cst_36 : f32 to vector<1x8x8x10xf32>
    %97 = arith.mulf %96, %93 : vector<1x8x8x10xf32>
    %98 = arith.select %95, %93, %97 : vector<1x8x8x10xi1>, vector<1x8x8x10xf32>
    %cst_37 = arith.constant dense<0.000000e+00> : vector<1x8xf32>
    %99 = vector.multi_reduction <add>, %53, %cst_37 [2] : vector<1x8x8xf32> to vector<1x8xf32>
    %100 = vector.shape_cast %99 : vector<1x8xf32> to vector<1x8x1xf32>
    %101 = arith.mulf %12, %100 : vector<1x8x1xf32>
    %cst_38 = arith.constant 0.000000e+00 : f32
    %102 = vector.broadcast %cst_38 : f32 to vector<1x8x1xf32>
    %103 = arith.cmpf ogt, %101, %102 : vector<1x8x1xf32>
    %cst_39 = arith.constant 1.000000e+00 : f32
    %104 = vector.broadcast %cst_39 : f32 to vector<1x8x1xf32>
    %105 = arith.select %103, %101, %104 : vector<1x8x1xi1>, vector<1x8x1xf32>
    %106 = tpu.reciprocal %105 {approx = true} : vector<1x8x1xf32> -> vector<1x8x1xf32>
    %cst_40 = arith.constant 0.000000e+00 : f32
    %107 = vector.broadcast %cst_40 : f32 to vector<1x8x1xf32>
    %108 = arith.select %103, %106, %107 : vector<1x8x1xi1>, vector<1x8x1xf32>
    %109 = arith.mulf %108, %12 : vector<1x8x1xf32>
    %110 = vector.broadcast %109 : vector<1x8x1xf32> to vector<1x8x8xf32>
    %111 = arith.mulf %110, %53 : vector<1x8x8xf32>
    %cst_41 = arith.constant dense<0.000000e+00> : vector<1x8xf32>
    %112 = vector.multi_reduction <add>, %111, %cst_41 [2] : vector<1x8x8xf32> to vector<1x8xf32>
    %113 = vector.shape_cast %112 : vector<1x8xf32> to vector<1x8x1xf32>
    %114 = vector.shape_cast %111 : vector<1x8x8xf32> to vector<1x8x8x1xf32>
    %115 = vector.broadcast %114 : vector<1x8x8x1xf32> to vector<1x8x8x10xf32>
    %116 = arith.mulf %115, %98 : vector<1x8x8x10xf32>
    %cst_42 = arith.constant dense<0.000000e+00> : vector<1x8x10xf32>
    %117 = vector.multi_reduction <add>, %116, %cst_42 [2] : vector<1x8x8x10xf32> to vector<1x8x10xf32>
    %118 = vector.shape_cast %117 : vector<1x8x10xf32> to vector<8x10xf32>
    %cst_43 = arith.constant dense<0.000000e+00> : vector<8x11xf32>
    %119 = tpu.matmul %118, %26, %cst_43 {dimension_numbers = #tpu.dot_dimension_numbers<[1], [0], [0], [1], [0, 0, 1, 1], [], []>} : vector<8x10xf32>, vector<10x11xf32>, vector<8x11xf32> -> vector<8x11xf32>
    %120 = vector.shape_cast %119 : vector<8x11xf32> to vector<1x8x11xf32>
    %121 = vector.shape_cast %27 : vector<1x11xf32> to vector<1x1x11xf32>
    %122 = vector.broadcast %113 : vector<1x8x1xf32> to vector<1x8x11xf32>
    %123 = vector.broadcast %121 : vector<1x1x11xf32> to vector<1x8x11xf32>
    %124 = arith.mulf %122, %123 : vector<1x8x11xf32>
    %125 = arith.addf %120, %124 : vector<1x8x11xf32>
    %126 = arith.mulf %12, %113 : vector<1x8x1xf32>
    %127 = arith.mulf %28, %113 : vector<1x8x1xf32>
    %128 = arith.mulf %29, %113 : vector<1x8x1xf32>
    %129 = vector.extract_strided_slice %125 {offsets = [0, 0, 10], sizes = [1, 8, 1], strides = [1, 1, 1]} : vector<1x8x11xf32> to vector<1x8x1xf32>
    %cst_44 = arith.constant 6.28318548 : f32
    %130 = vector.broadcast %cst_44 : f32 to vector<1x8x1xf32>
    %131 = arith.mulf %130, %129 : vector<1x8x1xf32>
    %132 = math.cos %131 : vector<1x8x1xf32>
    %cst_45 = arith.constant 6.28318548 : f32
    %133 = vector.broadcast %cst_45 : f32 to vector<1x8x1xf32>
    %134 = arith.mulf %133, %129 : vector<1x8x1xf32>
    %135 = math.sin %134 : vector<1x8x1xf32>
    %136 = arith.mulf %127, %132 : vector<1x8x1xf32>
    %137 = arith.mulf %128, %135 : vector<1x8x1xf32>
    %138 = arith.subf %136, %137 : vector<1x8x1xf32>
    %139 = arith.mulf %127, %135 : vector<1x8x1xf32>
    %140 = arith.mulf %128, %132 : vector<1x8x1xf32>
    %141 = arith.addf %139, %140 : vector<1x8x1xf32>
    %142 = tpu.concatenate %138, %141 in 2 : vector<1x8x1xf32>, vector<1x8x1xf32> -> vector<1x8x2xf32>
    %143 = vector.extract_strided_slice %125 {offsets = [0, 0, 0], sizes = [1, 8, 10], strides = [1, 1, 1]} : vector<1x8x11xf32> to vector<1x8x10xf32>
    %c0_46 = arith.constant 0 : index
    %c0_47 = arith.constant 0 : index
    %144 = vector.load %arg9[%c0_46, %c0_47] : memref<10x10xf32, #tpu.memory_space<vmem>>, vector<10x10xf32>
    %c0_48 = arith.constant 0 : index
    %c0_49 = arith.constant 0 : index
    %145 = vector.load %arg10[%c0_48, %c0_49] : memref<10x10xf32, #tpu.memory_space<vmem>>, vector<10x10xf32>
    %c0_50 = arith.constant 0 : index
    %c0_51 = arith.constant 0 : index
    %146 = vector.load %arg11[%c0_50, %c0_51] : memref<1x10xf32, #tpu.memory_space<vmem>>, vector<1x10xf32>
    %c0_52 = arith.constant 0 : index
    %c0_53 = arith.constant 0 : index
    %147 = vector.load %arg12[%c0_52, %c0_53] : memref<1x10xf32, #tpu.memory_space<vmem>>, vector<1x10xf32>
    %c0_54 = arith.constant 0 : index
    %c0_55 = arith.constant 0 : index
    %148 = vector.load %arg13[%c0_54, %c0_55] : memref<1x10xf32, #tpu.memory_space<vmem>>, vector<1x10xf32>
    %c0_56 = arith.constant 0 : index
    %c0_57 = arith.constant 0 : index
    %149 = vector.load %arg14[%c0_56, %c0_57] : memref<10x11xf32, #tpu.memory_space<vmem>>, vector<10x11xf32>
    %c0_58 = arith.constant 0 : index
    %c0_59 = arith.constant 0 : index
    %150 = vector.load %arg15[%c0_58, %c0_59] : memref<1x11xf32, #tpu.memory_space<vmem>>, vector<1x11xf32>
    %151 = vector.extract_strided_slice %142 {offsets = [0, 0, 0], sizes = [1, 8, 1], strides = [1, 1, 1]} : vector<1x8x2xf32> to vector<1x8x1xf32>
    %152 = vector.extract_strided_slice %142 {offsets = [0, 0, 1], sizes = [1, 8, 1], strides = [1, 1, 1]} : vector<1x8x2xf32> to vector<1x8x1xf32>
    %153 = arith.mulf %151, %151 : vector<1x8x1xf32>
    %154 = arith.mulf %152, %152 : vector<1x8x1xf32>
    %155 = arith.addf %153, %154 : vector<1x8x1xf32>
    %cst_60 = arith.constant 0.000000e+00 : f32
    %156 = vector.broadcast %cst_60 : f32 to vector<1x8x1xf32>
    %157 = arith.subf %156, %151 : vector<1x8x1xf32>
    %158 = tpu.concatenate %152, %157 in 2 : vector<1x8x1xf32>, vector<1x8x1xf32> -> vector<1x8x2xf32>
    %cst_61 = arith.constant 1.000000e+00 : f32
    %159 = vector.broadcast %cst_61 : f32 to vector<1x8x1xf32>
    "tpu.trace_start"() <{level = 10 : i32, message = "bic,bjc->bij"}> : () -> ()
    %cst_62 = arith.constant dense<0.000000e+00> : vector<1x8x8xf32>
    %160 = tpu.matmul %142, %142, %cst_62 {dimension_numbers = #tpu.dot_dimension_numbers<[2], [2], [1], [1], [0, 0, 0, 1, 1, 1], [0], [0]>} : vector<1x8x2xf32>, vector<1x8x2xf32>, vector<1x8x8xf32> -> vector<1x8x8xf32>
    %cst_63 = arith.constant dense<0.000000e+00> : vector<1x8x8xf32>
    %161 = tpu.matmul %158, %142, %cst_63 {dimension_numbers = #tpu.dot_dimension_numbers<[2], [2], [1], [1], [0, 0, 0, 1, 1, 1], [0], [0]>} : vector<1x8x2xf32>, vector<1x8x2xf32>, vector<1x8x8xf32> -> vector<1x8x8xf32>
    %cst_64 = arith.constant dense<0.000000e+00> : vector<1x8x8xf32>
    %162 = tpu.matmul %159, %155, %cst_64 {dimension_numbers = #tpu.dot_dimension_numbers<[2], [2], [1], [1], [0, 0, 0, 1, 1, 1], [0], [0]>} : vector<1x8x1xf32>, vector<1x8x1xf32>, vector<1x8x8xf32> -> vector<1x8x8xf32>
    %cst_65 = arith.constant dense<0.000000e+00> : vector<1x8x8xf32>
    %163 = tpu.matmul %159, %11, %cst_65 {dimension_numbers = #tpu.dot_dimension_numbers<[2], [2], [1], [1], [0, 0, 0, 1, 1, 1], [0], [0]>} : vector<1x8x1xf32>, vector<1x8x1xf32>, vector<1x8x8xf32> -> vector<1x8x8xf32>
    "tpu.trace_stop"() : () -> ()
    %164 = vector.broadcast %155 : vector<1x8x1xf32> to vector<1x8x8xf32>
    %165 = arith.addf %164, %162 : vector<1x8x8xf32>
    %cst_66 = arith.constant 2.000000e+00 : f32
    %166 = vector.broadcast %cst_66 : f32 to vector<1x8x8xf32>
    %167 = arith.mulf %166, %160 : vector<1x8x8xf32>
    %168 = arith.subf %165, %167 : vector<1x8x8xf32>
    %cst_67 = arith.constant 1.600000e-01 : f32
    %169 = vector.broadcast %cst_67 : f32 to vector<1x8x8xf32>
    %170 = arith.cmpf ole, %168, %169 : vector<1x8x8xf32>
    %cst_68 = arith.constant 1.000000e+00 : f32
    %cst_69 = arith.constant 0.000000e+00 : f32
    %171 = vector.broadcast %cst_68 : f32 to vector<1x8x8xf32>
    %172 = vector.broadcast %cst_69 : f32 to vector<1x8x8xf32>
    %173 = arith.select %170, %171, %172 : vector<1x8x8xi1>, vector<1x8x8xf32>
    %174 = vector.broadcast %11 : vector<1x8x1xf32> to vector<1x8x8xf32>
    %175 = arith.mulf %173, %174 : vector<1x8x8xf32>
    %176 = arith.mulf %175, %163 : vector<1x8x8xf32>
    %177 = vector.broadcast %155 : vector<1x8x1xf32> to vector<1x8x8xf32>
    %178 = arith.mulf %177, %162 : vector<1x8x8xf32>
    %cst_70 = arith.constant 0.000000e+00 : f32
    %179 = vector.broadcast %cst_70 : f32 to vector<1x8x8xf32>
    %180 = arith.cmpf ogt, %178, %179 : vector<1x8x8xf32>
    %cst_71 = arith.constant 0.000000e+00 : f32
    %181 = vector.broadcast %cst_71 : f32 to vector<1x8x8xf32>
    %182 = arith.cmpf ogt, %178, %181 : vector<1x8x8xf32>
    %cst_72 = arith.constant 1.000000e+00 : f32
    %183 = vector.broadcast %cst_72 : f32 to vector<1x8x8xf32>
    %184 = arith.select %182, %178, %183 : vector<1x8x8xi1>, vector<1x8x8xf32>
    %185 = math.rsqrt %184 : vector<1x8x8xf32>
    %cst_73 = arith.constant 0.000000e+00 : f32
    %186 = vector.broadcast %cst_73 : f32 to vector<1x8x8xf32>
    %187 = arith.select %180, %185, %186 : vector<1x8x8xi1>, vector<1x8x8xf32>
    %188 = arith.mulf %160, %187 : vector<1x8x8xf32>
    %189 = arith.mulf %161, %187 : vector<1x8x8xf32>
    %190 = vector.shape_cast %143 : vector<1x8x10xf32> to vector<8x10xf32>
    %cst_74 = arith.constant dense<0.000000e+00> : vector<8x10xf32>
    %191 = tpu.matmul %190, %144, %cst_74 {dimension_numbers = #tpu.dot_dimension_numbers<[1], [0], [0], [1], [0, 0, 1, 1], [], []>} : vector<8x10xf32>, vector<10x10xf32>, vector<8x10xf32> -> vector<8x10xf32>
    %192 = vector.shape_cast %191 : vector<8x10xf32> to vector<1x8x10xf32>
    %cst_75 = arith.constant dense<0.000000e+00> : vector<8x10xf32>
    %193 = tpu.matmul %190, %145, %cst_75 {dimension_numbers = #tpu.dot_dimension_numbers<[1], [0], [0], [1], [0, 0, 1, 1], [], []>} : vector<8x10xf32>, vector<10x10xf32>, vector<8x10xf32> -> vector<8x10xf32>
    %194 = vector.shape_cast %193 : vector<8x10xf32> to vector<1x8x10xf32>
    %195 = vector.shape_cast %192 : vector<1x8x10xf32> to vector<1x8x1x10xf32>
    %196 = vector.shape_cast %194 : vector<1x8x10xf32> to vector<1x1x8x10xf32>
    %197 = vector.broadcast %195 : vector<1x8x1x10xf32> to vector<1x8x8x10xf32>
    %198 = vector.broadcast %196 : vector<1x1x8x10xf32> to vector<1x8x8x10xf32>
    %199 = arith.addf %197, %198 : vector<1x8x8x10xf32>
    %200 = vector.shape_cast %188 : vector<1x8x8xf32> to vector<1x8x8x1xf32>
    %201 = vector.shape_cast %146 : vector<1x10xf32> to vector<1x1x1x10xf32>
    %202 = vector.broadcast %200 : vector<1x8x8x1xf32> to vector<1x8x8x10xf32>
    %203 = vector.broadcast %201 : vector<1x1x1x10xf32> to vector<1x8x8x10xf32>
    %204 = arith.mulf %202, %203 : vector<1x8x8x10xf32>
    %205 = arith.addf %199, %204 : vector<1x8x8x10xf32>
    %206 = vector.shape_cast %189 : vector<1x8x8xf32> to vector<1x8x8x1xf32>
    %207 = vector.shape_cast %147 : vector<1x10xf32> to vector<1x1x1x10xf32>
    %208 = vector.broadcast %206 : vector<1x8x8x1xf32> to vector<1x8x8x10xf32>
    %209 = vector.broadcast %207 : vector<1x1x1x10xf32> to vector<1x8x8x10xf32>
    %210 = arith.mulf %208, %209 : vector<1x8x8x10xf32>
    %211 = arith.addf %205, %210 : vector<1x8x8x10xf32>
    %212 = vector.shape_cast %148 : vector<1x10xf32> to vector<1x1x1x10xf32>
    %213 = vector.broadcast %212 : vector<1x1x1x10xf32> to vector<1x8x8x10xf32>
    %214 = arith.addf %211, %213 : vector<1x8x8x10xf32>
    %cst_76 = arith.constant 0.999994993 : f32
    %215 = vector.broadcast %cst_76 : f32 to vector<1x8x8x10xf32>
    %216 = arith.mulf %214, %215 : vector<1x8x8x10xf32>
    %cst_77 = arith.constant 0.000000e+00 : f32
    %217 = vector.broadcast %cst_77 : f32 to vector<1x8x8x10xf32>
    %218 = arith.cmpf ogt, %216, %217 : vector<1x8x8x10xf32>
    %cst_78 = arith.constant 0.00999999977 : f32
    %219 = vector.broadcast %cst_78 : f32 to vector<1x8x8x10xf32>
    %220 = arith.mulf %219, %216 : vector<1x8x8x10xf32>
    %221 = arith.select %218, %216, %220 : vector<1x8x8x10xi1>, vector<1x8x8x10xf32>
    %cst_79 = arith.constant dense<0.000000e+00> : vector<1x8xf32>
    %222 = vector.multi_reduction <add>, %176, %cst_79 [2] : vector<1x8x8xf32> to vector<1x8xf32>
    %223 = vector.shape_cast %222 : vector<1x8xf32> to vector<1x8x1xf32>
    %224 = arith.mulf %126, %223 : vector<1x8x1xf32>
    %cst_80 = arith.constant 0.000000e+00 : f32
    %225 = vector.broadcast %cst_80 : f32 to vector<1x8x1xf32>
    %226 = arith.cmpf ogt, %224, %225 : vector<1x8x1xf32>
    %cst_81 = arith.constant 1.000000e+00 : f32
    %227 = vector.broadcast %cst_81 : f32 to vector<1x8x1xf32>
    %228 = arith.select %226, %224, %227 : vector<1x8x1xi1>, vector<1x8x1xf32>
    %229 = tpu.reciprocal %228 {approx = true} : vector<1x8x1xf32> -> vector<1x8x1xf32>
    %cst_82 = arith.constant 0.000000e+00 : f32
    %230 = vector.broadcast %cst_82 : f32 to vector<1x8x1xf32>
    %231 = arith.select %226, %229, %230 : vector<1x8x1xi1>, vector<1x8x1xf32>
    %232 = arith.mulf %231, %126 : vector<1x8x1xf32>
    %233 = vector.broadcast %232 : vector<1x8x1xf32> to vector<1x8x8xf32>
    %234 = arith.mulf %233, %176 : vector<1x8x8xf32>
    %cst_83 = arith.constant dense<0.000000e+00> : vector<1x8xf32>
    %235 = vector.multi_reduction <add>, %234, %cst_83 [2] : vector<1x8x8xf32> to vector<1x8xf32>
    %236 = vector.shape_cast %235 : vector<1x8xf32> to vector<1x8x1xf32>
    %237 = vector.shape_cast %234 : vector<1x8x8xf32> to vector<1x8x8x1xf32>
    %238 = vector.broadcast %237 : vector<1x8x8x1xf32> to vector<1x8x8x10xf32>
    %239 = arith.mulf %238, %221 : vector<1x8x8x10xf32>
    %cst_84 = arith.constant dense<0.000000e+00> : vector<1x8x10xf32>
    %240 = vector.multi_reduction <add>, %239, %cst_84 [2] : vector<1x8x8x10xf32> to vector<1x8x10xf32>
    %241 = vector.shape_cast %240 : vector<1x8x10xf32> to vector<8x10xf32>
    %cst_85 = arith.constant dense<0.000000e+00> : vector<8x11xf32>
    %242 = tpu.matmul %241, %149, %cst_85 {dimension_numbers = #tpu.dot_dimension_numbers<[1], [0], [0], [1], [0, 0, 1, 1], [], []>} : vector<8x10xf32>, vector<10x11xf32>, vector<8x11xf32> -> vector<8x11xf32>
    %243 = vector.shape_cast %242 : vector<8x11xf32> to vector<1x8x11xf32>
    %244 = vector.shape_cast %150 : vector<1x11xf32> to vector<1x1x11xf32>
    %245 = vector.broadcast %236 : vector<1x8x1xf32> to vector<1x8x11xf32>
    %246 = vector.broadcast %244 : vector<1x1x11xf32> to vector<1x8x11xf32>
    %247 = arith.mulf %245, %246 : vector<1x8x11xf32>
    %248 = arith.addf %243, %247 : vector<1x8x11xf32>
    %249 = arith.mulf %126, %236 : vector<1x8x1xf32>
    %250 = arith.mulf %151, %236 : vector<1x8x1xf32>
    %251 = arith.mulf %152, %236 : vector<1x8x1xf32>
    %252 = vector.extract_strided_slice %248 {offsets = [0, 0, 10], sizes = [1, 8, 1], strides = [1, 1, 1]} : vector<1x8x11xf32> to vector<1x8x1xf32>
    %cst_86 = arith.constant 6.28318548 : f32
    %253 = vector.broadcast %cst_86 : f32 to vector<1x8x1xf32>
    %254 = arith.mulf %253, %252 : vector<1x8x1xf32>
    %255 = math.cos %254 : vector<1x8x1xf32>
    %cst_87 = arith.constant 6.28318548 : f32
    %256 = vector.broadcast %cst_87 : f32 to vector<1x8x1xf32>
    %257 = arith.mulf %256, %252 : vector<1x8x1xf32>
    %258 = math.sin %257 : vector<1x8x1xf32>
    %259 = arith.mulf %250, %255 : vector<1x8x1xf32>
    %260 = arith.mulf %251, %258 : vector<1x8x1xf32>
    %261 = arith.subf %259, %260 : vector<1x8x1xf32>
    %262 = arith.mulf %250, %258 : vector<1x8x1xf32>
    %263 = arith.mulf %251, %255 : vector<1x8x1xf32>
    %264 = arith.addf %262, %263 : vector<1x8x1xf32>
    %265 = tpu.concatenate %261, %264 in 2 : vector<1x8x1xf32>, vector<1x8x1xf32> -> vector<1x8x2xf32>
    %266 = vector.extract_strided_slice %248 {offsets = [0, 0, 0], sizes = [1, 8, 10], strides = [1, 1, 1]} : vector<1x8x11xf32> to vector<1x8x10xf32>
    %267 = arith.mulf %249, %11 : vector<1x8x1xf32>
    %cst_88 = arith.constant dense<0.000000e+00> : vector<1x1xf32>
    %268 = vector.multi_reduction <add>, %267, %cst_88 [1] : vector<1x8x1xf32> to vector<1x1xf32>
    %269 = vector.shape_cast %268 : vector<1x1xf32> to vector<1x1x1xf32>
    %cst_89 = arith.constant 0.000000e+00 : f32
    %270 = vector.broadcast %cst_89 : f32 to vector<1x1x1xf32>
    %271 = arith.cmpf ogt, %269, %270 : vector<1x1x1xf32>
    %cst_90 = arith.constant 1.000000e+00 : f32
    %272 = vector.broadcast %cst_90 : f32 to vector<1x1x1xf32>
    %273 = arith.select %271, %269, %272 : vector<1x1x1xi1>, vector<1x1x1xf32>
    %274 = tpu.reciprocal %273 {approx = true} : vector<1x1x1xf32> -> vector<1x1x1xf32>
    %cst_91 = arith.constant 0.000000e+00 : f32
    %275 = vector.broadcast %cst_91 : f32 to vector<1x1x1xf32>
    %276 = arith.select %271, %274, %275 : vector<1x1x1xi1>, vector<1x1x1xf32>
    %277 = vector.broadcast %276 : vector<1x1x1xf32> to vector<1x8x1xf32>
    %278 = arith.mulf %277, %267 : vector<1x8x1xf32>
    %279 = vector.broadcast %278 : vector<1x8x1xf32> to vector<1x8x10xf32>
    %280 = arith.mulf %279, %266 : vector<1x8x10xf32>
    %cst_92 = arith.constant dense<0.000000e+00> : vector<1x10xf32>
    %281 = vector.multi_reduction <add>, %280, %cst_92 [1] : vector<1x8x10xf32> to vector<1x10xf32>
    %282 = vector.broadcast %278 : vector<1x8x1xf32> to vector<1x8x2xf32>
    %283 = arith.mulf %282, %265 : vector<1x8x2xf32>
    %cst_93 = arith.constant dense<0.000000e+00> : vector<1x2xf32>
    %284 = vector.multi_reduction <add>, %283, %cst_93 [1] : vector<1x8x2xf32> to vector<1x2xf32>
    %c0_94 = arith.constant 0 : index
    %c0_95 = arith.constant 0 : index
    %285 = vector.load %arg16[%c0_94, %c0_95] : memref<10x32xf32, #tpu.memory_space<vmem>>, vector<10x32xf32>
    %cst_96 = arith.constant dense<0.000000e+00> : vector<1x32xf32>
    %286 = tpu.matmul %281, %285, %cst_96 {dimension_numbers = #tpu.dot_dimension_numbers<[1], [0], [0], [1], [0, 0, 1, 1], [], []>} : vector<1x10xf32>, vector<10x32xf32>, vector<1x32xf32> -> vector<1x32xf32>
    %c0_97 = arith.constant 0 : index
    %c0_98 = arith.constant 0 : index
    %287 = vector.load %arg17[%c0_97, %c0_98] : memref<1x32xf32, #tpu.memory_space<vmem>>, vector<1x32xf32>
    %288 = arith.addf %286, %287 : vector<1x32xf32>
    %cst_99 = arith.constant 0.999994993 : f32
    %289 = vector.broadcast %cst_99 : f32 to vector<1x32xf32>
    %290 = arith.mulf %288, %289 : vector<1x32xf32>
    %cst_100 = arith.constant 0.000000e+00 : f32
    %291 = vector.broadcast %cst_100 : f32 to vector<1x32xf32>
    %292 = arith.cmpf ogt, %290, %291 : vector<1x32xf32>
    %cst_101 = arith.constant 0.00999999977 : f32
    %293 = vector.broadcast %cst_101 : f32 to vector<1x32xf32>
    %294 = arith.mulf %293, %290 : vector<1x32xf32>
    %295 = arith.select %292, %290, %294 : vector<1x32xi1>, vector<1x32xf32>
    %c0_102 = arith.constant 0 : index
    %c0_103 = arith.constant 0 : index
    %296 = vector.load %arg18[%c0_102, %c0_103] : memref<32x32xf32, #tpu.memory_space<vmem>>, vector<32x32xf32>
    %cst_104 = arith.constant dense<0.000000e+00> : vector<1x32xf32>
    %297 = tpu.matmul %295, %296, %cst_104 {dimension_numbers = #tpu.dot_dimension_numbers<[1], [0], [0], [1], [0, 0, 1, 1], [], []>} : vector<1x32xf32>, vector<32x32xf32>, vector<1x32xf32> -> vector<1x32xf32>
    %c0_105 = arith.constant 0 : index
    %c0_106 = arith.constant 0 : index
    %298 = vector.load %arg19[%c0_105, %c0_106] : memref<1x32xf32, #tpu.memory_space<vmem>>, vector<1x32xf32>
    %299 = arith.addf %297, %298 : vector<1x32xf32>
    %cst_107 = arith.constant 0.999994993 : f32
    %300 = vector.broadcast %cst_107 : f32 to vector<1x32xf32>
    %301 = arith.mulf %299, %300 : vector<1x32xf32>
    %cst_108 = arith.constant 0.000000e+00 : f32
    %302 = vector.broadcast %cst_108 : f32 to vector<1x32xf32>
    %303 = arith.cmpf ogt, %301, %302 : vector<1x32xf32>
    %cst_109 = arith.constant 0.00999999977 : f32
    %304 = vector.broadcast %cst_109 : f32 to vector<1x32xf32>
    %305 = arith.mulf %304, %301 : vector<1x32xf32>
    %306 = arith.select %303, %301, %305 : vector<1x32xi1>, vector<1x32xf32>
    %c0_110 = arith.constant 0 : index
    %c0_111 = arith.constant 0 : index
    %307 = vector.load %arg20[%c0_110, %c0_111] : memref<32x1xf32, #tpu.memory_space<vmem>>, vector<32x1xf32>
    %cst_112 = arith.constant dense<0.000000e+00> : vector<1x1xf32>
    %308 = tpu.matmul %306, %307, %cst_112 {dimension_numbers = #tpu.dot_dimension_numbers<[1], [0], [0], [1], [0, 0, 1, 1], [], []>} : vector<1x32xf32>, vector<32x1xf32>, vector<1x1xf32> -> vector<1x1xf32>
    %c0_113 = arith.constant 0 : index
    %c0_114 = arith.constant 0 : index
    %309 = vector.load %arg21[%c0_113, %c0_114] : memref<1x1xf32, #tpu.memory_space<vmem>>, vector<1x1xf32>
    %310 = arith.addf %308, %309 : vector<1x1xf32>
    %cst_115 = arith.constant 0.000000e+00 : f32
    %311 = vector.broadcast %cst_115 : f32 to vector<1x1xf32>
    %312 = arith.subf %311, %310 : vector<1x1xf32>
    %313 = math.exp %312 : vector<1x1xf32>
    %cst_116 = arith.constant 1.000000e+00 : f32
    %314 = vector.broadcast %cst_116 : f32 to vector<1x1xf32>
    %315 = arith.addf %314, %313 : vector<1x1xf32>
    %cst_117 = arith.constant 1.000000e+00 : f32
    %316 = vector.broadcast %cst_117 : f32 to vector<1x1xf32>
    %317 = arith.divf %316, %315 : vector<1x1xf32>
    %cst_118 = arith.constant 0.000000e+00 : f32
    %318 = vector.broadcast %cst_118 : f32 to vector<1x125xf32>
    %319 = tpu.concatenate %317, %284, %318 in 1 : vector<1x1xf32>, vector<1x2xf32>, vector<1x125xf32> -> vector<1x128xf32>
    %c0_119 = arith.constant 0 : index
    %c0_120 = arith.constant 0 : index
    %c0_121 = arith.constant 0 : index
    %320 = vector.load %arg22[%c0_119, %c0_120, %c0_121] : memref<1x1x128xf32, #tpu.memory_space<vmem>>, vector<1x1x128xf32>
    %321 = vector.shape_cast %320 : vector<1x1x128xf32> to vector<1x128xf32>
    %322 = vector.shape_cast %319 : vector<1x128xf32> to vector<1x1x128xf32>
    tpu.vector_store %arg22[%c0_119, %c0_120, %c0_121], %322 {strides = array<i32>} : memref<1x1x128xf32, #tpu.memory_space<vmem>>, vector<1x1x128xf32>,
    return
  }
  func.func @transform_0(%arg0: i32) -> (i32, i32, i32) {
    %c0_i32 = arith.constant 0 : i32
    %c0_i32_0 = arith.constant 0 : i32
    %c0_i32_1 = arith.constant 0 : i32
    return %arg0, %c0_i32, %c0_i32_0 : i32, i32, i32
  }
  func.func @transform_1(%arg0: i32) -> (i32, i32) {
    %c0_i32 = arith.constant 0 : i32
    %c0_i32_0 = arith.constant 0 : i32
    %c0_i32_1 = arith.constant 0 : i32
    return %c0_i32, %c0_i32_0 : i32, i32
  }
  func.func @transform_2(%arg0: i32) -> (i32, i32) {
    %c0_i32 = arith.constant 0 : i32
    %c0_i32_0 = arith.constant 0 : i32
    %c0_i32_1 = arith.constant 0 : i32
    return %c0_i32, %c0_i32_0 : i32, i32
  }
  func.func @transform_3(%arg0: i32) -> (i32, i32) {
    %c0_i32 = arith.constant 0 : i32
    %c0_i32_0 = arith.constant 0 : i32
    %c0_i32_1 = arith.constant 0 : i32
    return %c0_i32, %c0_i32_0 : i32, i32
  }
  func.func @transform_4(%arg0: i32) -> (i32, i32) {
    %c0_i32 = arith.constant 0 : i32
    %c0_i32_0 = arith.constant 0 : i32
    %c0_i32_1 = arith.constant 0 : i32
    return %c0_i32, %c0_i32_0 : i32, i32
  }
  func.func @transform_5(%arg0: i32) -> (i32, i32) {
    %c0_i32 = arith.constant 0 : i32
    %c0_i32_0 = arith.constant 0 : i32
    %c0_i32_1 = arith.constant 0 : i32
    return %c0_i32, %c0_i32_0 : i32, i32
  }
  func.func @transform_6(%arg0: i32) -> (i32, i32) {
    %c0_i32 = arith.constant 0 : i32
    %c0_i32_0 = arith.constant 0 : i32
    %c0_i32_1 = arith.constant 0 : i32
    return %c0_i32, %c0_i32_0 : i32, i32
  }
  func.func @transform_7(%arg0: i32) -> (i32, i32) {
    %c0_i32 = arith.constant 0 : i32
    %c0_i32_0 = arith.constant 0 : i32
    %c0_i32_1 = arith.constant 0 : i32
    return %c0_i32, %c0_i32_0 : i32, i32
  }
  func.func @transform_8(%arg0: i32) -> (i32, i32) {
    %c0_i32 = arith.constant 0 : i32
    %c0_i32_0 = arith.constant 0 : i32
    %c0_i32_1 = arith.constant 0 : i32
    return %c0_i32, %c0_i32_0 : i32, i32
  }
  func.func @transform_9(%arg0: i32) -> (i32, i32) {
    %c0_i32 = arith.constant 0 : i32
    %c0_i32_0 = arith.constant 0 : i32
    %c0_i32_1 = arith.constant 0 : i32
    return %c0_i32, %c0_i32_0 : i32, i32
  }
  func.func @transform_10(%arg0: i32) -> (i32, i32) {
    %c0_i32 = arith.constant 0 : i32
    %c0_i32_0 = arith.constant 0 : i32
    %c0_i32_1 = arith.constant 0 : i32
    return %c0_i32, %c0_i32_0 : i32, i32
  }
  func.func @transform_11(%arg0: i32) -> (i32, i32) {
    %c0_i32 = arith.constant 0 : i32
    %c0_i32_0 = arith.constant 0 : i32
    %c0_i32_1 = arith.constant 0 : i32
    return %c0_i32, %c0_i32_0 : i32, i32
  }
  func.func @transform_12(%arg0: i32) -> (i32, i32) {
    %c0_i32 = arith.constant 0 : i32
    %c0_i32_0 = arith.constant 0 : i32
    %c0_i32_1 = arith.constant 0 : i32
    return %c0_i32, %c0_i32_0 : i32, i32
  }
  func.func @transform_13(%arg0: i32) -> (i32, i32) {
    %c0_i32 = arith.constant 0 : i32
    %c0_i32_0 = arith.constant 0 : i32
    %c0_i32_1 = arith.constant 0 : i32
    return %c0_i32, %c0_i32_0 : i32, i32
  }
  func.func @transform_14(%arg0: i32) -> (i32, i32) {
    %c0_i32 = arith.constant 0 : i32
    %c0_i32_0 = arith.constant 0 : i32
    %c0_i32_1 = arith.constant 0 : i32
    return %c0_i32, %c0_i32_0 : i32, i32
  }
  func.func @transform_15(%arg0: i32) -> (i32, i32) {
    %c0_i32 = arith.constant 0 : i32
    %c0_i32_0 = arith.constant 0 : i32
    %c0_i32_1 = arith.constant 0 : i32
    return %c0_i32, %c0_i32_0 : i32, i32
  }
  func.func @transform_16(%arg0: i32) -> (i32, i32) {
    %c0_i32 = arith.constant 0 : i32
    %c0_i32_0 = arith.constant 0 : i32
    %c0_i32_1 = arith.constant 0 : i32
    return %c0_i32, %c0_i32_0 : i32, i32
  }
  func.func @transform_17(%arg0: i32) -> (i32, i32) {
    %c0_i32 = arith.constant 0 : i32
    %c0_i32_0 = arith.constant 0 : i32
    %c0_i32_1 = arith.constant 0 : i32
    return %c0_i32, %c0_i32_0 : i32, i32
  }
  func.func @transform_18(%arg0: i32) -> (i32, i32) {
    %c0_i32 = arith.constant 0 : i32
    %c0_i32_0 = arith.constant 0 : i32
    %c0_i32_1 = arith.constant 0 : i32
    return %c0_i32, %c0_i32_0 : i32, i32
  }
  func.func @transform_19(%arg0: i32) -> (i32, i32) {
    %c0_i32 = arith.constant 0 : i32
    %c0_i32_0 = arith.constant 0 : i32
    %c0_i32_1 = arith.constant 0 : i32
    return %c0_i32, %c0_i32_0 : i32, i32
  }
  func.func @transform_20(%arg0: i32) -> (i32, i32) {
    %c0_i32 = arith.constant 0 : i32
    %c0_i32_0 = arith.constant 0 : i32
    %c0_i32_1 = arith.constant 0 : i32
    return %c0_i32, %c0_i32_0 : i32, i32
  }
  func.func @transform_21(%arg0: i32) -> (i32, i32, i32) {
    %c0_i32 = arith.constant 0 : i32
    %c0_i32_0 = arith.constant 0 : i32
    %c0_i32_1 = arith.constant 0 : i32
    return %arg0, %c0_i32, %c0_i32_0 : i32, i32, i32
  }
}

</mosaic_0001>

<llo_original>
// kernel: tpu_custom_call.1
$region0: #{tpu_custom_call.1}
  #allocation0 [shape = 'u32[]', space=smem, size = 0x4, offset = 0x4, fixed_abs, tag = 'smem constant byte address 0x4 - core index']
  #allocation1 [shape = 'u32[144,128]{1,0:T(1,128)}', space=vmem, size = 0x12000, scoped, tag = 'internal scratch']
  #allocation2 [shape = 'f32[1,1]{1,0:T(1,128)S(1)}', space=vmem, size = 0x200, scoped, tag = 'scoped memory for tpu_custom_call.1']
  %s0 = inlined_call_operand.vmem [shape: f32[2,8,3], index: 0, kind: input, shape index: {}]
  %s1 = inlined_call_operand.hbm [shape: f32[1,10], index: 1, kind: input, shape index: {}]
  %s2 = inlined_call_operand.hbm [shape: f32[1,10], index: 2, kind: input, shape index: {}]
  %s3 = inlined_call_operand.hbm [shape: f32[1,10], index: 3, kind: input, shape index: {}]
  %s4 = inlined_call_operand.hbm [shape: f32[1,10], index: 4, kind: input, shape index: {}]
  %s5 = inlined_call_operand.hbm [shape: f32[1,10], index: 5, kind: input, shape index: {}]
  %s6 = inlined_call_operand.vmem [shape: f32[10,11], index: 6, kind: input, shape index: {}]
  %s7 = inlined_call_operand.hbm [shape: f32[1,11], index: 7, kind: input, shape index: {}]
  %s8 = inlined_call_operand.vmem [shape: f32[10,10], index: 8, kind: input, shape index: {}]
  %s9 = inlined_call_operand.vmem [shape: f32[10,10], index: 9, kind: input, shape index: {}]
  %s10 = inlined_call_operand.hbm [shape: f32[1,10], index: 10, kind: input, shape index: {}]
  %s11 = inlined_call_operand.vmem [shape: f32[1,10], index: 11, kind: input, shape index: {}]
  %s12 = inlined_call_operand.vmem [shape: f32[1,10], index: 12, kind: input, shape index: {}]
  %s13 = inlined_call_operand.vmem [shape: f32[10,11], index: 13, kind: input, shape index: {}]
  %s14 = inlined_call_operand.vmem [shape: f32[1,11], index: 14, kind: input, shape index: {}]
  %s15 = inlined_call_operand.vmem [shape: f32[10,32], index: 15, kind: input, shape index: {}]
  %s16 = inlined_call_operand.vmem [shape: f32[1,32], index: 16, kind: input, shape index: {}]
  %s17 = inlined_call_operand.vmem [shape: f32[32,32], index: 17, kind: input, shape index: {}]
  %s18 = inlined_call_operand.vmem [shape: f32[1,32], index: 18, kind: input, shape index: {}]
  %s19 = inlined_call_operand.vmem [shape: f32[32,1], index: 19, kind: input, shape index: {}]
  %s20 = inlined_call_operand.<no memory space> [shape: f32[1,1], index: 20, kind: input, shape index: {}]
  %s21 = inlined_call_operand.hbm [shape: f32[2,1,128], index: 21, kind: output, shape index: {}]
  %s22 = sld [smem:[#allocation0]]
  $region145: #{tpu_custom_call.1} parent=0
    _
  %s24 = ssub.s32 1, %s22
  %s25 = scalar_select 0, %s24, %s22
  %v26 = vstv %s20
  %27 = vst [vmem:[#allocation2] sm:$0x1] %v26
  $region1: #{tpu_custom_call.1} parent=0
    #allocation3 [shape = 'u8[512]{0}', space=vmem, size = 0x400, scoped, tag = 'input window, operand 1, single buffered']
    #allocation4 [shape = 's32[2]{0}', space=sflag, size = 0x8, scoped, tag = 'scoped memory for tpu_custom_call.1']
    #allocation5 [shape = 's32[2]{0}', space=sflag, size = 0x8, scoped, tag = 'scoped memory for tpu_custom_call.1']
    #allocation6 [shape = 'u8[512]{0}', space=vmem, size = 0x400, scoped, tag = 'input window, operand 2, single buffered']
    #allocation7 [shape = 's32[1]{0}', space=sflag, size = 0x4, scoped, tag = 'scoped memory for tpu_custom_call.1']
    #allocation8 [shape = 'u8[512]{0}', space=vmem, size = 0x400, scoped, tag = 'input window, operand 3, single buffered']
    #allocation9 [shape = 'u8[512]{0}', space=vmem, size = 0x400, scoped, tag = 'input window, operand 4, single buffered']
    #allocation10 [shape = 's32[1]{0}', space=sflag, size = 0x4, scoped, tag = 'scoped memory for tpu_custom_call.1']
    #allocation11 [shape = 'u8[512]{0}', space=vmem, size = 0x400, scoped, tag = 'input window, operand 5, single buffered']
    #allocation12 [shape = 'u8[512]{0}', space=vmem, size = 0x400, scoped, tag = 'input window, operand 7, single buffered']
    #allocation13 [shape = 's32[1]{0}', space=sflag, size = 0x4, scoped, tag = 'scoped memory for tpu_custom_call.1']
    #allocation14 [shape = 'u8[512]{0}', space=vmem, size = 0x400, scoped, tag = 'input window, operand 10, single buffered']
    #allocation15 [shape = 'u8[1024]{0}', space=vmem, size = 0x400, scoped, tag = 'output window, operand 0']
    %28 = vsyncpa [#allocation4], 0
    %29 = vsyncpa [#allocation7], 0
    %30 = vsyncpa [#allocation10], 0
    %31 = vsyncpa [#allocation13], 0
    %32 = vsyncpa [#allocation5], 0
    %s33 = scalar_lea.sflag [#allocation5], 1
    %34 = vsyncpa %s33, 0
    loop: start=0, step=1, limit=4
    $region2: #{tpu_custom_call.1} parent=1 // loop_pre_header
      _
    $region3: #{tpu_custom_call.1} parent=1 // loop_header
      %s36 = sphi 0, %s40
      %p37 = scmp.ge.s32.totalorder %s36, 4
      %s46 = sphi 0, %s48
      %s49 = sphi 0, %s46
      %s50 = sphi 0, %s49
      %s66 = sphi 0, %s50
      %s70 = sphi 0, %s70
      %s72 = sphi 0, %s70
      %s73 = sphi 0, %s72
      %s87 = sphi 0, %s73
      %s91 = sphi 0, %s91
      %s93 = sphi 0, %s91
      %s94 = sphi 0, %s93
      %s108 = sphi 0, %s94
      %s112 = sphi 0, %s112
      %s114 = sphi 0, %s112
      %s115 = sphi 0, %s114
      %s129 = sphi 0, %s115
      %s133 = sphi 0, %s133
      %s135 = sphi 0, %s133
      %s136 = sphi 0, %s135
      %s150 = sphi 0, %s136
      %s154 = sphi 0, %s154
      %s156 = sphi 0, %s154
      %s157 = sphi 0, %s156
      %s171 = sphi 0, %s157
      %s175 = sphi 0, %s175
      %s177 = sphi 0, %s175
      %s178 = sphi 0, %s177
      %s192 = sphi 0, %s178
      %s196 = sphi 0, %s196
      %s198 = sphi 0, %s196
      %s199 = sphi 0, %s198
      %s213 = sphi 0, %s199
      %s217 = sphi 0, %s217
      %s219 = sphi 0, %s217
      %s220 = sphi 0, %s219
      %s234 = sphi 0, %s220
      %s238 = sphi 0, %s238
      %s240 = sphi 0, %s238
      %s241 = sphi 0, %s240
      %s255 = sphi 0, %s241
      %s259 = sphi 0, %s259
      %s261 = sphi 0, %s259
      %s262 = sphi 0, %s261
      %s276 = sphi 0, %s262
      %s280 = sphi 0, %s280
      %s282 = sphi 0, %s280
      %s283 = sphi 0, %s282
      %s297 = sphi 0, %s283
      %s301 = sphi 0, %s301
      %s303 = sphi 0, %s301
      %s304 = sphi 0, %s303
      %s318 = sphi 0, %s304
      %s322 = sphi 0, %s322
      %s324 = sphi 0, %s322
      %s325 = sphi 0, %s324
      %s339 = sphi 0, %s325
      %s343 = sphi 0, %s343
      %s345 = sphi 0, %s343
      %s346 = sphi 0, %s345
      %s360 = sphi 0, %s346
      %s364 = sphi 0, %s364
      %s366 = sphi 0, %s364
      %s367 = sphi 0, %s366
      %s381 = sphi 0, %s367
      %s385 = sphi 0, %s385
      %s387 = sphi 0, %s385
      %s388 = sphi 0, %s387
      %s402 = sphi 0, %s388
      %s406 = sphi 0, %s406
      %s408 = sphi 0, %s406
      %s409 = sphi 0, %s408
      %s423 = sphi 0, %s409
      %s427 = sphi 0, %s427
      %s429 = sphi 0, %s427
      %s430 = sphi 0, %s429
      %s444 = sphi 0, %s430
      %s448 = sphi 0, %s448
      %s450 = sphi 0, %s448
      %s451 = sphi 0, %s450
      %s465 = sphi 0, %s451
      %s469 = sphi 0, %s469
      %s471 = sphi 0, %s469
      %s472 = sphi 0, %s471
      %s486 = sphi 0, %s472
      %s492 = sphi 0, %s494
      %s495 = sphi 0, %s492
      %s496 = sphi 0, %s495
      %s512 = sphi 0, %s496
    $region4: #{tpu_custom_call.1} parent=1 // loop_header_branch
      %39 = sbr.rel (%p37) target = $region8
    $region5: #{tpu_custom_call.1} parent=1 // loop_body
      %s41 = ssub.s32 %s36, 1
      %s42 = ssub.s32 %s36, 2
      %s43 = sadd.s32 %s36, 1
      %s44 = ssub.s32 %s36, %s43
      %p45 = scmp.eq.s32.totalorder %s44, 0
      %s47 = sadd.s32 %s46, 1
      %s48 = scalar_select %p45, %s46, %s47
      %p51 = pneg %p45
      %p52 = scmp.eq.s32.totalorder %s36, 1
      %p53 = por %p51, %p52
      %p54 = scmp.ne.s32.totalorder %s46, %s49
      %p55 = scmp.eq.s32.totalorder %s36, 0
      %p56 = por %p54, %p55
      %p57 = scmp.ne.s32.totalorder %s46, %s49
      %p58 = scmp.eq.s32.totalorder %s41, 1
      %p59 = por %p57, %p58
      %p60 = scmp.ne.s32.totalorder %s49, %s50
      %p61 = scmp.eq.s32.totalorder %s41, 0
      %p62 = por %p60, %p61
      %p63 = scmp.ne.s32.totalorder %s49, %s50
      %p64 = scmp.eq.s32.totalorder %s42, 1
      %p65 = por %p63, %p64
      %p67 = scmp.ne.s32.totalorder %s50, %s66
      %p68 = scmp.eq.s32.totalorder %s42, 0
      %p69 = por %p67, %p68
      %s71 = sadd.s32 %s70, 1
      %p74 = scmp.eq.s32.totalorder %s36, 1
      %p75 = scmp.ne.s32.totalorder %s70, %s72
      %p76 = scmp.eq.s32.totalorder %s36, 0
      %p77 = por %p75, %p76
      %p78 = scmp.ne.s32.totalorder %s70, %s72
      %p79 = scmp.eq.s32.totalorder %s41, 1
      %p80 = por %p78, %p79
      %p81 = scmp.ne.s32.totalorder %s72, %s73
      %p82 = scmp.eq.s32.totalorder %s41, 0
      %p83 = por %p81, %p82
      %p84 = scmp.ne.s32.totalorder %s72, %s73
      %p85 = scmp.eq.s32.totalorder %s42, 1
      %p86 = por %p84, %p85
      %p88 = scmp.ne.s32.totalorder %s73, %s87
      %p89 = scmp.eq.s32.totalorder %s42, 0
      %p90 = por %p88, %p89
      %s92 = sadd.s32 %s91, 1
      %p95 = scmp.eq.s32.totalorder %s36, 1
      %p96 = scmp.ne.s32.totalorder %s91, %s93
      %p97 = scmp.eq.s32.totalorder %s36, 0
      %p98 = por %p96, %p97
      %p99 = scmp.ne.s32.totalorder %s91, %s93
      %p100 = scmp.eq.s32.totalorder %s41, 1
      %p101 = por %p99, %p100
      %p102 = scmp.ne.s32.totalorder %s93, %s94
      %p103 = scmp.eq.s32.totalorder %s41, 0
      %p104 = por %p102, %p103
      %p105 = scmp.ne.s32.totalorder %s93, %s94
      %p106 = scmp.eq.s32.totalorder %s42, 1
      %p107 = por %p105, %p106
      %p109 = scmp.ne.s32.totalorder %s94, %s108
      %p110 = scmp.eq.s32.totalorder %s42, 0
      %p111 = por %p109, %p110
      %s113 = sadd.s32 %s112, 1
      %p116 = scmp.eq.s32.totalorder %s36, 1
      %p117 = scmp.ne.s32.totalorder %s112, %s114
      %p118 = scmp.eq.s32.totalorder %s36, 0
      %p119 = por %p117, %p118
      %p120 = scmp.ne.s32.totalorder %s112, %s114
      %p121 = scmp.eq.s32.totalorder %s41, 1
      %p122 = por %p120, %p121
      %p123 = scmp.ne.s32.totalorder %s114, %s115
      %p124 = scmp.eq.s32.totalorder %s41, 0
      %p125 = por %p123, %p124
      %p126 = scmp.ne.s32.totalorder %s114, %s115
      %p127 = scmp.eq.s32.totalorder %s42, 1
      %p128 = por %p126, %p127
      %p130 = scmp.ne.s32.totalorder %s115, %s129
      %p131 = scmp.eq.s32.totalorder %s42, 0
      %p132 = por %p130, %p131
      %s134 = sadd.s32 %s133, 1
      %p137 = scmp.eq.s32.totalorder %s36, 1
      %p138 = scmp.ne.s32.totalorder %s133, %s135
      %p139 = scmp.eq.s32.totalorder %s36, 0
      %p140 = por %p138, %p139
      %p141 = scmp.ne.s32.totalorder %s133, %s135
      %p142 = scmp.eq.s32.totalorder %s41, 1
      %p143 = por %p141, %p142
      %p144 = scmp.ne.s32.totalorder %s135, %s136
      %p145 = scmp.eq.s32.totalorder %s41, 0
      %p146 = por %p144, %p145
      %p147 = scmp.ne.s32.totalorder %s135, %s136
      %p148 = scmp.eq.s32.totalorder %s42, 1
      %p149 = por %p147, %p148
      %p151 = scmp.ne.s32.totalorder %s136, %s150
      %p152 = scmp.eq.s32.totalorder %s42, 0
      %p153 = por %p151, %p152
      %s155 = sadd.s32 %s154, 1
      %p158 = scmp.eq.s32.totalorder %s36, 1
      %p159 = scmp.ne.s32.totalorder %s154, %s156
      %p160 = scmp.eq.s32.totalorder %s36, 0
      %p161 = por %p159, %p160
      %p162 = scmp.ne.s32.totalorder %s154, %s156
      %p163 = scmp.eq.s32.totalorder %s41, 1
      %p164 = por %p162, %p163
      %p165 = scmp.ne.s32.totalorder %s156, %s157
      %p166 = scmp.eq.s32.totalorder %s41, 0
      %p167 = por %p165, %p166
      %p168 = scmp.ne.s32.totalorder %s156, %s157
      %p169 = scmp.eq.s32.totalorder %s42, 1
      %p170 = por %p168, %p169
      %p172 = scmp.ne.s32.totalorder %s157, %s171
      %p173 = scmp.eq.s32.totalorder %s42, 0
      %p174 = por %p172, %p173
      %s176 = sadd.s32 %s175, 1
      %p179 = scmp.eq.s32.totalorder %s36, 1
      %p180 = scmp.ne.s32.totalorder %s175, %s177
      %p181 = scmp.eq.s32.totalorder %s36, 0
      %p182 = por %p180, %p181
      %p183 = scmp.ne.s32.totalorder %s175, %s177
      %p184 = scmp.eq.s32.totalorder %s41, 1
      %p185 = por %p183, %p184
      %p186 = scmp.ne.s32.totalorder %s177, %s178
      %p187 = scmp.eq.s32.totalorder %s41, 0
      %p188 = por %p186, %p187
      %p189 = scmp.ne.s32.totalorder %s177, %s178
      %p190 = scmp.eq.s32.totalorder %s42, 1
      %p191 = por %p189, %p190
      %p193 = scmp.ne.s32.totalorder %s178, %s192
      %p194 = scmp.eq.s32.totalorder %s42, 0
      %p195 = por %p193, %p194
      %s197 = sadd.s32 %s196, 1
      %p200 = scmp.eq.s32.totalorder %s36, 1
      %p201 = scmp.ne.s32.totalorder %s196, %s198
      %p202 = scmp.eq.s32.totalorder %s36, 0
      %p203 = por %p201, %p202
      %p204 = scmp.ne.s32.totalorder %s196, %s198
      %p205 = scmp.eq.s32.totalorder %s41, 1
      %p206 = por %p204, %p205
      %p207 = scmp.ne.s32.totalorder %s198, %s199
      %p208 = scmp.eq.s32.totalorder %s41, 0
      %p209 = por %p207, %p208
      %p210 = scmp.ne.s32.totalorder %s198, %s199
      %p211 = scmp.eq.s32.totalorder %s42, 1
      %p212 = por %p210, %p211
      %p214 = scmp.ne.s32.totalorder %s199, %s213
      %p215 = scmp.eq.s32.totalorder %s42, 0
      %p216 = por %p214, %p215
      %s218 = sadd.s32 %s217, 1
      %p221 = scmp.eq.s32.totalorder %s36, 1
      %p222 = scmp.ne.s32.totalorder %s217, %s219
      %p223 = scmp.eq.s32.totalorder %s36, 0
      %p224 = por %p222, %p223
      %p225 = scmp.ne.s32.totalorder %s217, %s219
      %p226 = scmp.eq.s32.totalorder %s41, 1
      %p227 = por %p225, %p226
      %p228 = scmp.ne.s32.totalorder %s219, %s220
      %p229 = scmp.eq.s32.totalorder %s41, 0
      %p230 = por %p228, %p229
      %p231 = scmp.ne.s32.totalorder %s219, %s220
      %p232 = scmp.eq.s32.totalorder %s42, 1
      %p233 = por %p231, %p232
      %p235 = scmp.ne.s32.totalorder %s220, %s234
      %p236 = scmp.eq.s32.totalorder %s42, 0
      %p237 = por %p235, %p236
      %s239 = sadd.s32 %s238, 1
      %p242 = scmp.eq.s32.totalorder %s36, 1
      %p243 = scmp.ne.s32.totalorder %s238, %s240
      %p244 = scmp.eq.s32.totalorder %s36, 0
      %p245 = por %p243, %p244
      %p246 = scmp.ne.s32.totalorder %s238, %s240
      %p247 = scmp.eq.s32.totalorder %s41, 1
      %p248 = por %p246, %p247
      %p249 = scmp.ne.s32.totalorder %s240, %s241
      %p250 = scmp.eq.s32.totalorder %s41, 0
      %p251 = por %p249, %p250
      %p252 = scmp.ne.s32.totalorder %s240, %s241
      %p253 = scmp.eq.s32.totalorder %s42, 1
      %p254 = por %p252, %p253
      %p256 = scmp.ne.s32.totalorder %s241, %s255
      %p257 = scmp.eq.s32.totalorder %s42, 0
      %p258 = por %p256, %p257
      %s260 = sadd.s32 %s259, 1
      %p263 = scmp.eq.s32.totalorder %s36, 1
      %p264 = scmp.ne.s32.totalorder %s259, %s261
      %p265 = scmp.eq.s32.totalorder %s36, 0
      %p266 = por %p264, %p265
      %p267 = scmp.ne.s32.totalorder %s259, %s261
      %p268 = scmp.eq.s32.totalorder %s41, 1
      %p269 = por %p267, %p268
      %p270 = scmp.ne.s32.totalorder %s261, %s262
      %p271 = scmp.eq.s32.totalorder %s41, 0
      %p272 = por %p270, %p271
      %p273 = scmp.ne.s32.totalorder %s261, %s262
      %p274 = scmp.eq.s32.totalorder %s42, 1
      %p275 = por %p273, %p274
      %p277 = scmp.ne.s32.totalorder %s262, %s276
      %p278 = scmp.eq.s32.totalorder %s42, 0
      %p279 = por %p277, %p278
      %s281 = sadd.s32 %s280, 1
      %p284 = scmp.eq.s32.totalorder %s36, 1
      %p285 = scmp.ne.s32.totalorder %s280, %s282
      %p286 = scmp.eq.s32.totalorder %s36, 0
      %p287 = por %p285, %p286
      %p288 = scmp.ne.s32.totalorder %s280, %s282
      %p289 = scmp.eq.s32.totalorder %s41, 1
      %p290 = por %p288, %p289
      %p291 = scmp.ne.s32.totalorder %s282, %s283
      %p292 = scmp.eq.s32.totalorder %s41, 0
      %p293 = por %p291, %p292
      %p294 = scmp.ne.s32.totalorder %s282, %s283
      %p295 = scmp.eq.s32.totalorder %s42, 1
      %p296 = por %p294, %p295
      %p298 = scmp.ne.s32.totalorder %s283, %s297
      %p299 = scmp.eq.s32.totalorder %s42, 0
      %p300 = por %p298, %p299
      %s302 = sadd.s32 %s301, 1
      %p305 = scmp.eq.s32.totalorder %s36, 1
      %p306 = scmp.ne.s32.totalorder %s301, %s303
      %p307 = scmp.eq.s32.totalorder %s36, 0
      %p308 = por %p306, %p307
      %p309 = scmp.ne.s32.totalorder %s301, %s303
      %p310 = scmp.eq.s32.totalorder %s41, 1
      %p311 = por %p309, %p310
      %p312 = scmp.ne.s32.totalorder %s303, %s304
      %p313 = scmp.eq.s32.totalorder %s41, 0
      %p314 = por %p312, %p313
      %p315 = scmp.ne.s32.totalorder %s303, %s304
      %p316 = scmp.eq.s32.totalorder %s42, 1
      %p317 = por %p315, %p316
      %p319 = scmp.ne.s32.totalorder %s304, %s318
      %p320 = scmp.eq.s32.totalorder %s42, 0
      %p321 = por %p319, %p320
      %s323 = sadd.s32 %s322, 1
      %p326 = scmp.eq.s32.totalorder %s36, 1
      %p327 = scmp.ne.s32.totalorder %s322, %s324
      %p328 = scmp.eq.s32.totalorder %s36, 0
      %p329 = por %p327, %p328
      %p330 = scmp.ne.s32.totalorder %s322, %s324
      %p331 = scmp.eq.s32.totalorder %s41, 1
      %p332 = por %p330, %p331
      %p333 = scmp.ne.s32.totalorder %s324, %s325
      %p334 = scmp.eq.s32.totalorder %s41, 0
      %p335 = por %p333, %p334
      %p336 = scmp.ne.s32.totalorder %s324, %s325
      %p337 = scmp.eq.s32.totalorder %s42, 1
      %p338 = por %p336, %p337
      %p340 = scmp.ne.s32.totalorder %s325, %s339
      %p341 = scmp.eq.s32.totalorder %s42, 0
      %p342 = por %p340, %p341
      %s344 = sadd.s32 %s343, 1
      %p347 = scmp.eq.s32.totalorder %s36, 1
      %p348 = scmp.ne.s32.totalorder %s343, %s345
      %p349 = scmp.eq.s32.totalorder %s36, 0
      %p350 = por %p348, %p349
      %p351 = scmp.ne.s32.totalorder %s343, %s345
      %p352 = scmp.eq.s32.totalorder %s41, 1
      %p353 = por %p351, %p352
      %p354 = scmp.ne.s32.totalorder %s345, %s346
      %p355 = scmp.eq.s32.totalorder %s41, 0
      %p356 = por %p354, %p355
      %p357 = scmp.ne.s32.totalorder %s345, %s346
      %p358 = scmp.eq.s32.totalorder %s42, 1
      %p359 = por %p357, %p358
      %p361 = scmp.ne.s32.totalorder %s346, %s360
      %p362 = scmp.eq.s32.totalorder %s42, 0
      %p363 = por %p361, %p362
      %s365 = sadd.s32 %s364, 1
      %p368 = scmp.eq.s32.totalorder %s36, 1
      %p369 = scmp.ne.s32.totalorder %s364, %s366
      %p370 = scmp.eq.s32.totalorder %s36, 0
      %p371 = por %p369, %p370
      %p372 = scmp.ne.s32.totalorder %s364, %s366
      %p373 = scmp.eq.s32.totalorder %s41, 1
      %p374 = por %p372, %p373
      %p375 = scmp.ne.s32.totalorder %s366, %s367
      %p376 = scmp.eq.s32.totalorder %s41, 0
      %p377 = por %p375, %p376
      %p378 = scmp.ne.s32.totalorder %s366, %s367
      %p379 = scmp.eq.s32.totalorder %s42, 1
      %p380 = por %p378, %p379
      %p382 = scmp.ne.s32.totalorder %s367, %s381
      %p383 = scmp.eq.s32.totalorder %s42, 0
      %p384 = por %p382, %p383
      %s386 = sadd.s32 %s385, 1
      %p389 = scmp.eq.s32.totalorder %s36, 1
      %p390 = scmp.ne.s32.totalorder %s385, %s387
      %p391 = scmp.eq.s32.totalorder %s36, 0
      %p392 = por %p390, %p391
      %p393 = scmp.ne.s32.totalorder %s385, %s387
      %p394 = scmp.eq.s32.totalorder %s41, 1
      %p395 = por %p393, %p394
      %p396 = scmp.ne.s32.totalorder %s387, %s388
      %p397 = scmp.eq.s32.totalorder %s41, 0
      %p398 = por %p396, %p397
      %p399 = scmp.ne.s32.totalorder %s387, %s388
      %p400 = scmp.eq.s32.totalorder %s42, 1
      %p401 = por %p399, %p400
      %p403 = scmp.ne.s32.totalorder %s388, %s402
      %p404 = scmp.eq.s32.totalorder %s42, 0
      %p405 = por %p403, %p404
      %s407 = sadd.s32 %s406, 1
      %p410 = scmp.eq.s32.totalorder %s36, 1
      %p411 = scmp.ne.s32.totalorder %s406, %s408
      %p412 = scmp.eq.s32.totalorder %s36, 0
      %p413 = por %p411, %p412
      %p414 = scmp.ne.s32.totalorder %s406, %s408
      %p415 = scmp.eq.s32.totalorder %s41, 1
      %p416 = por %p414, %p415
      %p417 = scmp.ne.s32.totalorder %s408, %s409
      %p418 = scmp.eq.s32.totalorder %s41, 0
      %p419 = por %p417, %p418
      %p420 = scmp.ne.s32.totalorder %s408, %s409
      %p421 = scmp.eq.s32.totalorder %s42, 1
      %p422 = por %p420, %p421
      %p424 = scmp.ne.s32.totalorder %s409, %s423
      %p425 = scmp.eq.s32.totalorder %s42, 0
      %p426 = por %p424, %p425
      %s428 = sadd.s32 %s427, 1
      %p431 = scmp.eq.s32.totalorder %s36, 1
      %p432 = scmp.ne.s32.totalorder %s427, %s429
      %p433 = scmp.eq.s32.totalorder %s36, 0
      %p434 = por %p432, %p433
      %p435 = scmp.ne.s32.totalorder %s427, %s429
      %p436 = scmp.eq.s32.totalorder %s41, 1
      %p437 = por %p435, %p436
      %p438 = scmp.ne.s32.totalorder %s429, %s430
      %p439 = scmp.eq.s32.totalorder %s41, 0
      %p440 = por %p438, %p439
      %p441 = scmp.ne.s32.totalorder %s429, %s430
      %p442 = scmp.eq.s32.totalorder %s42, 1
      %p443 = por %p441, %p442
      %p445 = scmp.ne.s32.totalorder %s430, %s444
      %p446 = scmp.eq.s32.totalorder %s42, 0
      %p447 = por %p445, %p446
      %s449 = sadd.s32 %s448, 1
      %p452 = scmp.eq.s32.totalorder %s36, 1
      %p453 = scmp.ne.s32.totalorder %s448, %s450
      %p454 = scmp.eq.s32.totalorder %s36, 0
      %p455 = por %p453, %p454
      %p456 = scmp.ne.s32.totalorder %s448, %s450
      %p457 = scmp.eq.s32.totalorder %s41, 1
      %p458 = por %p456, %p457
      %p459 = scmp.ne.s32.totalorder %s450, %s451
      %p460 = scmp.eq.s32.totalorder %s41, 0
      %p461 = por %p459, %p460
      %p462 = scmp.ne.s32.totalorder %s450, %s451
      %p463 = scmp.eq.s32.totalorder %s42, 1
      %p464 = por %p462, %p463
      %p466 = scmp.ne.s32.totalorder %s451, %s465
      %p467 = scmp.eq.s32.totalorder %s42, 0
      %p468 = por %p466, %p467
      %s470 = sadd.s32 %s469, 1
      %p473 = scmp.eq.s32.totalorder %s36, 1
      %p474 = scmp.ne.s32.totalorder %s469, %s471
      %p475 = scmp.eq.s32.totalorder %s36, 0
      %p476 = por %p474, %p475
      %p477 = scmp.ne.s32.totalorder %s469, %s471
      %p478 = scmp.eq.s32.totalorder %s41, 1
      %p479 = por %p477, %p478
      %p480 = scmp.ne.s32.totalorder %s471, %s472
      %p481 = scmp.eq.s32.totalorder %s41, 0
      %p482 = por %p480, %p481
      %p483 = scmp.ne.s32.totalorder %s471, %s472
      %p484 = scmp.eq.s32.totalorder %s42, 1
      %p485 = por %p483, %p484
      %p487 = scmp.ne.s32.totalorder %s472, %s486
      %p488 = scmp.eq.s32.totalorder %s42, 0
      %p489 = por %p487, %p488
      %s490 = ssub.s32 %s36, %s43
      %p491 = scmp.eq.s32.totalorder %s490, 0
      %s493 = sadd.s32 %s492, 1
      %s494 = scalar_select %p491, %s492, %s493
      %p497 = pneg %p491
      %p498 = scmp.eq.s32.totalorder %s36, 1
      %p499 = por %p497, %p498
      %p500 = scmp.ne.s32.totalorder %s492, %s495
      %p501 = scmp.eq.s32.totalorder %s36, 0
      %p502 = por %p500, %p501
      %p503 = scmp.ne.s32.totalorder %s492, %s495
      %p504 = scmp.eq.s32.totalorder %s41, 1
      %p505 = por %p503, %p504
      %p506 = scmp.ne.s32.totalorder %s495, %s496
      %p507 = scmp.eq.s32.totalorder %s41, 0
      %p508 = por %p506, %p507
      %p509 = scmp.ne.s32.totalorder %s495, %s496
      %p510 = scmp.eq.s32.totalorder %s42, 1
      %p511 = por %p509, %p510
      %p513 = scmp.ne.s32.totalorder %s496, %s512
      %p514 = scmp.eq.s32.totalorder %s42, 0
      %p515 = por %p513, %p514
      %p516 = scmp.le.s32.totalorder 1, %s36
      %p517 = scmp.lt.s32.totalorder %s36, 3
      %p518 = pnand %p516, %p517
      %p519 = pneg %p518
      // Predicated region
      $region9: #{tpu_custom_call.1} parent=5 // pred_check
        _
      $region10: #{tpu_custom_call.1} parent=5 // pred_check_branch
        %521 = sbr.rel (%p518) target = $region12
      $region11: #{tpu_custom_call.1} parent=5 // pred_region
        %s522 = ssub.s32 %s36, 1
        // Predicated region
        $region13: #{tpu_custom_call.1} parent=11 // pred_check
          %p523 = pneg %p83
        $region14: #{tpu_custom_call.1} parent=11 // pred_check_branch
          %525 = sbr.rel (%p523) target = $region16
        $region15: #{tpu_custom_call.1} parent=11 // pred_region
          %s527 = ssub.s32 16, 16
          %528 = vsyncadd [#allocation4], %s527
          %s530 = sshll.u32 [#allocation3], 4
          %s531 = int_to_ptr.vmem [resolvable:$true] %s530
          %533 = dma.hbm_to_vmem [thread:$0]  %s1, 16, %s531, [#allocation4]
        $region16: #{tpu_custom_call.1} parent=11 // pred_fallthru
          _
        // Predicated region
        $region17: #{tpu_custom_call.1} parent=11 // pred_check
          %p534 = pneg %p104
        $region18: #{tpu_custom_call.1} parent=11 // pred_check_branch
          %536 = sbr.rel (%p534) target = $region20
        $region19: #{tpu_custom_call.1} parent=11 // pred_region
          %s538 = ssub.s32 16, 16
          %539 = vsyncadd [#allocation7], %s538
          %s541 = sshll.u32 [#allocation6], 4
          %s542 = int_to_ptr.vmem [resolvable:$true] %s541
          %544 = dma.hbm_to_vmem [thread:$0]  %s2, 16, %s542, [#allocation7]
        $region20: #{tpu_custom_call.1} parent=11 // pred_fallthru
          _
        // Predicated region
        $region21: #{tpu_custom_call.1} parent=11 // pred_check
          %p545 = pneg %p125
        $region22: #{tpu_custom_call.1} parent=11 // pred_check_branch
          %547 = sbr.rel (%p545) target = $region24
        $region23: #{tpu_custom_call.1} parent=11 // pred_region
          %s549 = ssub.s32 16, 16
          %550 = vsyncadd [#allocation7], %s549
          %s552 = sshll.u32 [#allocation8], 4
          %s553 = int_to_ptr.vmem [resolvable:$true] %s552
          %555 = dma.hbm_to_vmem [thread:$0]  %s3, 16, %s553, [#allocation7]
        $region24: #{tpu_custom_call.1} parent=11 // pred_fallthru
          _
        // Predicated region
        $region25: #{tpu_custom_call.1} parent=11 // pred_check
          %p556 = pneg %p146
        $region26: #{tpu_custom_call.1} parent=11 // pred_check_branch
          %558 = sbr.rel (%p556) target = $region28
        $region27: #{tpu_custom_call.1} parent=11 // pred_region
          %s560 = ssub.s32 16, 16
          %561 = vsyncadd [#allocation10], %s560
          %s563 = sshll.u32 [#allocation9], 4
          %s564 = int_to_ptr.vmem [resolvable:$true] %s563
          %566 = dma.hbm_to_vmem [thread:$0]  %s4, 16, %s564, [#allocation10]
        $region28: #{tpu_custom_call.1} parent=11 // pred_fallthru
          _
        // Predicated region
        $region29: #{tpu_custom_call.1} parent=11 // pred_check
          %p567 = pneg %p167
        $region30: #{tpu_custom_call.1} parent=11 // pred_check_branch
          %569 = sbr.rel (%p567) target = $region32
        $region31: #{tpu_custom_call.1} parent=11 // pred_region
          %s571 = ssub.s32 16, 16
          %572 = vsyncadd [#allocation10], %s571
          %s574 = sshll.u32 [#allocation11], 4
          %s575 = int_to_ptr.vmem [resolvable:$true] %s574
          %577 = dma.hbm_to_vmem [thread:$0]  %s5, 16, %s575, [#allocation10]
        $region32: #{tpu_custom_call.1} parent=11 // pred_fallthru
          _
        // Predicated region
        $region33: #{tpu_custom_call.1} parent=11 // pred_check
          %p578 = pneg %p188
        $region34: #{tpu_custom_call.1} parent=11 // pred_check_branch
          %580 = sbr.rel (%p578) target = $region36
        $region35: #{tpu_custom_call.1} parent=11 // pred_region
          _
        $region36: #{tpu_custom_call.1} parent=11 // pred_fallthru
          _
        // Predicated region
        $region37: #{tpu_custom_call.1} parent=11 // pred_check
          %p581 = pneg %p209
        $region38: #{tpu_custom_call.1} parent=11 // pred_check_branch
          %583 = sbr.rel (%p581) target = $region40
        $region39: #{tpu_custom_call.1} parent=11 // pred_region
          %s585 = ssub.s32 16, 16
          %586 = vsyncadd [#allocation13], %s585
          %s588 = sshll.u32 [#allocation12], 4
          %s589 = int_to_ptr.vmem [resolvable:$true] %s588
          %591 = dma.hbm_to_vmem [thread:$0]  %s7, 16, %s589, [#allocation13]
        $region40: #{tpu_custom_call.1} parent=11 // pred_fallthru
          _
        // Predicated region
        $region41: #{tpu_custom_call.1} parent=11 // pred_check
          %p592 = pneg %p230
        $region42: #{tpu_custom_call.1} parent=11 // pred_check_branch
          %594 = sbr.rel (%p592) target = $region44
        $region43: #{tpu_custom_call.1} parent=11 // pred_region
          _
        $region44: #{tpu_custom_call.1} parent=11 // pred_fallthru
          _
        // Predicated region
        $region45: #{tpu_custom_call.1} parent=11 // pred_check
          %p595 = pneg %p251
        $region46: #{tpu_custom_call.1} parent=11 // pred_check_branch
          %597 = sbr.rel (%p595) target = $region48
        $region47: #{tpu_custom_call.1} parent=11 // pred_region
          _
        $region48: #{tpu_custom_call.1} parent=11 // pred_fallthru
          _
        // Predicated region
        $region49: #{tpu_custom_call.1} parent=11 // pred_check
          %p598 = pneg %p272
        $region50: #{tpu_custom_call.1} parent=11 // pred_check_branch
          %600 = sbr.rel (%p598) target = $region52
        $region51: #{tpu_custom_call.1} parent=11 // pred_region
          %s602 = ssub.s32 16, 16
          %603 = vsyncadd [#allocation13], %s602
          %s605 = sshll.u32 [#allocation14], 4
          %s606 = int_to_ptr.vmem [resolvable:$true] %s605
          %608 = dma.hbm_to_vmem [thread:$0]  %s10, 16, %s606, [#allocation13]
        $region52: #{tpu_custom_call.1} parent=11 // pred_fallthru
          _
        // Predicated region
        $region53: #{tpu_custom_call.1} parent=11 // pred_check
          %p609 = pneg %p293
        $region54: #{tpu_custom_call.1} parent=11 // pred_check_branch
          %611 = sbr.rel (%p609) target = $region56
        $region55: #{tpu_custom_call.1} parent=11 // pred_region
          _
        $region56: #{tpu_custom_call.1} parent=11 // pred_fallthru
          _
        // Predicated region
        $region57: #{tpu_custom_call.1} parent=11 // pred_check
          %p612 = pneg %p314
        $region58: #{tpu_custom_call.1} parent=11 // pred_check_branch
          %614 = sbr.rel (%p612) target = $region60
        $region59: #{tpu_custom_call.1} parent=11 // pred_region
          _
        $region60: #{tpu_custom_call.1} parent=11 // pred_fallthru
          _
        // Predicated region
        $region61: #{tpu_custom_call.1} parent=11 // pred_check
          %p615 = pneg %p335
        $region62: #{tpu_custom_call.1} parent=11 // pred_check_branch
          %617 = sbr.rel (%p615) target = $region64
        $region63: #{tpu_custom_call.1} parent=11 // pred_region
          _
        $region64: #{tpu_custom_call.1} parent=11 // pred_fallthru
          _
        // Predicated region
        $region65: #{tpu_custom_call.1} parent=11 // pred_check
          %p618 = pneg %p356
        $region66: #{tpu_custom_call.1} parent=11 // pred_check_branch
          %620 = sbr.rel (%p618) target = $region68
        $region67: #{tpu_custom_call.1} parent=11 // pred_region
          _
        $region68: #{tpu_custom_call.1} parent=11 // pred_fallthru
          _
        // Predicated region
        $region69: #{tpu_custom_call.1} parent=11 // pred_check
          %p621 = pneg %p377
        $region70: #{tpu_custom_call.1} parent=11 // pred_check_branch
          %623 = sbr.rel (%p621) target = $region72
        $region71: #{tpu_custom_call.1} parent=11 // pred_region
          _
        $region72: #{tpu_custom_call.1} parent=11 // pred_fallthru
          _
        // Predicated region
        $region73: #{tpu_custom_call.1} parent=11 // pred_check
          %p624 = pneg %p398
        $region74: #{tpu_custom_call.1} parent=11 // pred_check_branch
          %626 = sbr.rel (%p624) target = $region76
        $region75: #{tpu_custom_call.1} parent=11 // pred_region
          _
        $region76: #{tpu_custom_call.1} parent=11 // pred_fallthru
          _
        // Predicated region
        $region77: #{tpu_custom_call.1} parent=11 // pred_check
          %p627 = pneg %p419
        $region78: #{tpu_custom_call.1} parent=11 // pred_check_branch
          %629 = sbr.rel (%p627) target = $region80
        $region79: #{tpu_custom_call.1} parent=11 // pred_region
          _
        $region80: #{tpu_custom_call.1} parent=11 // pred_fallthru
          _
        // Predicated region
        $region81: #{tpu_custom_call.1} parent=11 // pred_check
          %p630 = pneg %p440
        $region82: #{tpu_custom_call.1} parent=11 // pred_check_branch
          %632 = sbr.rel (%p630) target = $region84
        $region83: #{tpu_custom_call.1} parent=11 // pred_region
          _
        $region84: #{tpu_custom_call.1} parent=11 // pred_fallthru
          _
        // Predicated region
        $region85: #{tpu_custom_call.1} parent=11 // pred_check
          %p633 = pneg %p461
        $region86: #{tpu_custom_call.1} parent=11 // pred_check_branch
          %635 = sbr.rel (%p633) target = $region88
        $region87: #{tpu_custom_call.1} parent=11 // pred_region
          _
        $region88: #{tpu_custom_call.1} parent=11 // pred_fallthru
          _
        // Predicated region
        $region89: #{tpu_custom_call.1} parent=11 // pred_check
          %p636 = pneg %p482
        $region90: #{tpu_custom_call.1} parent=11 // pred_check_branch
          %638 = sbr.rel (%p636) target = $region92
        $region91: #{tpu_custom_call.1} parent=11 // pred_region
          _
        $region92: #{tpu_custom_call.1} parent=11 // pred_fallthru
          _
      $region12: #{tpu_custom_call.1} parent=5 // pred_fallthru
        _
      %p639 = scmp.lt.s32.totalorder %s36, 2
      // Predicated region
      $region93: #{tpu_custom_call.1} parent=5 // pred_check
        %p640 = pneg %p639
      $region94: #{tpu_custom_call.1} parent=5 // pred_check_branch
        %642 = sbr.rel (%p640) target = $region96
      $region95: #{tpu_custom_call.1} parent=5 // pred_region
        // Predicated region
        $region97: #{tpu_custom_call.1} parent=95 // pred_check
          %p643 = pneg %p56
        $region98: #{tpu_custom_call.1} parent=95 // pred_check_branch
          %645 = sbr.rel (%p643) target = $region100
        $region99: #{tpu_custom_call.1} parent=95 // pred_region
          %p646 = scmp.lt.s32.totalorder %s36, 1
          %s647 = scalar_select %p646, %s36, 1
          %s648 = smul.addr %s647, 8
          %s649 = scalar_lea.vmem %s0, %s648
        $region100: #{tpu_custom_call.1} parent=95 // pred_fallthru
          _
      $region96: #{tpu_custom_call.1} parent=5 // pred_fallthru
        _
      %p650 = scmp.le.s32.totalorder 1, %s36
      %p651 = scmp.lt.s32.totalorder %s36, 3
      %p652 = pnand %p650, %p651
      %p653 = pneg %p652
      // Predicated region
      $region101: #{tpu_custom_call.1} parent=5 // pred_check
        _
      $region102: #{tpu_custom_call.1} parent=5 // pred_check_branch
        %655 = sbr.rel (%p652) target = $region104
      $region103: #{tpu_custom_call.1} parent=5 // pred_region
        %s656 = ssub.s32 %s36, 1
        // Predicated region
        $region105: #{tpu_custom_call.1} parent=103 // pred_check
          %p657 = pneg %p83
        $region106: #{tpu_custom_call.1} parent=103 // pred_check_branch
          %659 = sbr.rel (%p657) target = $region108
        $region107: #{tpu_custom_call.1} parent=103 // pred_region
          %660 = dma.done [#allocation4], 16
        $region108: #{tpu_custom_call.1} parent=103 // pred_fallthru
          _
        // Predicated region
        $region109: #{tpu_custom_call.1} parent=103 // pred_check
          %p661 = pneg %p104
        $region110: #{tpu_custom_call.1} parent=103 // pred_check_branch
          %663 = sbr.rel (%p661) target = $region112
        $region111: #{tpu_custom_call.1} parent=103 // pred_region
          %664 = dma.done [#allocation7], 16
        $region112: #{tpu_custom_call.1} parent=103 // pred_fallthru
          _
        // Predicated region
        $region113: #{tpu_custom_call.1} parent=103 // pred_check
          %p665 = pneg %p125
        $region114: #{tpu_custom_call.1} parent=103 // pred_check_branch
          %667 = sbr.rel (%p665) target = $region116
        $region115: #{tpu_custom_call.1} parent=103 // pred_region
          %668 = dma.done [#allocation7], 16
        $region116: #{tpu_custom_call.1} parent=103 // pred_fallthru
          _
        // Predicated region
        $region117: #{tpu_custom_call.1} parent=103 // pred_check
          %p669 = pneg %p146
        $region118: #{tpu_custom_call.1} parent=103 // pred_check_branch
          %671 = sbr.rel (%p669) target = $region120
        $region119: #{tpu_custom_call.1} parent=103 // pred_region
          %672 = dma.done [#allocation10], 16
        $region120: #{tpu_custom_call.1} parent=103 // pred_fallthru
          _
        // Predicated region
        $region121: #{tpu_custom_call.1} parent=103 // pred_check
          %p673 = pneg %p167
        $region122: #{tpu_custom_call.1} parent=103 // pred_check_branch
          %675 = sbr.rel (%p673) target = $region124
        $region123: #{tpu_custom_call.1} parent=103 // pred_region
          %676 = dma.done [#allocation10], 16
        $region124: #{tpu_custom_call.1} parent=103 // pred_fallthru
          _
        // Predicated region
        $region125: #{tpu_custom_call.1} parent=103 // pred_check
          %p677 = pneg %p209
        $region126: #{tpu_custom_call.1} parent=103 // pred_check_branch
          %679 = sbr.rel (%p677) target = $region128
        $region127: #{tpu_custom_call.1} parent=103 // pred_region
          %680 = dma.done [#allocation13], 16
        $region128: #{tpu_custom_call.1} parent=103 // pred_fallthru
          _
        // Predicated region
        $region129: #{tpu_custom_call.1} parent=103 // pred_check
          %p681 = pneg %p272
        $region130: #{tpu_custom_call.1} parent=103 // pred_check_branch
          %683 = sbr.rel (%p681) target = $region132
        $region131: #{tpu_custom_call.1} parent=103 // pred_region
          %684 = dma.done [#allocation13], 16
        $region132: #{tpu_custom_call.1} parent=103 // pred_fallthru
          _
        %p685 = scmp.lt.s32.totalorder %s41, 1
        %s686 = scalar_select %p685, %s41, 1
        %s687 = smul.addr %s686, 8
        %s688 = scalar_lea.vmem %s0, %s687
        %p689 = pneg %p62
        %p690 = pneg %p59
        %p691 = pneg %p83
        %p692 = pneg %p80
        %p693 = pneg %p104
        %p694 = pneg %p101
        %p695 = pneg %p125
        %p696 = pneg %p122
        %p697 = pneg %p146
        %p698 = pneg %p143
        %p699 = pneg %p167
        %p700 = pneg %p164
        %p701 = pneg %p188
        %p702 = pneg %p185
        %p703 = pneg %p209
        %p704 = pneg %p206
        %p705 = pneg %p230
        %p706 = pneg %p227
        %p707 = pneg %p251
        %p708 = pneg %p248
        %p709 = pneg %p272
        %p710 = pneg %p269
        %p711 = pneg %p293
        %p712 = pneg %p290
        %p713 = pneg %p314
        %p714 = pneg %p311
        %p715 = pneg %p335
        %p716 = pneg %p332
        %p717 = pneg %p356
        %p718 = pneg %p353
        %p719 = pneg %p377
        %p720 = pneg %p374
        %p721 = pneg %p398
        %p722 = pneg %p395
        %p723 = pneg %p419
        %p724 = pneg %p416
        %p725 = pneg %p440
        %p726 = pneg %p437
        %p727 = pneg %p461
        %p728 = pneg %p458
        %p729 = pneg %p482
        %p730 = pneg %p479
        %p731 = pneg %p508
        %p732 = pneg %p505
        %s733 = sand.u32 %s495, 1
        %s734 = scalar_lea.sflag [#allocation5], %s733
        %s735 = sand.u32 %s495, 1
        %s736 = scalar_lea.vmem [#allocation15], %s735
        %p737 = scmp.lt.s32.totalorder %s41, 1
        %s738 = scalar_select %p737, %s41, 1
        %s739 = smul.addr %s738, 8
        %s740 = scalar_lea.vmem %s0, %s739
        %v741 = vld [vmem:[%s740] sm:$0xff]
        %v742 = vand.u32 2147483647, %v741
        %744 = vrot.lane.b32.xlu0 %v742, 127
        %v745 = vpop.permute.xlu0 %744
        %v747 = vadd.f32 %v742, %v745
        %vm748 = vcmp.ne.f32.partialorder %v747, 0.0
        %v749 = vsel %vm748, 1.0, 0.0
        %751 = vrot.lane.b32.xlu0 %v749, 127
        %v752 = vpop.permute.xlu0 %751
        %v754 = vmul.f32 %v741, %v752
        %v755 = vmul.f32 %v741, %v741
        %757 = vrot.lane.b32.xlu0 %v755, 127
        %v758 = vpop.permute.xlu0 %757
        %v760 = vadd.f32 %v755, %v758
        %v761 = vrsqrt.pop %v760
        %v762 = vmul.f32 %v760, %v761
        %vm763 = vcmp.eq.f32.partialorder %v760, inf
        %v764 = vsel %vm763, %v760, %v762
        %vm765 = vcmp.eq.f32.partialorder %v760, 0.0
        %v766 = vand.u32 %v760, 2147483648
        %v767 = vsel %vm765, %v766, %v764
        %v768 = vmul.f32 %v767, %v749
        %v769 = vmul.f32 %v741, %v749
        %770 = vrot.lane.b32.xlu0 %v749, 1
        %v771 = vpop.permute.xlu0 %770
        %v773 = vmul.f32 %v741, %v771
        %775 = vrot.lane.b32.xlu0 %v769, 127
        %v776 = vpop.permute.xlu0 %775
        %779 = vrot.lane.b32.xlu0 %v773, 127
        %v780 = vpop.permute.xlu0 %779
        %vm782 = vcmask 7168
        %v783 = vsel %vm782, %v776, %v780
        %v784 = vld [vmem:[#allocation3] sm:$0x1]
        %v785 = vld [vmem:[#allocation6] sm:$0x1]
        %v786 = vld [vmem:[#allocation8] sm:$0x1]
        %v787 = vld [vmem:[#allocation9] sm:$0x1]
        %v788 = vld [vmem:[#allocation11] sm:$0x1]
        %v789 = vld [vmem:[%s6] sm:$0xff]
        %v790 = vld [vmem:[%s6 + $0x8] sm:$0x3]
        %v791 = vld [vmem:[#allocation12] sm:$0x1]
        %v792 = vmul.f32 %v783, %v783
        %794 = vrot.lane.b32.xlu0 %v792, 127
        %v795 = vpop.permute.xlu0 %794
        %v797 = vadd.f32 %v792, %v795
        %v798 = vsub.f32 0.0, %v783
        %800 = vrot.lane.b32.xlu0 %v783, 127
        %v801 = vpop.permute.xlu0 %800
        %804 = vrot.lane.b32.xlu0 %v798, 1
        %v805 = vpop.permute.xlu0 %804
        %v807 = vsel %vm782, %v801, %v805
        %vm808 = vcmask 15360
        %v809 = vsel %vm808, %v783, 0
        %811 = vmatprep.subr.mxu0 0.0
        %812 = vmatpush1.xpose.msra.mxu0 %v809
        %813 = vmatprep.subr.mxu0 0.0
        %814 = vmatpush1.xpose.msra.mxu0 0.0
        %815 = vmatprep.subr.mxu0 0.0
        %816 = vmatpush1.xpose.msra.mxu0 0.0
        %817 = vmatprep.subr.mxu0 0.0
        %818 = vmatpush1.xpose.msra.mxu0 0.0
        %819 = vmatprep.subr.mxu0 0.0
        %820 = vmatpush1.xpose.msra.mxu0 0.0
        %821 = vmatprep.subr.mxu0 0.0
        %822 = vmatpush1.xpose.msra.mxu0 0.0
        %823 = vmatprep.subr.mxu0 0.0
        %824 = vmatpush1.xpose.msra.mxu0 0.0
        %825 = vmatprep.subr.mxu0 0.0
        %826 = vmatpush1.xpose.msra.mxu0 0.0
        %827 = vmatprep.subr.mxu0 0.0
        %828 = vmatpush1.xpose.msra.mxu0 0.0
        %829 = vmatprep.subr.mxu0 0.0
        %830 = vmatpush1.xpose.msra.mxu0 0.0
        %831 = vmatprep.subr.mxu0 0.0
        %832 = vmatpush1.xpose.msra.mxu0 0.0
        %833 = vmatprep.subr.mxu0 0.0
        %834 = vmatpush1.xpose.msra.mxu0 0.0
        %835 = vmatprep.subr.mxu0 0.0
        %836 = vmatpush1.xpose.msra.mxu0 0.0
        %837 = vmatprep.subr.mxu0 0.0
        %838 = vmatpush1.xpose.msra.mxu0 0.0
        %839 = vmatprep.subr.mxu0 0.0
        %840 = vmatpush1.xpose.msra.mxu0 0.0
        %841 = vmatprep.subr.mxu0 0.0
        %842 = vmatpush1.xpose.msra.mxu0 0.0
        %843 = vmatprep.subr.mxu0 0.0
        %844 = vmatpush1.xpose.msra.mxu0 0.0
        %845 = vmatprep.subr.mxu0 0.0
        %846 = vmatpush1.xpose.msra.mxu0 0.0
        %847 = vmatprep.subr.mxu0 0.0
        %848 = vmatpush1.xpose.msra.mxu0 0.0
        %849 = vmatprep.subr.mxu0 0.0
        %850 = vmatpush1.xpose.msra.mxu0 0.0
        %851 = vmatprep.subr.mxu0 0.0
        %852 = vmatpush1.xpose.msra.mxu0 0.0
        %853 = vmatprep.subr.mxu0 0.0
        %854 = vmatpush1.xpose.msra.mxu0 0.0
        %855 = vmatprep.subr.mxu0 0.0
        %856 = vmatpush1.xpose.msra.mxu0 0.0
        %857 = vmatprep.subr.mxu0 0.0
        %858 = vmatpush1.xpose.msra.mxu0 0.0
        %859 = vmatprep.subr.mxu0 0.0
        %860 = vmatpush1.xpose.msra.mxu0 0.0
        %861 = vmatprep.subr.mxu0 0.0
        %862 = vmatpush1.xpose.msra.mxu0 0.0
        %863 = vmatprep.subr.mxu0 0.0
        %864 = vmatpush1.xpose.msra.mxu0 0.0
        %865 = vmatprep.subr.mxu0 0.0
        %866 = vmatpush1.xpose.msra.mxu0 0.0
        %867 = vmatprep.subr.mxu0 0.0
        %868 = vmatpush1.xpose.msra.mxu0 0.0
        %869 = vmatprep.subr.mxu0 0.0
        %870 = vmatpush1.xpose.msra.mxu0 0.0
        %871 = vmatprep.subr.mxu0 0.0
        %872 = vmatpush1.xpose.msra.mxu0 0.0
        %873 = vmatprep.subr.mxu0 0.0
        %874 = vmatpush1.xpose.msra.mxu0 0.0
        %875 = vmatprep.mubr.f32.mxu0 0.0
        %876 = vmatmul.mubr.f32.gmra.mrb[0].mxu0 %v809
        %v877 = vpop.f32.mrb[0].mxu0
        %v878 = vadd.f32 0.0, %v877
        %v879 = vpop.f32.mrb[0].mxu0
        %880 = vdwg.mxu0
        %v882 = vsel %vm808, %v807, 0
        %884 = vmatprep.subr.mxu0 0.0
        %885 = vmatpush1.xpose.msra.mxu0 %v809
        %886 = vmatprep.subr.mxu0 0.0
        %887 = vmatpush1.xpose.msra.mxu0 0.0
        %888 = vmatprep.subr.mxu0 0.0
        %889 = vmatpush1.xpose.msra.mxu0 0.0
        %890 = vmatprep.subr.mxu0 0.0
        %891 = vmatpush1.xpose.msra.mxu0 0.0
        %892 = vmatprep.subr.mxu0 0.0
        %893 = vmatpush1.xpose.msra.mxu0 0.0
        %894 = vmatprep.subr.mxu0 0.0
        %895 = vmatpush1.xpose.msra.mxu0 0.0
        %896 = vmatprep.subr.mxu0 0.0
        %897 = vmatpush1.xpose.msra.mxu0 0.0
        %898 = vmatprep.subr.mxu0 0.0
        %899 = vmatpush1.xpose.msra.mxu0 0.0
        %900 = vmatprep.subr.mxu0 0.0
        %901 = vmatpush1.xpose.msra.mxu0 0.0
        %902 = vmatprep.subr.mxu0 0.0
        %903 = vmatpush1.xpose.msra.mxu0 0.0
        %904 = vmatprep.subr.mxu0 0.0
        %905 = vmatpush1.xpose.msra.mxu0 0.0
        %906 = vmatprep.subr.mxu0 0.0
        %907 = vmatpush1.xpose.msra.mxu0 0.0
        %908 = vmatprep.subr.mxu0 0.0
        %909 = vmatpush1.xpose.msra.mxu0 0.0
        %910 = vmatprep.subr.mxu0 0.0
        %911 = vmatpush1.xpose.msra.mxu0 0.0
        %912 = vmatprep.subr.mxu0 0.0
        %913 = vmatpush1.xpose.msra.mxu0 0.0
        %914 = vmatprep.subr.mxu0 0.0
        %915 = vmatpush1.xpose.msra.mxu0 0.0
        %916 = vmatprep.subr.mxu0 0.0
        %917 = vmatpush1.xpose.msra.mxu0 0.0
        %918 = vmatprep.subr.mxu0 0.0
        %919 = vmatpush1.xpose.msra.mxu0 0.0
        %920 = vmatprep.subr.mxu0 0.0
        %921 = vmatpush1.xpose.msra.mxu0 0.0
        %922 = vmatprep.subr.mxu0 0.0
        %923 = vmatpush1.xpose.msra.mxu0 0.0
        %924 = vmatprep.subr.mxu0 0.0
        %925 = vmatpush1.xpose.msra.mxu0 0.0
        %926 = vmatprep.subr.mxu0 0.0
        %927 = vmatpush1.xpose.msra.mxu0 0.0
        %928 = vmatprep.subr.mxu0 0.0
        %929 = vmatpush1.xpose.msra.mxu0 0.0
        %930 = vmatprep.subr.mxu0 0.0
        %931 = vmatpush1.xpose.msra.mxu0 0.0
        %932 = vmatprep.subr.mxu0 0.0
        %933 = vmatpush1.xpose.msra.mxu0 0.0
        %934 = vmatprep.subr.mxu0 0.0
        %935 = vmatpush1.xpose.msra.mxu0 0.0
        %936 = vmatprep.subr.mxu0 0.0
        %937 = vmatpush1.xpose.msra.mxu0 0.0
        %938 = vmatprep.subr.mxu0 0.0
        %939 = vmatpush1.xpose.msra.mxu0 0.0
        %940 = vmatprep.subr.mxu0 0.0
        %941 = vmatpush1.xpose.msra.mxu0 0.0
        %942 = vmatprep.subr.mxu0 0.0
        %943 = vmatpush1.xpose.msra.mxu0 0.0
        %944 = vmatprep.subr.mxu0 0.0
        %945 = vmatpush1.xpose.msra.mxu0 0.0
        %946 = vmatprep.subr.mxu0 0.0
        %947 = vmatpush1.xpose.msra.mxu0 0.0
        %948 = vmatprep.mubr.f32.mxu0 0.0
        %949 = vmatmul.mubr.f32.gmra.mrb[0].mxu0 %v882
        %v950 = vpop.f32.mrb[0].mxu0
        %v951 = vadd.f32 0.0, %v950
        %v952 = vpop.f32.mrb[0].mxu0
        %953 = vdwg.mxu0
        %v955 = vsel %vm782, 1.0, 0
        %v958 = vsel %vm782, %v797, 0
        %960 = vmatprep.subr.mxu0 0.0
        %961 = vmatpush1.xpose.msra.mxu0 %v958
        %962 = vmatprep.subr.mxu0 0.0
        %963 = vmatpush1.xpose.msra.mxu0 0.0
        %964 = vmatprep.subr.mxu0 0.0
        %965 = vmatpush1.xpose.msra.mxu0 0.0
        %966 = vmatprep.subr.mxu0 0.0
        %967 = vmatpush1.xpose.msra.mxu0 0.0
        %968 = vmatprep.subr.mxu0 0.0
        %969 = vmatpush1.xpose.msra.mxu0 0.0
        %970 = vmatprep.subr.mxu0 0.0
        %971 = vmatpush1.xpose.msra.mxu0 0.0
        %972 = vmatprep.subr.mxu0 0.0
        %973 = vmatpush1.xpose.msra.mxu0 0.0
        %974 = vmatprep.subr.mxu0 0.0
        %975 = vmatpush1.xpose.msra.mxu0 0.0
        %976 = vmatprep.subr.mxu0 0.0
        %977 = vmatpush1.xpose.msra.mxu0 0.0
        %978 = vmatprep.subr.mxu0 0.0
        %979 = vmatpush1.xpose.msra.mxu0 0.0
        %980 = vmatprep.subr.mxu0 0.0
        %981 = vmatpush1.xpose.msra.mxu0 0.0
        %982 = vmatprep.subr.mxu0 0.0
        %983 = vmatpush1.xpose.msra.mxu0 0.0
        %984 = vmatprep.subr.mxu0 0.0
        %985 = vmatpush1.xpose.msra.mxu0 0.0
        %986 = vmatprep.subr.mxu0 0.0
        %987 = vmatpush1.xpose.msra.mxu0 0.0
        %988 = vmatprep.subr.mxu0 0.0
        %989 = vmatpush1.xpose.msra.mxu0 0.0
        %990 = vmatprep.subr.mxu0 0.0
        %991 = vmatpush1.xpose.msra.mxu0 0.0
        %992 = vmatprep.subr.mxu0 0.0
        %993 = vmatpush1.xpose.msra.mxu0 0.0
        %994 = vmatprep.subr.mxu0 0.0
        %995 = vmatpush1.xpose.msra.mxu0 0.0
        %996 = vmatprep.subr.mxu0 0.0
        %997 = vmatpush1.xpose.msra.mxu0 0.0
        %998 = vmatprep.subr.mxu0 0.0
        %999 = vmatpush1.xpose.msra.mxu0 0.0
        %1000 = vmatprep.subr.mxu0 0.0
        %1001 = vmatpush1.xpose.msra.mxu0 0.0
        %1002 = vmatprep.subr.mxu0 0.0
        %1003 = vmatpush1.xpose.msra.mxu0 0.0
        %1004 = vmatprep.subr.mxu0 0.0
        %1005 = vmatpush1.xpose.msra.mxu0 0.0
        %1006 = vmatprep.subr.mxu0 0.0
        %1007 = vmatpush1.xpose.msra.mxu0 0.0
        %1008 = vmatprep.subr.mxu0 0.0
        %1009 = vmatpush1.xpose.msra.mxu0 0.0
        %1010 = vmatprep.subr.mxu0 0.0
        %1011 = vmatpush1.xpose.msra.mxu0 0.0
        %1012 = vmatprep.subr.mxu0 0.0
        %1013 = vmatpush1.xpose.msra.mxu0 0.0
        %1014 = vmatprep.subr.mxu0 0.0
        %1015 = vmatpush1.xpose.msra.mxu0 0.0
        %1016 = vmatprep.subr.mxu0 0.0
        %1017 = vmatpush1.xpose.msra.mxu0 0.0
        %1018 = vmatprep.subr.mxu0 0.0
        %1019 = vmatpush1.xpose.msra.mxu0 0.0
        %1020 = vmatprep.subr.mxu0 0.0
        %1021 = vmatpush1.xpose.msra.mxu0 0.0
        %1022 = vmatprep.subr.mxu0 0.0
        %1023 = vmatpush1.xpose.msra.mxu0 0.0
        %1024 = vmatprep.mubr.f32.mxu0 0.0
        %1025 = vmatmul.mubr.f32.gmra.mrb[0].mxu0 %v955
        %v1026 = vpop.f32.mrb[0].mxu0
        %v1027 = vadd.f32 0.0, %v1026
        %v1028 = vpop.f32.mrb[0].mxu0
        %1029 = vdwg.mxu0
        %v1030 = vsel %vm782, %v752, 0
        %1032 = vmatprep.subr.mxu0 0.0
        %1033 = vmatpush1.xpose.msra.mxu0 %v1030
        %1034 = vmatprep.subr.mxu0 0.0
        %1035 = vmatpush1.xpose.msra.mxu0 0.0
        %1036 = vmatprep.subr.mxu0 0.0
        %1037 = vmatpush1.xpose.msra.mxu0 0.0
        %1038 = vmatprep.subr.mxu0 0.0
        %1039 = vmatpush1.xpose.msra.mxu0 0.0
        %1040 = vmatprep.subr.mxu0 0.0
        %1041 = vmatpush1.xpose.msra.mxu0 0.0
        %1042 = vmatprep.subr.mxu0 0.0
        %1043 = vmatpush1.xpose.msra.mxu0 0.0
        %1044 = vmatprep.subr.mxu0 0.0
        %1045 = vmatpush1.xpose.msra.mxu0 0.0
        %1046 = vmatprep.subr.mxu0 0.0
        %1047 = vmatpush1.xpose.msra.mxu0 0.0
        %1048 = vmatprep.subr.mxu0 0.0
        %1049 = vmatpush1.xpose.msra.mxu0 0.0
        %1050 = vmatprep.subr.mxu0 0.0
        %1051 = vmatpush1.xpose.msra.mxu0 0.0
        %1052 = vmatprep.subr.mxu0 0.0
        %1053 = vmatpush1.xpose.msra.mxu0 0.0
        %1054 = vmatprep.subr.mxu0 0.0
        %1055 = vmatpush1.xpose.msra.mxu0 0.0
        %1056 = vmatprep.subr.mxu0 0.0
        %1057 = vmatpush1.xpose.msra.mxu0 0.0
        %1058 = vmatprep.subr.mxu0 0.0
        %1059 = vmatpush1.xpose.msra.mxu0 0.0
        %1060 = vmatprep.subr.mxu0 0.0
        %1061 = vmatpush1.xpose.msra.mxu0 0.0
        %1062 = vmatprep.subr.mxu0 0.0
        %1063 = vmatpush1.xpose.msra.mxu0 0.0
        %1064 = vmatprep.subr.mxu0 0.0
        %1065 = vmatpush1.xpose.msra.mxu0 0.0
        %1066 = vmatprep.subr.mxu0 0.0
        %1067 = vmatpush1.xpose.msra.mxu0 0.0
        %1068 = vmatprep.subr.mxu0 0.0
        %1069 = vmatpush1.xpose.msra.mxu0 0.0
        %1070 = vmatprep.subr.mxu0 0.0
        %1071 = vmatpush1.xpose.msra.mxu0 0.0
        %1072 = vmatprep.subr.mxu0 0.0
        %1073 = vmatpush1.xpose.msra.mxu0 0.0
        %1074 = vmatprep.subr.mxu0 0.0
        %1075 = vmatpush1.xpose.msra.mxu0 0.0
        %1076 = vmatprep.subr.mxu0 0.0
        %1077 = vmatpush1.xpose.msra.mxu0 0.0
        %1078 = vmatprep.subr.mxu0 0.0
        %1079 = vmatpush1.xpose.msra.mxu0 0.0
        %1080 = vmatprep.subr.mxu0 0.0
        %1081 = vmatpush1.xpose.msra.mxu0 0.0
        %1082 = vmatprep.subr.mxu0 0.0
        %1083 = vmatpush1.xpose.msra.mxu0 0.0
        %1084 = vmatprep.subr.mxu0 0.0
        %1085 = vmatpush1.xpose.msra.mxu0 0.0
        %1086 = vmatprep.subr.mxu0 0.0
        %1087 = vmatpush1.xpose.msra.mxu0 0.0
        %1088 = vmatprep.subr.mxu0 0.0
        %1089 = vmatpush1.xpose.msra.mxu0 0.0
        %1090 = vmatprep.subr.mxu0 0.0
        %1091 = vmatpush1.xpose.msra.mxu0 0.0
        %1092 = vmatprep.subr.mxu0 0.0
        %1093 = vmatpush1.xpose.msra.mxu0 0.0
        %1094 = vmatprep.subr.mxu0 0.0
        %1095 = vmatpush1.xpose.msra.mxu0 0.0
        %1096 = vmatprep.mubr.f32.mxu0 0.0
        %1097 = vmatmul.mubr.f32.gmra.mrb[0].mxu0 %v955
        %v1098 = vpop.f32.mrb[0].mxu0
        %v1099 = vadd.f32 0.0, %v1098
        %v1100 = vpop.f32.mrb[0].mxu0
        %1101 = vdwg.mxu0
        %1102 = vset.pattern.permute.xlu0 0
        %1103 = vperm.xlu0 %1102, %v797
        %v1104 = vpop.permute.xlu0 %1103
        %v1106 = vadd.f32 %v1104, %v1027
        %v1107 = vmul.f32 %v878, 2.0
        %v1108 = vsub.f32 %v1106, %v1107
        %vm1109 = vcmp.le.f32.partialorder %v1108, 0.16
        %v1110 = vsel %vm1109, 1.0, 0.0
        %1111 = vset.pattern.permute.xlu0 1
        %1112 = vperm.xlu0 %1111, %v749
        %v1113 = vpop.permute.xlu0 %1112
        %v1115 = vmul.f32 %v1110, %v1113
        %v1116 = vmul.f32 %v1115, %v1099
        %v1117 = vmul.f32 %v1104, %v1027
        %vm1118 = vcmp.gt.f32.partialorder %v1117, 0.0
        %v1119 = vsel %vm1118, %v1117, 1.0
        %v1120 = vrsqrt.pop %v1119
        %v1121 = vsel %vm1118, %v1120, 0.0
        %v1122 = vmul.f32 %v878, %v1121
        %v1123 = vmul.f32 %v951, %v1121
        %1125 = vrot.lane.b32.xlu0 %v768, 127
        %v1126 = vpop.permute.xlu0 %1125
        %v1127 = vsel %vm782, %v1126, 0
        %vm1129 = vcmask 1040384
        %v1131 = vsel %vm1129, %v784, 0
        %1133 = vmatprep.subr.mxu0 0.0
        %1134 = vmatpush1.msra.mxu0 %v1131
        %1135 = vmatprep.subr.mxu0 0.0
        %1136 = vmatpush1.msra.mxu0 0.0
        %1137 = vmatprep.subr.mxu0 0.0
        %1138 = vmatpush1.msra.mxu0 0.0
        %1139 = vmatprep.subr.mxu0 0.0
        %1140 = vmatpush1.msra.mxu0 0.0
        %1141 = vmatprep.subr.mxu0 0.0
        %1142 = vmatpush1.msra.mxu0 0.0
        %1143 = vmatprep.subr.mxu0 0.0
        %1144 = vmatpush1.msra.mxu0 0.0
        %1145 = vmatprep.subr.mxu0 0.0
        %1146 = vmatpush1.msra.mxu0 0.0
        %1147 = vmatprep.subr.mxu0 0.0
        %1148 = vmatpush1.msra.mxu0 0.0
        %1149 = vmatprep.subr.mxu0 0.0
        %1150 = vmatpush1.msra.mxu0 0.0
        %1151 = vmatprep.subr.mxu0 0.0
        %1152 = vmatpush1.msra.mxu0 0.0
        %1153 = vmatprep.subr.mxu0 0.0
        %1154 = vmatpush1.msra.mxu0 0.0
        %1155 = vmatprep.subr.mxu0 0.0
        %1156 = vmatpush1.msra.mxu0 0.0
        %1157 = vmatprep.subr.mxu0 0.0
        %1158 = vmatpush1.msra.mxu0 0.0
        %1159 = vmatprep.subr.mxu0 0.0
        %1160 = vmatpush1.msra.mxu0 0.0
        %1161 = vmatprep.subr.mxu0 0.0
        %1162 = vmatpush1.msra.mxu0 0.0
        %1163 = vmatprep.subr.mxu0 0.0
        %1164 = vmatpush1.msra.mxu0 0.0
        %1165 = vmatprep.subr.mxu0 0.0
        %1166 = vmatpush1.msra.mxu0 0.0
        %1167 = vmatprep.subr.mxu0 0.0
        %1168 = vmatpush1.msra.mxu0 0.0
        %1169 = vmatprep.subr.mxu0 0.0
        %1170 = vmatpush1.msra.mxu0 0.0
        %1171 = vmatprep.subr.mxu0 0.0
        %1172 = vmatpush1.msra.mxu0 0.0
        %1173 = vmatprep.subr.mxu0 0.0
        %1174 = vmatpush1.msra.mxu0 0.0
        %1175 = vmatprep.subr.mxu0 0.0
        %1176 = vmatpush1.msra.mxu0 0.0
        %1177 = vmatprep.subr.mxu0 0.0
        %1178 = vmatpush1.msra.mxu0 0.0
        %1179 = vmatprep.subr.mxu0 0.0
        %1180 = vmatpush1.msra.mxu0 0.0
        %1181 = vmatprep.subr.mxu0 0.0
        %1182 = vmatpush1.msra.mxu0 0.0
        %1183 = vmatprep.subr.mxu0 0.0
        %1184 = vmatpush1.msra.mxu0 0.0
        %1185 = vmatprep.subr.mxu0 0.0
        %1186 = vmatpush1.msra.mxu0 0.0
        %1187 = vmatprep.subr.mxu0 0.0
        %1188 = vmatpush1.msra.mxu0 0.0
        %1189 = vmatprep.subr.mxu0 0.0
        %1190 = vmatpush1.msra.mxu0 0.0
        %1191 = vmatprep.subr.mxu0 0.0
        %1192 = vmatpush1.msra.mxu0 0.0
        %1193 = vmatprep.subr.mxu0 0.0
        %1194 = vmatpush1.msra.mxu0 0.0
        %1195 = vmatprep.subr.mxu0 0.0
        %1196 = vmatpush1.msra.mxu0 0.0
        %1197 = vmatprep.mubr.f32.mxu0 0.0
        %1198 = vmatmul.mubr.f32.gmra.mrb[0].mxu0 %v1127
        %v1199 = vpop.f32.mrb[0].mxu0
        %v1200 = vadd.f32 0.0, %v1199
        %v1201 = vpop.f32.mrb[0].mxu0
        %1202 = vdwg.mxu0
        %v1204 = vsel %vm1129, %v785, 0
        %1206 = vmatprep.subr.mxu0 0.0
        %1207 = vmatpush1.msra.mxu0 %v1204
        %1208 = vmatprep.subr.mxu0 0.0
        %1209 = vmatpush1.msra.mxu0 0.0
        %1210 = vmatprep.subr.mxu0 0.0
        %1211 = vmatpush1.msra.mxu0 0.0
        %1212 = vmatprep.subr.mxu0 0.0
        %1213 = vmatpush1.msra.mxu0 0.0
        %1214 = vmatprep.subr.mxu0 0.0
        %1215 = vmatpush1.msra.mxu0 0.0
        %1216 = vmatprep.subr.mxu0 0.0
        %1217 = vmatpush1.msra.mxu0 0.0
        %1218 = vmatprep.subr.mxu0 0.0
        %1219 = vmatpush1.msra.mxu0 0.0
        %1220 = vmatprep.subr.mxu0 0.0
        %1221 = vmatpush1.msra.mxu0 0.0
        %1222 = vmatprep.subr.mxu0 0.0
        %1223 = vmatpush1.msra.mxu0 0.0
        %1224 = vmatprep.subr.mxu0 0.0
        %1225 = vmatpush1.msra.mxu0 0.0
        %1226 = vmatprep.subr.mxu0 0.0
        %1227 = vmatpush1.msra.mxu0 0.0
        %1228 = vmatprep.subr.mxu0 0.0
        %1229 = vmatpush1.msra.mxu0 0.0
        %1230 = vmatprep.subr.mxu0 0.0
        %1231 = vmatpush1.msra.mxu0 0.0
        %1232 = vmatprep.subr.mxu0 0.0
        %1233 = vmatpush1.msra.mxu0 0.0
        %1234 = vmatprep.subr.mxu0 0.0
        %1235 = vmatpush1.msra.mxu0 0.0
        %1236 = vmatprep.subr.mxu0 0.0
        %1237 = vmatpush1.msra.mxu0 0.0
        %1238 = vmatprep.subr.mxu0 0.0
        %1239 = vmatpush1.msra.mxu0 0.0
        %1240 = vmatprep.subr.mxu0 0.0
        %1241 = vmatpush1.msra.mxu0 0.0
        %1242 = vmatprep.subr.mxu0 0.0
        %1243 = vmatpush1.msra.mxu0 0.0
        %1244 = vmatprep.subr.mxu0 0.0
        %1245 = vmatpush1.msra.mxu0 0.0
        %1246 = vmatprep.subr.mxu0 0.0
        %1247 = vmatpush1.msra.mxu0 0.0
        %1248 = vmatprep.subr.mxu0 0.0
        %1249 = vmatpush1.msra.mxu0 0.0
        %1250 = vmatprep.subr.mxu0 0.0
        %1251 = vmatpush1.msra.mxu0 0.0
        %1252 = vmatprep.subr.mxu0 0.0
        %1253 = vmatpush1.msra.mxu0 0.0
        %1254 = vmatprep.subr.mxu0 0.0
        %1255 = vmatpush1.msra.mxu0 0.0
        %1256 = vmatprep.subr.mxu0 0.0
        %1257 = vmatpush1.msra.mxu0 0.0
        %1258 = vmatprep.subr.mxu0 0.0
        %1259 = vmatpush1.msra.mxu0 0.0
        %1260 = vmatprep.subr.mxu0 0.0
        %1261 = vmatpush1.msra.mxu0 0.0
        %1262 = vmatprep.subr.mxu0 0.0
        %1263 = vmatpush1.msra.mxu0 0.0
        %1264 = vmatprep.subr.mxu0 0.0
        %1265 = vmatpush1.msra.mxu0 0.0
        %1266 = vmatprep.subr.mxu0 0.0
        %1267 = vmatpush1.msra.mxu0 0.0
        %1268 = vmatprep.subr.mxu0 0.0
        %1269 = vmatpush1.msra.mxu0 0.0
        %1270 = vmatprep.mubr.f32.mxu0 0.0
        %1271 = vmatmul.mubr.f32.gmra.mrb[0].mxu0 %v1127
        %v1272 = vpop.f32.mrb[0].mxu0
        %v1273 = vadd.f32 0.0, %v1272
        %v1274 = vpop.f32.mrb[0].mxu0
        %1275 = vdwg.mxu0
        %v1277 = vcombine.high %v1200, %v1200
        %v1279 = vunpack.c.l.s4 1966171168
        %v1280 = vunpack.c.0.s8 %v1279
        %v1281 = vlaneseq
        %v1282 = vshrl.u32 %v1281, 7
        %v1283 = vsub.s32 %v1280, %v1282
        %v1284 = vrot.slane %v1200, %v1283
        %v1286 = vunpack.c.l.s4 1966171168
        %v1287 = vunpack.c.0.s8 %v1286
        %v1288 = vlaneseq
        %v1289 = vshrl.u32 %v1288, 7
        %v1290 = vsub.s32 %v1287, %v1289
        %v1291 = vrot.slane %v1277, %v1290
        %v1292 = vcombine.high %v1284, %v1284
        %v1293 = vcombine.high %v1291, %v1291
        %v1295 = vunpack.c.l.s4 1966171168
        %v1296 = vunpack.c.0.s8 %v1295
        %v1297 = vlaneseq
        %v1298 = vshrl.u32 %v1297, 7
        %v1299 = vsub.s32 %v1296, %v1298
        %v1300 = vrot.slane %v1284, %v1299
        %v1302 = vunpack.c.l.s4 1966171168
        %v1303 = vunpack.c.0.s8 %v1302
        %v1304 = vlaneseq
        %v1305 = vshrl.u32 %v1304, 7
        %v1306 = vsub.s32 %v1303, %v1305
        %v1307 = vrot.slane %v1291, %v1306
        %v1309 = vunpack.c.l.s4 1966171168
        %v1310 = vunpack.c.0.s8 %v1309
        %v1311 = vlaneseq
        %v1312 = vshrl.u32 %v1311, 7
        %v1313 = vsub.s32 %v1310, %v1312
        %v1314 = vrot.slane %v1292, %v1313
        %v1316 = vunpack.c.l.s4 1966171168
        %v1317 = vunpack.c.0.s8 %v1316
        %v1318 = vlaneseq
        %v1319 = vshrl.u32 %v1318, 7
        %v1320 = vsub.s32 %v1317, %v1319
        %v1321 = vrot.slane %v1293, %v1320
        %v1322 = vcombine.high %v1300, %v1300
        %v1323 = vcombine.high %v1307, %v1307
        %v1324 = vcombine.high %v1314, %v1314
        %v1325 = vcombine.high %v1321, %v1321
        %v1326 = vlaneseq
        %v1327 = vshrl.u32 %v1326, 7
        %v1328 = vsub.s32 0, %v1327
        %v1329 = vrot.slane %v1300, %v1328
        %v1330 = vlaneseq
        %v1331 = vshrl.u32 %v1330, 7
        %v1332 = vsub.s32 0, %v1331
        %v1333 = vrot.slane %v1314, %v1332
        %v1334 = vlaneseq
        %v1335 = vshrl.u32 %v1334, 7
        %v1336 = vsub.s32 0, %v1335
        %v1337 = vrot.slane %v1322, %v1336
        %v1338 = vlaneseq
        %v1339 = vshrl.u32 %v1338, 7
        %v1340 = vsub.s32 0, %v1339
        %v1341 = vrot.slane %v1324, %v1340
        %v1342 = vlaneseq
        %v1343 = vshrl.u32 %v1342, 7
        %v1344 = vsub.s32 0, %v1343
        %v1345 = vrot.slane %v1307, %v1344
        %v1346 = vlaneseq
        %v1347 = vshrl.u32 %v1346, 7
        %v1348 = vsub.s32 0, %v1347
        %v1349 = vrot.slane %v1321, %v1348
        %v1350 = vlaneseq
        %v1351 = vshrl.u32 %v1350, 7
        %v1352 = vsub.s32 0, %v1351
        %v1353 = vrot.slane %v1323, %v1352
        %v1354 = vlaneseq
        %v1355 = vshrl.u32 %v1354, 7
        %v1356 = vsub.s32 0, %v1355
        %v1357 = vrot.slane %v1325, %v1356
        %v1366 = vadd.f32 %v1329, %v1273
        %v1367 = vadd.f32 %v1333, %v1273
        %v1368 = vadd.f32 %v1337, %v1273
        %v1369 = vadd.f32 %v1341, %v1273
        %v1370 = vadd.f32 %v1345, %v1273
        %v1371 = vadd.f32 %v1349, %v1273
        %v1372 = vadd.f32 %v1353, %v1273
        %v1373 = vadd.f32 %v1357, %v1273
        %v1374 = vlaneseq
        %v1375 = vshrl.u32 %v1374, 7
        %v1376 = vsub.s32 0, %v1375
        %v1377 = vrot.slane %v1122, %v1376
        %1379 = vbcast.lane.b32.xlu0 %v1377, 256
        %v1380 = vpop.permute.xlu0 %1379
        %v1381 = vlaneseq
        %v1382 = vshrl.u32 %v1381, 7
        %v1383 = vsub.s32 1, %v1382
        %v1384 = vrot.slane %v1122, %v1383
        %1386 = vbcast.lane.b32.xlu0 %v1384, 256
        %v1387 = vpop.permute.xlu0 %1386
        %v1388 = vlaneseq
        %v1389 = vshrl.u32 %v1388, 7
        %v1390 = vsub.s32 2, %v1389
        %v1391 = vrot.slane %v1122, %v1390
        %1393 = vbcast.lane.b32.xlu0 %v1391, 256
        %v1394 = vpop.permute.xlu0 %1393
        %v1395 = vlaneseq
        %v1396 = vshrl.u32 %v1395, 7
        %v1397 = vsub.s32 3, %v1396
        %v1398 = vrot.slane %v1122, %v1397
        %1400 = vbcast.lane.b32.xlu0 %v1398, 256
        %v1401 = vpop.permute.xlu0 %1400
        %v1402 = vlaneseq
        %v1403 = vshrl.u32 %v1402, 7
        %v1404 = vsub.s32 4, %v1403
        %v1405 = vrot.slane %v1122, %v1404
        %1407 = vbcast.lane.b32.xlu0 %v1405, 256
        %v1408 = vpop.permute.xlu0 %1407
        %v1409 = vlaneseq
        %v1410 = vshrl.u32 %v1409, 7
        %v1411 = vsub.s32 5, %v1410
        %v1412 = vrot.slane %v1122, %v1411
        %1414 = vbcast.lane.b32.xlu0 %v1412, 256
        %v1415 = vpop.permute.xlu0 %1414
        %v1416 = vlaneseq
        %v1417 = vshrl.u32 %v1416, 7
        %v1418 = vsub.s32 6, %v1417
        %v1419 = vrot.slane %v1122, %v1418
        %1421 = vbcast.lane.b32.xlu0 %v1419, 256
        %v1422 = vpop.permute.xlu0 %1421
        %v1423 = vlaneseq
        %v1424 = vshrl.u32 %v1423, 7
        %v1425 = vsub.s32 7, %v1424
        %v1426 = vrot.slane %v1122, %v1425
        %1428 = vbcast.lane.b32.xlu0 %v1426, 256
        %v1429 = vpop.permute.xlu0 %1428
        %v1431 = vlaneseq
        %v1432 = vshrl.u32 %v1431, 7
        %v1433 = vsub.s32 0, %v1432
        %v1434 = vrot.slane %v786, %v1433
        %v1436 = vmul.f32 %v1380, %v1434
        %v1437 = vmul.f32 %v1387, %v1434
        %v1438 = vmul.f32 %v1394, %v1434
        %v1439 = vmul.f32 %v1401, %v1434
        %v1440 = vmul.f32 %v1408, %v1434
        %v1441 = vmul.f32 %v1415, %v1434
        %v1442 = vmul.f32 %v1422, %v1434
        %v1443 = vmul.f32 %v1429, %v1434
        %v1444 = vadd.f32 %v1366, %v1436
        %v1445 = vadd.f32 %v1367, %v1437
        %v1446 = vadd.f32 %v1368, %v1438
        %v1447 = vadd.f32 %v1369, %v1439
        %v1448 = vadd.f32 %v1370, %v1440
        %v1449 = vadd.f32 %v1371, %v1441
        %v1450 = vadd.f32 %v1372, %v1442
        %v1451 = vadd.f32 %v1373, %v1443
        %v1452 = vlaneseq
        %v1453 = vshrl.u32 %v1452, 7
        %v1454 = vsub.s32 0, %v1453
        %v1455 = vrot.slane %v1123, %v1454
        %1457 = vbcast.lane.b32.xlu0 %v1455, 256
        %v1458 = vpop.permute.xlu0 %1457
        %v1459 = vlaneseq
        %v1460 = vshrl.u32 %v1459, 7
        %v1461 = vsub.s32 1, %v1460
        %v1462 = vrot.slane %v1123, %v1461
        %1464 = vbcast.lane.b32.xlu0 %v1462, 256
        %v1465 = vpop.permute.xlu0 %1464
        %v1466 = vlaneseq
        %v1467 = vshrl.u32 %v1466, 7
        %v1468 = vsub.s32 2, %v1467
        %v1469 = vrot.slane %v1123, %v1468
        %1471 = vbcast.lane.b32.xlu0 %v1469, 256
        %v1472 = vpop.permute.xlu0 %1471
        %v1473 = vlaneseq
        %v1474 = vshrl.u32 %v1473, 7
        %v1475 = vsub.s32 3, %v1474
        %v1476 = vrot.slane %v1123, %v1475
        %1478 = vbcast.lane.b32.xlu0 %v1476, 256
        %v1479 = vpop.permute.xlu0 %1478
        %v1480 = vlaneseq
        %v1481 = vshrl.u32 %v1480, 7
        %v1482 = vsub.s32 4, %v1481
        %v1483 = vrot.slane %v1123, %v1482
        %1485 = vbcast.lane.b32.xlu0 %v1483, 256
        %v1486 = vpop.permute.xlu0 %1485
        %v1487 = vlaneseq
        %v1488 = vshrl.u32 %v1487, 7
        %v1489 = vsub.s32 5, %v1488
        %v1490 = vrot.slane %v1123, %v1489
        %1492 = vbcast.lane.b32.xlu0 %v1490, 256
        %v1493 = vpop.permute.xlu0 %1492
        %v1494 = vlaneseq
        %v1495 = vshrl.u32 %v1494, 7
        %v1496 = vsub.s32 6, %v1495
        %v1497 = vrot.slane %v1123, %v1496
        %1499 = vbcast.lane.b32.xlu0 %v1497, 256
        %v1500 = vpop.permute.xlu0 %1499
        %v1501 = vlaneseq
        %v1502 = vshrl.u32 %v1501, 7
        %v1503 = vsub.s32 7, %v1502
        %v1504 = vrot.slane %v1123, %v1503
        %1506 = vbcast.lane.b32.xlu0 %v1504, 256
        %v1507 = vpop.permute.xlu0 %1506
        %v1509 = vlaneseq
        %v1510 = vshrl.u32 %v1509, 7
        %v1511 = vsub.s32 0, %v1510
        %v1512 = vrot.slane %v787, %v1511
        %v1514 = vmul.f32 %v1458, %v1512
        %v1515 = vmul.f32 %v1465, %v1512
        %v1516 = vmul.f32 %v1472, %v1512
        %v1517 = vmul.f32 %v1479, %v1512
        %v1518 = vmul.f32 %v1486, %v1512
        %v1519 = vmul.f32 %v1493, %v1512
        %v1520 = vmul.f32 %v1500, %v1512
        %v1521 = vmul.f32 %v1507, %v1512
        %v1522 = vadd.f32 %v1444, %v1514
        %v1523 = vadd.f32 %v1445, %v1515
        %v1524 = vadd.f32 %v1446, %v1516
        %v1525 = vadd.f32 %v1447, %v1517
        %v1526 = vadd.f32 %v1448, %v1518
        %v1527 = vadd.f32 %v1449, %v1519
        %v1528 = vadd.f32 %v1450, %v1520
        %v1529 = vadd.f32 %v1451, %v1521
        %v1531 = vlaneseq
        %v1532 = vshrl.u32 %v1531, 7
        %v1533 = vsub.s32 0, %v1532
        %v1534 = vrot.slane %v788, %v1533
        %v1536 = vadd.f32 %v1522, %v1534
        %v1537 = vadd.f32 %v1523, %v1534
        %v1538 = vadd.f32 %v1524, %v1534
        %v1539 = vadd.f32 %v1525, %v1534
        %v1540 = vadd.f32 %v1526, %v1534
        %v1541 = vadd.f32 %v1527, %v1534
        %v1542 = vadd.f32 %v1528, %v1534
        %v1543 = vadd.f32 %v1529, %v1534
        %v1544 = vmul.f32 %v1536, 0.999995
        %v1545 = vmul.f32 %v1537, 0.999995
        %v1546 = vmul.f32 %v1538, 0.999995
        %v1547 = vmul.f32 %v1539, 0.999995
        %v1548 = vmul.f32 %v1540, 0.999995
        %v1549 = vmul.f32 %v1541, 0.999995
        %v1550 = vmul.f32 %v1542, 0.999995
        %v1551 = vmul.f32 %v1543, 0.999995
        %vm1552 = vcmp.gt.f32.partialorder %v1544, 0.0
        %vm1553 = vcmp.gt.f32.partialorder %v1545, 0.0
        %vm1554 = vcmp.gt.f32.partialorder %v1546, 0.0
        %vm1555 = vcmp.gt.f32.partialorder %v1547, 0.0
        %vm1556 = vcmp.gt.f32.partialorder %v1548, 0.0
        %vm1557 = vcmp.gt.f32.partialorder %v1549, 0.0
        %vm1558 = vcmp.gt.f32.partialorder %v1550, 0.0
        %vm1559 = vcmp.gt.f32.partialorder %v1551, 0.0
        %v1560 = vmul.f32 %v1544, 0.01
        %v1561 = vmul.f32 %v1545, 0.01
        %v1562 = vmul.f32 %v1546, 0.01
        %v1563 = vmul.f32 %v1547, 0.01
        %v1564 = vmul.f32 %v1548, 0.01
        %v1565 = vmul.f32 %v1549, 0.01
        %v1566 = vmul.f32 %v1550, 0.01
        %v1567 = vmul.f32 %v1551, 0.01
        %v1568 = vsel %vm1552, %v1544, %v1560
        %v1569 = vsel %vm1553, %v1545, %v1561
        %v1570 = vsel %vm1554, %v1546, %v1562
        %v1571 = vsel %vm1555, %v1547, %v1563
        %v1572 = vsel %vm1556, %v1548, %v1564
        %v1573 = vsel %vm1557, %v1549, %v1565
        %v1574 = vsel %vm1558, %v1550, %v1566
        %v1575 = vsel %vm1559, %v1551, %v1567
        %vm1576 = vcmask 64512
        %v1577 = vsel %vm1576, %v1116, 0.0
        %1578 = vadd.xlane.f32.xlu0 %v1577
        %v1579 = vpop.xlane.xlu0 %1578
        %v1580 = vmul.f32 %v754, %v1579
        %vm1581 = vcmp.gt.f32.partialorder %v1580, 0.0
        %v1582 = vsel %vm1581, %v1580, 1.0
        %v1583 = vrcp.pop %v1582
        %v1584 = vsel %vm1581, %v1583, 0.0
        %v1585 = vmul.f32 %v1584, %v754
        %1587 = vset.pattern.permute.xlu0 0
        %1588 = vperm.xlu0 %1587, %v1585
        %v1589 = vpop.permute.xlu0 %1588
        %v1591 = vmul.f32 %v1589, %v1116
        %v1592 = vsel %vm1576, %v1591, 0.0
        %1593 = vadd.xlane.f32.xlu0 %v1592
        %v1594 = vpop.xlane.xlu0 %1593
        %v1595 = vlaneseq
        %v1596 = vshrl.u32 %v1595, 7
        %v1597 = vsub.s32 0, %v1596
        %v1598 = vrot.slane %v1591, %v1597
        %1600 = vbcast.lane.b32.xlu0 %v1598, 256
        %v1601 = vpop.permute.xlu0 %1600
        %v1602 = vlaneseq
        %v1603 = vshrl.u32 %v1602, 7
        %v1604 = vsub.s32 1, %v1603
        %v1605 = vrot.slane %v1591, %v1604
        %1607 = vbcast.lane.b32.xlu0 %v1605, 256
        %v1608 = vpop.permute.xlu0 %1607
        %v1609 = vlaneseq
        %v1610 = vshrl.u32 %v1609, 7
        %v1611 = vsub.s32 2, %v1610
        %v1612 = vrot.slane %v1591, %v1611
        %1614 = vbcast.lane.b32.xlu0 %v1612, 256
        %v1615 = vpop.permute.xlu0 %1614
        %v1616 = vlaneseq
        %v1617 = vshrl.u32 %v1616, 7
        %v1618 = vsub.s32 3, %v1617
        %v1619 = vrot.slane %v1591, %v1618
        %1621 = vbcast.lane.b32.xlu0 %v1619, 256
        %v1622 = vpop.permute.xlu0 %1621
        %v1623 = vlaneseq
        %v1624 = vshrl.u32 %v1623, 7
        %v1625 = vsub.s32 4, %v1624
        %v1626 = vrot.slane %v1591, %v1625
        %1628 = vbcast.lane.b32.xlu0 %v1626, 256
        %v1629 = vpop.permute.xlu0 %1628
        %v1630 = vlaneseq
        %v1631 = vshrl.u32 %v1630, 7
        %v1632 = vsub.s32 5, %v1631
        %v1633 = vrot.slane %v1591, %v1632
        %1635 = vbcast.lane.b32.xlu0 %v1633, 256
        %v1636 = vpop.permute.xlu0 %1635
        %v1637 = vlaneseq
        %v1638 = vshrl.u32 %v1637, 7
        %v1639 = vsub.s32 6, %v1638
        %v1640 = vrot.slane %v1591, %v1639
        %1642 = vbcast.lane.b32.xlu0 %v1640, 256
        %v1643 = vpop.permute.xlu0 %1642
        %v1644 = vlaneseq
        %v1645 = vshrl.u32 %v1644, 7
        %v1646 = vsub.s32 7, %v1645
        %v1647 = vrot.slane %v1591, %v1646
        %1649 = vbcast.lane.b32.xlu0 %v1647, 256
        %v1650 = vpop.permute.xlu0 %1649
        %v1651 = vmul.f32 %v1601, %v1568
        %v1652 = vmul.f32 %v1608, %v1569
        %v1653 = vmul.f32 %v1615, %v1570
        %v1654 = vmul.f32 %v1622, %v1571
        %v1655 = vmul.f32 %v1629, %v1572
        %v1656 = vmul.f32 %v1636, %v1573
        %v1657 = vmul.f32 %v1643, %v1574
        %v1658 = vmul.f32 %v1650, %v1575
        %vm1659 = vcmask 80896
        %v1660 = vsel %vm1659, %v1651, 0.0
        %v1661 = vrot.slane %v1660, 4
        %v1662 = vadd.f32 %v1660, %v1661
        %v1663 = vrot.slane %v1662, 2
        %v1664 = vadd.f32 %v1662, %v1663
        %v1665 = vrot.slane %v1664, 1
        %v1666 = vadd.f32 %v1664, %v1665
        %v1667 = vsel %vm1659, %v1652, 0.0
        %v1668 = vrot.slane %v1667, 4
        %v1669 = vadd.f32 %v1667, %v1668
        %v1670 = vrot.slane %v1669, 2
        %v1671 = vadd.f32 %v1669, %v1670
        %v1672 = vrot.slane %v1671, 1
        %v1673 = vadd.f32 %v1671, %v1672
        %v1674 = vsel %vm1659, %v1653, 0.0
        %v1675 = vrot.slane %v1674, 4
        %v1676 = vadd.f32 %v1674, %v1675
        %v1677 = vrot.slane %v1676, 2
        %v1678 = vadd.f32 %v1676, %v1677
        %v1679 = vrot.slane %v1678, 1
        %v1680 = vadd.f32 %v1678, %v1679
        %v1681 = vsel %vm1659, %v1654, 0.0
        %v1682 = vrot.slane %v1681, 4
        %v1683 = vadd.f32 %v1681, %v1682
        %v1684 = vrot.slane %v1683, 2
        %v1685 = vadd.f32 %v1683, %v1684
        %v1686 = vrot.slane %v1685, 1
        %v1687 = vadd.f32 %v1685, %v1686
        %v1688 = vsel %vm1659, %v1655, 0.0
        %v1689 = vrot.slane %v1688, 4
        %v1690 = vadd.f32 %v1688, %v1689
        %v1691 = vrot.slane %v1690, 2
        %v1692 = vadd.f32 %v1690, %v1691
        %v1693 = vrot.slane %v1692, 1
        %v1694 = vadd.f32 %v1692, %v1693
        %v1695 = vsel %vm1659, %v1656, 0.0
        %v1696 = vrot.slane %v1695, 4
        %v1697 = vadd.f32 %v1695, %v1696
        %v1698 = vrot.slane %v1697, 2
        %v1699 = vadd.f32 %v1697, %v1698
        %v1700 = vrot.slane %v1699, 1
        %v1701 = vadd.f32 %v1699, %v1700
        %v1702 = vsel %vm1659, %v1657, 0.0
        %v1703 = vrot.slane %v1702, 4
        %v1704 = vadd.f32 %v1702, %v1703
        %v1705 = vrot.slane %v1704, 2
        %v1706 = vadd.f32 %v1704, %v1705
        %v1707 = vrot.slane %v1706, 1
        %v1708 = vadd.f32 %v1706, %v1707
        %v1709 = vsel %vm1659, %v1658, 0.0
        %v1710 = vrot.slane %v1709, 4
        %v1711 = vadd.f32 %v1709, %v1710
        %v1712 = vrot.slane %v1711, 2
        %v1713 = vadd.f32 %v1711, %v1712
        %v1714 = vrot.slane %v1713, 1
        %v1715 = vadd.f32 %v1713, %v1714
        %vm1724 = vcmask 1041409
        %v1725 = vsel %vm1724, %v1673, %v1666
        %vm1726 = vcmask 1042434
        %v1727 = vsel %vm1726, %v1680, %v1725
        %vm1728 = vcmask 1043459
        %v1729 = vsel %vm1728, %v1687, %v1727
        %vm1730 = vcmask 1044484
        %v1731 = vsel %vm1730, %v1694, %v1729
        %vm1732 = vcmask 1045509
        %v1733 = vsel %vm1732, %v1701, %v1731
        %vm1734 = vcmask 1046534
        %v1735 = vsel %vm1734, %v1708, %v1733
        %vm1736 = vcmask 1047559
        %v1737 = vsel %vm1736, %v1715, %v1735
        %v1738 = vsel %vm1659, %v1737, 0
        %vm1740 = vcmask 1041408
        %v1742 = vsel %vm1740, %v790, 0
        %1744 = vmatprep.subr.mxu0 0.0
        %1745 = vmatpush1.msra.mxu0 %v789
        %1746 = vmatprep.subr.mxu0 0.0
        %1747 = vmatpush1.msra.mxu0 %v1742
        %1748 = vmatprep.subr.mxu0 0.0
        %1749 = vmatpush1.msra.mxu0 0.0
        %1750 = vmatprep.subr.mxu0 0.0
        %1751 = vmatpush1.msra.mxu0 0.0
        %1752 = vmatprep.subr.mxu0 0.0
        %1753 = vmatpush1.msra.mxu0 0.0
        %1754 = vmatprep.subr.mxu0 0.0
        %1755 = vmatpush1.msra.mxu0 0.0
        %1756 = vmatprep.subr.mxu0 0.0
        %1757 = vmatpush1.msra.mxu0 0.0
        %1758 = vmatprep.subr.mxu0 0.0
        %1759 = vmatpush1.msra.mxu0 0.0
        %1760 = vmatprep.subr.mxu0 0.0
        %1761 = vmatpush1.msra.mxu0 0.0
        %1762 = vmatprep.subr.mxu0 0.0
        %1763 = vmatpush1.msra.mxu0 0.0
        %1764 = vmatprep.subr.mxu0 0.0
        %1765 = vmatpush1.msra.mxu0 0.0
        %1766 = vmatprep.subr.mxu0 0.0
        %1767 = vmatpush1.msra.mxu0 0.0
        %1768 = vmatprep.subr.mxu0 0.0
        %1769 = vmatpush1.msra.mxu0 0.0
        %1770 = vmatprep.subr.mxu0 0.0
        %1771 = vmatpush1.msra.mxu0 0.0
        %1772 = vmatprep.subr.mxu0 0.0
        %1773 = vmatpush1.msra.mxu0 0.0
        %1774 = vmatprep.subr.mxu0 0.0
        %1775 = vmatpush1.msra.mxu0 0.0
        %1776 = vmatprep.subr.mxu0 0.0
        %1777 = vmatpush1.msra.mxu0 0.0
        %1778 = vmatprep.subr.mxu0 0.0
        %1779 = vmatpush1.msra.mxu0 0.0
        %1780 = vmatprep.subr.mxu0 0.0
        %1781 = vmatpush1.msra.mxu0 0.0
        %1782 = vmatprep.subr.mxu0 0.0
        %1783 = vmatpush1.msra.mxu0 0.0
        %1784 = vmatprep.subr.mxu0 0.0
        %1785 = vmatpush1.msra.mxu0 0.0
        %1786 = vmatprep.subr.mxu0 0.0
        %1787 = vmatpush1.msra.mxu0 0.0
        %1788 = vmatprep.subr.mxu0 0.0
        %1789 = vmatpush1.msra.mxu0 0.0
        %1790 = vmatprep.subr.mxu0 0.0
        %1791 = vmatpush1.msra.mxu0 0.0
        %1792 = vmatprep.subr.mxu0 0.0
        %1793 = vmatpush1.msra.mxu0 0.0
        %1794 = vmatprep.subr.mxu0 0.0
        %1795 = vmatpush1.msra.mxu0 0.0
        %1796 = vmatprep.subr.mxu0 0.0
        %1797 = vmatpush1.msra.mxu0 0.0
        %1798 = vmatprep.subr.mxu0 0.0
        %1799 = vmatpush1.msra.mxu0 0.0
        %1800 = vmatprep.subr.mxu0 0.0
        %1801 = vmatpush1.msra.mxu0 0.0
        %1802 = vmatprep.subr.mxu0 0.0
        %1803 = vmatpush1.msra.mxu0 0.0
        %1804 = vmatprep.subr.mxu0 0.0
        %1805 = vmatpush1.msra.mxu0 0.0
        %1806 = vmatprep.subr.mxu0 0.0
        %1807 = vmatpush1.msra.mxu0 0.0
        %1808 = vmatprep.mubr.f32.mxu0 0.0
        %1809 = vmatmul.mubr.f32.gmra.mrb[0].mxu0 %v1738
        %v1810 = vpop.f32.mrb[0].mxu0
        %v1811 = vadd.f32 0.0, %v1810
        %v1812 = vpop.f32.mrb[0].mxu0
        %1813 = vdwg.mxu0
        %v1815 = vlaneseq
        %v1816 = vshrl.u32 %v1815, 7
        %v1817 = vsub.s32 0, %v1816
        %v1818 = vrot.slane %v791, %v1817
        %v1820 = vmul.f32 %v1594, %v1818
        %v1821 = vadd.f32 %v1811, %v1820
        %v1822 = vmul.f32 %v754, %v1594
        %v1823 = vmul.f32 %v783, %v1594
        %v1824 = vmul.f32 %v1821, 6.2831855
        %v1825 = vand.u32 2147483647, %v1824
        %vm1826 = vcmp.le.f32.partialorder %v1825, 0.7853982
        %vm1827 = vcmp.lt.s32.totalorder %v1824, 0
        %v1828 = vand.u32 %v1824, 2139095040
        %v1829 = vshrl.u32 %v1828, 23
        %v1830 = vsub.s32 %v1829, 127
        %v1831 = vand.u32 2147483647, %v1824
        %v1832 = vand.u32 %v1831, 8388607
        %v1833 = vor.u32 %v1832, 8388608
        %v1834 = vsub.s32 0, %v1833
        %v1835 = vadd.s32 %v1830, 1
        %vm1836 = vcmp.gt.s32.totalorder %v1835, 0
        %v1837 = vsel %vm1836, %v1835, 0
        %v1838 = vshrl.u32 %v1837, 5
        %v1839 = vand.u32 %v1837, 31
        %v1840 = vsub.s32 32, %v1839
        %v1841 = vshrl.u32 683565275, %v1840
        %v1842 = vshll.u32 683565275, %v1839
        %v1843 = vshrl.u32 2475754826, %v1840
        %v1844 = vor.u32 %v1842, %v1843
        %v1845 = vshll.u32 2475754826, %v1839
        %v1846 = vshrl.u32 2131351028, %v1840
        %v1847 = vor.u32 %v1845, %v1846
        %v1848 = vshll.u32 2131351028, %v1839
        %v1849 = vshrl.u32 2102212464, %v1840
        %v1850 = vor.u32 %v1848, %v1849
        %v1851 = vshll.u32 2102212464, %v1839
        %v1852 = vshrl.u32 920167782, %v1840
        %v1853 = vor.u32 %v1851, %v1852
        %v1854 = vshll.u32 920167782, %v1839
        %v1855 = vshrl.u32 1326507024, %v1840
        %v1856 = vor.u32 %v1854, %v1855
        %vm1857 = vcmp.lt.s32.totalorder %v1838, 1
        %vm1858 = vcmp.lt.s32.totalorder %v1838, 2
        %vm1859 = vcmp.lt.s32.totalorder %v1838, 3
        %vm1860 = vcmp.lt.s32.totalorder %v1838, 4
        %v1861 = vsel %vm1857, %v1841, %v1844
        %v1862 = vsel %vm1860, %v1850, 2102212464
        %v1863 = vsel %vm1859, %v1847, %v1862
        %v1864 = vsel %vm1858, %v1861, %v1863
        %v1865 = vsel %vm1857, %v1844, %v1847
        %v1866 = vsel %vm1860, %v1853, 920167782
        %v1867 = vsel %vm1859, %v1850, %v1866
        %v1868 = vsel %vm1858, %v1865, %v1867
        %v1869 = vsel %vm1857, %v1847, %v1850
        %v1870 = vsel %vm1860, %v1856, 1326507024
        %v1871 = vsel %vm1859, %v1853, %v1870
        %v1872 = vsel %vm1858, %v1869, %v1871
        %v1873 = vshll.u32 %v1833, 8
        %v1874 = vmul.u32.u64.compose %v1873, %v1872
        %v1875 = vextract.low.u32 %v1874
        %v1876 = vextract.high.u32 %v1874
        %v1877 = vmul.u32.u64.compose %v1873, %v1868
        %v1878 = vextract.low.u32 %v1877
        %v1879 = vextract.high.u32 %v1877
        %v1880 = vmul.u32 %v1873, %v1864
        %v1881 = vadd.s32 %v1876, %v1878
        %vm1882 = vc.u32 %v1876, %v1878
        %v1883 = vadd.s32 %v1879, 1
        %v1884 = vsel %vm1882, %v1883, %v1879
        %v1885 = vadd.s32 %v1880, %v1884
        %v1886 = vadd.s32 %v1885, 536870912
        %v1887 = vshrl.u32 %v1886, 30
        %v1888 = vshll.u32 %v1887, 30
        %v1889 = vsub.s32 %v1885, %v1888
        %vm1890 = vcmp.lt.s32.totalorder %v1889, 0
        %v1891 = vsub.s32 0, %v1889
        %v1892 = vsel %vm1890, %v1891, %v1889
        %v1893 = vclz %v1892
        %v1894 = vsub.s32 %v1893, 2
        %vm1895 = vcmp.gt.s32.totalorder 0, %v1894
        %v1896 = vsel %vm1895, 0, %v1894
        %v1897 = vsub.s32 32, %v1896
        %v1898 = vshll.u32 %v1889, %v1896
        %v1899 = vshrl.u32 %v1881, %v1897
        %v1900 = vor.u32 %v1898, %v1899
        %v1901 = vsub.s32 4294967266, %v1896
        %v1902 = vadd.s32 %v1901, 127
        %v1903 = vshll.u32 %v1902, 23
        %v1904 = vor.u32 4788187, %v1903
        %v1905 = vand.u32 2147483647, %v1904
        %v1907 = vcvt.s32.f32 %v1900
        %v1908 = vmul.f32 %v1907, %v1905
        %v1909 = vxor.u32 %v1908, 2147483648
        %v1910 = vsel %vm1827, %v1909, %v1908
        %v1911 = vsub.s32 4, %v1887
        %v1912 = vsel %vm1827, %v1911, %v1887
        %v1913 = vsel %vm1826, %v1824, %v1910
        %v1914 = vsel %vm1826, 0, %v1912
        %v1915 = vcosq.f32.pop %v1913
        %v1916 = vsinq.f32.pop %v1913
        %vm1917 = vweird.f32 %v1824
        %v1918 = vand.u32 %v1914, 3
        %vm1919 = vcmp.lt.s32.totalorder %v1918, 2
        %vm1920 = vcmp.eq.s32.totalorder %v1918, 0
        %v1921 = vxor.u32 %v1916, 2147483648
        %v1922 = vsel %vm1920, %v1915, %v1921
        %vm1923 = vcmp.eq.s32.totalorder %v1918, 2
        %v1924 = vxor.u32 %v1915, 2147483648
        %v1925 = vsel %vm1923, %v1924, %v1916
        %v1926 = vsel %vm1919, %v1922, %v1925
        %v1927 = vsel %vm1917, nan, %v1926
        %v1928 = vand.u32 2147483647, %v1824
        %vm1929 = vcmp.le.f32.partialorder %v1928, 0.7853982
        %vm1930 = vcmp.lt.s32.totalorder %v1824, 0
        %v1931 = vand.u32 %v1824, 2139095040
        %v1932 = vshrl.u32 %v1931, 23
        %v1933 = vsub.s32 %v1932, 127
        %v1934 = vand.u32 2147483647, %v1824
        %v1935 = vand.u32 %v1934, 8388607
        %v1936 = vor.u32 %v1935, 8388608
        %v1937 = vsub.s32 0, %v1936
        %v1938 = vadd.s32 %v1933, 1
        %vm1939 = vcmp.gt.s32.totalorder %v1938, 0
        %v1940 = vsel %vm1939, %v1938, 0
        %v1941 = vshrl.u32 %v1940, 5
        %v1942 = vand.u32 %v1940, 31
        %v1943 = vsub.s32 32, %v1942
        %v1944 = vshrl.u32 683565275, %v1943
        %v1945 = vshll.u32 683565275, %v1942
        %v1946 = vshrl.u32 2475754826, %v1943
        %v1947 = vor.u32 %v1945, %v1946
        %v1948 = vshll.u32 2475754826, %v1942
        %v1949 = vshrl.u32 2131351028, %v1943
        %v1950 = vor.u32 %v1948, %v1949
        %v1951 = vshll.u32 2131351028, %v1942
        %v1952 = vshrl.u32 2102212464, %v1943
        %v1953 = vor.u32 %v1951, %v1952
        %v1954 = vshll.u32 2102212464, %v1942
        %v1955 = vshrl.u32 920167782, %v1943
        %v1956 = vor.u32 %v1954, %v1955
        %v1957 = vshll.u32 920167782, %v1942
        %v1958 = vshrl.u32 1326507024, %v1943
        %v1959 = vor.u32 %v1957, %v1958
        %vm1960 = vcmp.lt.s32.totalorder %v1941, 1
        %vm1961 = vcmp.lt.s32.totalorder %v1941, 2
        %vm1962 = vcmp.lt.s32.totalorder %v1941, 3
        %vm1963 = vcmp.lt.s32.totalorder %v1941, 4
        %v1964 = vsel %vm1960, %v1944, %v1947
        %v1965 = vsel %vm1963, %v1953, 2102212464
        %v1966 = vsel %vm1962, %v1950, %v1965
        %v1967 = vsel %vm1961, %v1964, %v1966
        %v1968 = vsel %vm1960, %v1947, %v1950
        %v1969 = vsel %vm1963, %v1956, 920167782
        %v1970 = vsel %vm1962, %v1953, %v1969
        %v1971 = vsel %vm1961, %v1968, %v1970
        %v1972 = vsel %vm1960, %v1950, %v1953
        %v1973 = vsel %vm1963, %v1959, 1326507024
        %v1974 = vsel %vm1962, %v1956, %v1973
        %v1975 = vsel %vm1961, %v1972, %v1974
        %v1976 = vshll.u32 %v1936, 8
        %v1977 = vmul.u32.u64.compose %v1976, %v1975
        %v1978 = vextract.low.u32 %v1977
        %v1979 = vextract.high.u32 %v1977
        %v1980 = vmul.u32.u64.compose %v1976, %v1971
        %v1981 = vextract.low.u32 %v1980
        %v1982 = vextract.high.u32 %v1980
        %v1983 = vmul.u32 %v1976, %v1967
        %v1984 = vadd.s32 %v1979, %v1981
        %vm1985 = vc.u32 %v1979, %v1981
        %v1986 = vadd.s32 %v1982, 1
        %v1987 = vsel %vm1985, %v1986, %v1982
        %v1988 = vadd.s32 %v1983, %v1987
        %v1989 = vadd.s32 %v1988, 536870912
        %v1990 = vshrl.u32 %v1989, 30
        %v1991 = vshll.u32 %v1990, 30
        %v1992 = vsub.s32 %v1988, %v1991
        %vm1993 = vcmp.lt.s32.totalorder %v1992, 0
        %v1994 = vsub.s32 0, %v1992
        %v1995 = vsel %vm1993, %v1994, %v1992
        %v1996 = vclz %v1995
        %v1997 = vsub.s32 %v1996, 2
        %vm1998 = vcmp.gt.s32.totalorder 0, %v1997
        %v1999 = vsel %vm1998, 0, %v1997
        %v2000 = vsub.s32 32, %v1999
        %v2001 = vshll.u32 %v1992, %v1999
        %v2002 = vshrl.u32 %v1984, %v2000
        %v2003 = vor.u32 %v2001, %v2002
        %v2004 = vsub.s32 4294967266, %v1999
        %v2005 = vadd.s32 %v2004, 127
        %v2006 = vshll.u32 %v2005, 23
        %v2007 = vor.u32 4788187, %v2006
        %v2008 = vand.u32 2147483647, %v2007
        %v2010 = vcvt.s32.f32 %v2003
        %v2011 = vmul.f32 %v2010, %v2008
        %v2012 = vxor.u32 %v2011, 2147483648
        %v2013 = vsel %vm1930, %v2012, %v2011
        %v2014 = vsub.s32 4, %v1990
        %v2015 = vsel %vm1930, %v2014, %v1990
        %v2016 = vsel %vm1929, %v1824, %v2013
        %v2017 = vsel %vm1929, 0, %v2015
        %v2018 = vcosq.f32.pop %v2016
        %v2019 = vsinq.f32.pop %v2016
        %vm2020 = vweird.f32 %v1824
        %v2021 = vadd.s32 %v2017, 3
        %v2022 = vand.u32 %v2021, 3
        %vm2023 = vcmp.lt.s32.totalorder %v2022, 2
        %vm2024 = vcmp.eq.s32.totalorder %v2022, 0
        %v2025 = vxor.u32 %v2019, 2147483648
        %v2026 = vsel %vm2024, %v2018, %v2025
        %vm2027 = vcmp.eq.s32.totalorder %v2022, 2
        %v2028 = vxor.u32 %v2018, 2147483648
        %v2029 = vsel %vm2027, %v2028, %v2019
        %v2030 = vsel %vm2023, %v2026, %v2029
        %v2031 = vsel %vm2020, nan, %v2030
        %2033 = vrot.lane.b32.xlu0 %v1927, 118
        %v2034 = vpop.permute.xlu0 %2033
        %v2036 = vmul.f32 %v1823, %v2034
        %2038 = vrot.lane.b32.xlu0 %v2031, 119
        %v2039 = vpop.permute.xlu0 %2038
        %v2041 = vmul.f32 %v1823, %v2039
        %2043 = vrot.lane.b32.xlu0 %v2041, 127
        %v2044 = vpop.permute.xlu0 %2043
        %v2046 = vsub.f32 %v2036, %v2044
        %2047 = vrot.lane.b32.xlu0 %v2031, 118
        %v2048 = vpop.permute.xlu0 %2047
        %v2050 = vmul.f32 %v1823, %v2048
        %2051 = vrot.lane.b32.xlu0 %v1927, 119
        %v2052 = vpop.permute.xlu0 %2051
        %v2054 = vmul.f32 %v1823, %v2052
        %2056 = vrot.lane.b32.xlu0 %v2054, 127
        %v2057 = vpop.permute.xlu0 %2056
        %v2059 = vadd.f32 %v2050, %v2057
        %2061 = vrot.lane.b32.xlu0 %v2059, 1
        %v2062 = vpop.permute.xlu0 %2061
        %v2064 = vsel %vm782, %v2046, %v2062
        %v2065 = vld [vmem:[%s8] sm:$0xff]
        %v2066 = vld [vmem:[%s8 + $0x8] sm:$0x3]
        %v2067 = vld [vmem:[%s9] sm:$0xff]
        %v2068 = vld [vmem:[%s9 + $0x8] sm:$0x3]
        %v2069 = vld [vmem:[#allocation14] sm:$0x1]
        %v2070 = vld [vmem:[%s11] sm:$0x1]
        %v2071 = vld [vmem:[%s12] sm:$0x1]
        %v2072 = vld [vmem:[%s13] sm:$0xff]
        %v2073 = vld [vmem:[%s13 + $0x8] sm:$0x3]
        %v2074 = vld [vmem:[%s14] sm:$0x1]
        %v2075 = vmul.f32 %v2064, %v2064
        %2077 = vrot.lane.b32.xlu0 %v2075, 127
        %v2078 = vpop.permute.xlu0 %2077
        %v2080 = vadd.f32 %v2075, %v2078
        %v2081 = vsub.f32 0.0, %v2064
        %2083 = vrot.lane.b32.xlu0 %v2064, 127
        %v2084 = vpop.permute.xlu0 %2083
        %2087 = vrot.lane.b32.xlu0 %v2081, 1
        %v2088 = vpop.permute.xlu0 %2087
        %v2090 = vsel %vm782, %v2084, %v2088
        %v2091 = vsel %vm808, %v2064, 0
        %2093 = vmatprep.subr.mxu0 0.0
        %2094 = vmatpush1.xpose.msra.mxu0 %v2091
        %2095 = vmatprep.subr.mxu0 0.0
        %2096 = vmatpush1.xpose.msra.mxu0 0.0
        %2097 = vmatprep.subr.mxu0 0.0
        %2098 = vmatpush1.xpose.msra.mxu0 0.0
        %2099 = vmatprep.subr.mxu0 0.0
        %2100 = vmatpush1.xpose.msra.mxu0 0.0
        %2101 = vmatprep.subr.mxu0 0.0
        %2102 = vmatpush1.xpose.msra.mxu0 0.0
        %2103 = vmatprep.subr.mxu0 0.0
        %2104 = vmatpush1.xpose.msra.mxu0 0.0
        %2105 = vmatprep.subr.mxu0 0.0
        %2106 = vmatpush1.xpose.msra.mxu0 0.0
        %2107 = vmatprep.subr.mxu0 0.0
        %2108 = vmatpush1.xpose.msra.mxu0 0.0
        %2109 = vmatprep.subr.mxu0 0.0
        %2110 = vmatpush1.xpose.msra.mxu0 0.0
        %2111 = vmatprep.subr.mxu0 0.0
        %2112 = vmatpush1.xpose.msra.mxu0 0.0
        %2113 = vmatprep.subr.mxu0 0.0
        %2114 = vmatpush1.xpose.msra.mxu0 0.0
        %2115 = vmatprep.subr.mxu0 0.0
        %2116 = vmatpush1.xpose.msra.mxu0 0.0
        %2117 = vmatprep.subr.mxu0 0.0
        %2118 = vmatpush1.xpose.msra.mxu0 0.0
        %2119 = vmatprep.subr.mxu0 0.0
        %2120 = vmatpush1.xpose.msra.mxu0 0.0
        %2121 = vmatprep.subr.mxu0 0.0
        %2122 = vmatpush1.xpose.msra.mxu0 0.0
        %2123 = vmatprep.subr.mxu0 0.0
        %2124 = vmatpush1.xpose.msra.mxu0 0.0
        %2125 = vmatprep.subr.mxu0 0.0
        %2126 = vmatpush1.xpose.msra.mxu0 0.0
        %2127 = vmatprep.subr.mxu0 0.0
        %2128 = vmatpush1.xpose.msra.mxu0 0.0
        %2129 = vmatprep.subr.mxu0 0.0
        %2130 = vmatpush1.xpose.msra.mxu0 0.0
        %2131 = vmatprep.subr.mxu0 0.0
        %2132 = vmatpush1.xpose.msra.mxu0 0.0
        %2133 = vmatprep.subr.mxu0 0.0
        %2134 = vmatpush1.xpose.msra.mxu0 0.0
        %2135 = vmatprep.subr.mxu0 0.0
        %2136 = vmatpush1.xpose.msra.mxu0 0.0
        %2137 = vmatprep.subr.mxu0 0.0
        %2138 = vmatpush1.xpose.msra.mxu0 0.0
        %2139 = vmatprep.subr.mxu0 0.0
        %2140 = vmatpush1.xpose.msra.mxu0 0.0
        %2141 = vmatprep.subr.mxu0 0.0
        %2142 = vmatpush1.xpose.msra.mxu0 0.0
        %2143 = vmatprep.subr.mxu0 0.0
        %2144 = vmatpush1.xpose.msra.mxu0 0.0
        %2145 = vmatprep.subr.mxu0 0.0
        %2146 = vmatpush1.xpose.msra.mxu0 0.0
        %2147 = vmatprep.subr.mxu0 0.0
        %2148 = vmatpush1.xpose.msra.mxu0 0.0
        %2149 = vmatprep.subr.mxu0 0.0
        %2150 = vmatpush1.xpose.msra.mxu0 0.0
        %2151 = vmatprep.subr.mxu0 0.0
        %2152 = vmatpush1.xpose.msra.mxu0 0.0
        %2153 = vmatprep.subr.mxu0 0.0
        %2154 = vmatpush1.xpose.msra.mxu0 0.0
        %2155 = vmatprep.subr.mxu0 0.0
        %2156 = vmatpush1.xpose.msra.mxu0 0.0
        %2157 = vmatprep.mubr.f32.mxu0 0.0
        %2158 = vmatmul.mubr.f32.gmra.mrb[0].mxu0 %v2091
        %v2159 = vpop.f32.mrb[0].mxu0
        %v2160 = vadd.f32 0.0, %v2159
        %v2161 = vpop.f32.mrb[0].mxu0
        %2162 = vdwg.mxu0
        %v2164 = vsel %vm808, %v2090, 0
        %2166 = vmatprep.subr.mxu0 0.0
        %2167 = vmatpush1.xpose.msra.mxu0 %v2091
        %2168 = vmatprep.subr.mxu0 0.0
        %2169 = vmatpush1.xpose.msra.mxu0 0.0
        %2170 = vmatprep.subr.mxu0 0.0
        %2171 = vmatpush1.xpose.msra.mxu0 0.0
        %2172 = vmatprep.subr.mxu0 0.0
        %2173 = vmatpush1.xpose.msra.mxu0 0.0
        %2174 = vmatprep.subr.mxu0 0.0
        %2175 = vmatpush1.xpose.msra.mxu0 0.0
        %2176 = vmatprep.subr.mxu0 0.0
        %2177 = vmatpush1.xpose.msra.mxu0 0.0
        %2178 = vmatprep.subr.mxu0 0.0
        %2179 = vmatpush1.xpose.msra.mxu0 0.0
        %2180 = vmatprep.subr.mxu0 0.0
        %2181 = vmatpush1.xpose.msra.mxu0 0.0
        %2182 = vmatprep.subr.mxu0 0.0
        %2183 = vmatpush1.xpose.msra.mxu0 0.0
        %2184 = vmatprep.subr.mxu0 0.0
        %2185 = vmatpush1.xpose.msra.mxu0 0.0
        %2186 = vmatprep.subr.mxu0 0.0
        %2187 = vmatpush1.xpose.msra.mxu0 0.0
        %2188 = vmatprep.subr.mxu0 0.0
        %2189 = vmatpush1.xpose.msra.mxu0 0.0
        %2190 = vmatprep.subr.mxu0 0.0
        %2191 = vmatpush1.xpose.msra.mxu0 0.0
        %2192 = vmatprep.subr.mxu0 0.0
        %2193 = vmatpush1.xpose.msra.mxu0 0.0
        %2194 = vmatprep.subr.mxu0 0.0
        %2195 = vmatpush1.xpose.msra.mxu0 0.0
        %2196 = vmatprep.subr.mxu0 0.0
        %2197 = vmatpush1.xpose.msra.mxu0 0.0
        %2198 = vmatprep.subr.mxu0 0.0
        %2199 = vmatpush1.xpose.msra.mxu0 0.0
        %2200 = vmatprep.subr.mxu0 0.0
        %2201 = vmatpush1.xpose.msra.mxu0 0.0
        %2202 = vmatprep.subr.mxu0 0.0
        %2203 = vmatpush1.xpose.msra.mxu0 0.0
        %2204 = vmatprep.subr.mxu0 0.0
        %2205 = vmatpush1.xpose.msra.mxu0 0.0
        %2206 = vmatprep.subr.mxu0 0.0
        %2207 = vmatpush1.xpose.msra.mxu0 0.0
        %2208 = vmatprep.subr.mxu0 0.0
        %2209 = vmatpush1.xpose.msra.mxu0 0.0
        %2210 = vmatprep.subr.mxu0 0.0
        %2211 = vmatpush1.xpose.msra.mxu0 0.0
        %2212 = vmatprep.subr.mxu0 0.0
        %2213 = vmatpush1.xpose.msra.mxu0 0.0
        %2214 = vmatprep.subr.mxu0 0.0
        %2215 = vmatpush1.xpose.msra.mxu0 0.0
        %2216 = vmatprep.subr.mxu0 0.0
        %2217 = vmatpush1.xpose.msra.mxu0 0.0
        %2218 = vmatprep.subr.mxu0 0.0
        %2219 = vmatpush1.xpose.msra.mxu0 0.0
        %2220 = vmatprep.subr.mxu0 0.0
        %2221 = vmatpush1.xpose.msra.mxu0 0.0
        %2222 = vmatprep.subr.mxu0 0.0
        %2223 = vmatpush1.xpose.msra.mxu0 0.0
        %2224 = vmatprep.subr.mxu0 0.0
        %2225 = vmatpush1.xpose.msra.mxu0 0.0
        %2226 = vmatprep.subr.mxu0 0.0
        %2227 = vmatpush1.xpose.msra.mxu0 0.0
        %2228 = vmatprep.subr.mxu0 0.0
        %2229 = vmatpush1.xpose.msra.mxu0 0.0
        %2230 = vmatprep.mubr.f32.mxu0 0.0
        %2231 = vmatmul.mubr.f32.gmra.mrb[0].mxu0 %v2164
        %v2232 = vpop.f32.mrb[0].mxu0
        %v2233 = vadd.f32 0.0, %v2232
        %v2234 = vpop.f32.mrb[0].mxu0
        %2235 = vdwg.mxu0
        %v2237 = vsel %vm782, %v2080, 0
        %2239 = vmatprep.subr.mxu0 0.0
        %2240 = vmatpush1.xpose.msra.mxu0 %v2237
        %2241 = vmatprep.subr.mxu0 0.0
        %2242 = vmatpush1.xpose.msra.mxu0 0.0
        %2243 = vmatprep.subr.mxu0 0.0
        %2244 = vmatpush1.xpose.msra.mxu0 0.0
        %2245 = vmatprep.subr.mxu0 0.0
        %2246 = vmatpush1.xpose.msra.mxu0 0.0
        %2247 = vmatprep.subr.mxu0 0.0
        %2248 = vmatpush1.xpose.msra.mxu0 0.0
        %2249 = vmatprep.subr.mxu0 0.0
        %2250 = vmatpush1.xpose.msra.mxu0 0.0
        %2251 = vmatprep.subr.mxu0 0.0
        %2252 = vmatpush1.xpose.msra.mxu0 0.0
        %2253 = vmatprep.subr.mxu0 0.0
        %2254 = vmatpush1.xpose.msra.mxu0 0.0
        %2255 = vmatprep.subr.mxu0 0.0
        %2256 = vmatpush1.xpose.msra.mxu0 0.0
        %2257 = vmatprep.subr.mxu0 0.0
        %2258 = vmatpush1.xpose.msra.mxu0 0.0
        %2259 = vmatprep.subr.mxu0 0.0
        %2260 = vmatpush1.xpose.msra.mxu0 0.0
        %2261 = vmatprep.subr.mxu0 0.0
        %2262 = vmatpush1.xpose.msra.mxu0 0.0
        %2263 = vmatprep.subr.mxu0 0.0
        %2264 = vmatpush1.xpose.msra.mxu0 0.0
        %2265 = vmatprep.subr.mxu0 0.0
        %2266 = vmatpush1.xpose.msra.mxu0 0.0
        %2267 = vmatprep.subr.mxu0 0.0
        %2268 = vmatpush1.xpose.msra.mxu0 0.0
        %2269 = vmatprep.subr.mxu0 0.0
        %2270 = vmatpush1.xpose.msra.mxu0 0.0
        %2271 = vmatprep.subr.mxu0 0.0
        %2272 = vmatpush1.xpose.msra.mxu0 0.0
        %2273 = vmatprep.subr.mxu0 0.0
        %2274 = vmatpush1.xpose.msra.mxu0 0.0
        %2275 = vmatprep.subr.mxu0 0.0
        %2276 = vmatpush1.xpose.msra.mxu0 0.0
        %2277 = vmatprep.subr.mxu0 0.0
        %2278 = vmatpush1.xpose.msra.mxu0 0.0
        %2279 = vmatprep.subr.mxu0 0.0
        %2280 = vmatpush1.xpose.msra.mxu0 0.0
        %2281 = vmatprep.subr.mxu0 0.0
        %2282 = vmatpush1.xpose.msra.mxu0 0.0
        %2283 = vmatprep.subr.mxu0 0.0
        %2284 = vmatpush1.xpose.msra.mxu0 0.0
        %2285 = vmatprep.subr.mxu0 0.0
        %2286 = vmatpush1.xpose.msra.mxu0 0.0
        %2287 = vmatprep.subr.mxu0 0.0
        %2288 = vmatpush1.xpose.msra.mxu0 0.0
        %2289 = vmatprep.subr.mxu0 0.0
        %2290 = vmatpush1.xpose.msra.mxu0 0.0
        %2291 = vmatprep.subr.mxu0 0.0
        %2292 = vmatpush1.xpose.msra.mxu0 0.0
        %2293 = vmatprep.subr.mxu0 0.0
        %2294 = vmatpush1.xpose.msra.mxu0 0.0
        %2295 = vmatprep.subr.mxu0 0.0
        %2296 = vmatpush1.xpose.msra.mxu0 0.0
        %2297 = vmatprep.subr.mxu0 0.0
        %2298 = vmatpush1.xpose.msra.mxu0 0.0
        %2299 = vmatprep.subr.mxu0 0.0
        %2300 = vmatpush1.xpose.msra.mxu0 0.0
        %2301 = vmatprep.subr.mxu0 0.0
        %2302 = vmatpush1.xpose.msra.mxu0 0.0
        %2303 = vmatprep.mubr.f32.mxu0 0.0
        %2304 = vmatmul.mubr.f32.gmra.mrb[0].mxu0 %v955
        %v2305 = vpop.f32.mrb[0].mxu0
        %v2306 = vadd.f32 0.0, %v2305
        %v2307 = vpop.f32.mrb[0].mxu0
        %2308 = vdwg.mxu0
        %2309 = vset.pattern.permute.xlu0 0
        %2310 = vperm.xlu0 %2309, %v2080
        %v2311 = vpop.permute.xlu0 %2310
        %v2313 = vadd.f32 %v2311, %v2306
        %v2314 = vmul.f32 %v2160, 2.0
        %v2315 = vsub.f32 %v2313, %v2314
        %vm2316 = vcmp.le.f32.partialorder %v2315, 0.16
        %v2317 = vsel %vm2316, 1.0, 0.0
        %v2318 = vmul.f32 %v2317, %v1113
        %v2319 = vmul.f32 %v2318, %v1099
        %v2320 = vmul.f32 %v2311, %v2306
        %vm2321 = vcmp.gt.f32.partialorder %v2320, 0.0
        %v2322 = vsel %vm2321, %v2320, 1.0
        %v2323 = vrsqrt.pop %v2322
        %v2324 = vsel %vm2321, %v2323, 0.0
        %v2325 = vmul.f32 %v2160, %v2324
        %v2326 = vmul.f32 %v2233, %v2324
        %v2328 = vsel %vm1659, %v1821, 0
        %v2331 = vsel %vm1740, %v2066, 0
        %2333 = vmatprep.subr.mxu0 0.0
        %2334 = vmatpush1.msra.mxu0 %v2065
        %2335 = vmatprep.subr.mxu0 0.0
        %2336 = vmatpush1.msra.mxu0 %v2331
        %2337 = vmatprep.subr.mxu0 0.0
        %2338 = vmatpush1.msra.mxu0 0.0
        %2339 = vmatprep.subr.mxu0 0.0
        %2340 = vmatpush1.msra.mxu0 0.0
        %2341 = vmatprep.subr.mxu0 0.0
        %2342 = vmatpush1.msra.mxu0 0.0
        %2343 = vmatprep.subr.mxu0 0.0
        %2344 = vmatpush1.msra.mxu0 0.0
        %2345 = vmatprep.subr.mxu0 0.0
        %2346 = vmatpush1.msra.mxu0 0.0
        %2347 = vmatprep.subr.mxu0 0.0
        %2348 = vmatpush1.msra.mxu0 0.0
        %2349 = vmatprep.subr.mxu0 0.0
        %2350 = vmatpush1.msra.mxu0 0.0
        %2351 = vmatprep.subr.mxu0 0.0
        %2352 = vmatpush1.msra.mxu0 0.0
        %2353 = vmatprep.subr.mxu0 0.0
        %2354 = vmatpush1.msra.mxu0 0.0
        %2355 = vmatprep.subr.mxu0 0.0
        %2356 = vmatpush1.msra.mxu0 0.0
        %2357 = vmatprep.subr.mxu0 0.0
        %2358 = vmatpush1.msra.mxu0 0.0
        %2359 = vmatprep.subr.mxu0 0.0
        %2360 = vmatpush1.msra.mxu0 0.0
        %2361 = vmatprep.subr.mxu0 0.0
        %2362 = vmatpush1.msra.mxu0 0.0
        %2363 = vmatprep.subr.mxu0 0.0
        %2364 = vmatpush1.msra.mxu0 0.0
        %2365 = vmatprep.subr.mxu0 0.0
        %2366 = vmatpush1.msra.mxu0 0.0
        %2367 = vmatprep.subr.mxu0 0.0
        %2368 = vmatpush1.msra.mxu0 0.0
        %2369 = vmatprep.subr.mxu0 0.0
        %2370 = vmatpush1.msra.mxu0 0.0
        %2371 = vmatprep.subr.mxu0 0.0
        %2372 = vmatpush1.msra.mxu0 0.0
        %2373 = vmatprep.subr.mxu0 0.0
        %2374 = vmatpush1.msra.mxu0 0.0
        %2375 = vmatprep.subr.mxu0 0.0
        %2376 = vmatpush1.msra.mxu0 0.0
        %2377 = vmatprep.subr.mxu0 0.0
        %2378 = vmatpush1.msra.mxu0 0.0
        %2379 = vmatprep.subr.mxu0 0.0
        %2380 = vmatpush1.msra.mxu0 0.0
        %2381 = vmatprep.subr.mxu0 0.0
        %2382 = vmatpush1.msra.mxu0 0.0
        %2383 = vmatprep.subr.mxu0 0.0
        %2384 = vmatpush1.msra.mxu0 0.0
        %2385 = vmatprep.subr.mxu0 0.0
        %2386 = vmatpush1.msra.mxu0 0.0
        %2387 = vmatprep.subr.mxu0 0.0
        %2388 = vmatpush1.msra.mxu0 0.0
        %2389 = vmatprep.subr.mxu0 0.0
        %2390 = vmatpush1.msra.mxu0 0.0
        %2391 = vmatprep.subr.mxu0 0.0
        %2392 = vmatpush1.msra.mxu0 0.0
        %2393 = vmatprep.subr.mxu0 0.0
        %2394 = vmatpush1.msra.mxu0 0.0
        %2395 = vmatprep.subr.mxu0 0.0
        %2396 = vmatpush1.msra.mxu0 0.0
        %2397 = vmatprep.mubr.f32.mxu0 0.0
        %2398 = vmatmul.mubr.f32.gmra.mrb[0].mxu0 %v2328
        %v2399 = vpop.f32.mrb[0].mxu0
        %v2400 = vadd.f32 0.0, %v2399
        %v2401 = vpop.f32.mrb[0].mxu0
        %2402 = vdwg.mxu0
        %v2404 = vsel %vm1740, %v2068, 0
        %2406 = vmatprep.subr.mxu0 0.0
        %2407 = vmatpush1.msra.mxu0 %v2067
        %2408 = vmatprep.subr.mxu0 0.0
        %2409 = vmatpush1.msra.mxu0 %v2404
        %2410 = vmatprep.subr.mxu0 0.0
        %2411 = vmatpush1.msra.mxu0 0.0
        %2412 = vmatprep.subr.mxu0 0.0
        %2413 = vmatpush1.msra.mxu0 0.0
        %2414 = vmatprep.subr.mxu0 0.0
        %2415 = vmatpush1.msra.mxu0 0.0
        %2416 = vmatprep.subr.mxu0 0.0
        %2417 = vmatpush1.msra.mxu0 0.0
        %2418 = vmatprep.subr.mxu0 0.0
        %2419 = vmatpush1.msra.mxu0 0.0
        %2420 = vmatprep.subr.mxu0 0.0
        %2421 = vmatpush1.msra.mxu0 0.0
        %2422 = vmatprep.subr.mxu0 0.0
        %2423 = vmatpush1.msra.mxu0 0.0
        %2424 = vmatprep.subr.mxu0 0.0
        %2425 = vmatpush1.msra.mxu0 0.0
        %2426 = vmatprep.subr.mxu0 0.0
        %2427 = vmatpush1.msra.mxu0 0.0
        %2428 = vmatprep.subr.mxu0 0.0
        %2429 = vmatpush1.msra.mxu0 0.0
        %2430 = vmatprep.subr.mxu0 0.0
        %2431 = vmatpush1.msra.mxu0 0.0
        %2432 = vmatprep.subr.mxu0 0.0
        %2433 = vmatpush1.msra.mxu0 0.0
        %2434 = vmatprep.subr.mxu0 0.0
        %2435 = vmatpush1.msra.mxu0 0.0
        %2436 = vmatprep.subr.mxu0 0.0
        %2437 = vmatpush1.msra.mxu0 0.0
        %2438 = vmatprep.subr.mxu0 0.0
        %2439 = vmatpush1.msra.mxu0 0.0
        %2440 = vmatprep.subr.mxu0 0.0
        %2441 = vmatpush1.msra.mxu0 0.0
        %2442 = vmatprep.subr.mxu0 0.0
        %2443 = vmatpush1.msra.mxu0 0.0
        %2444 = vmatprep.subr.mxu0 0.0
        %2445 = vmatpush1.msra.mxu0 0.0
        %2446 = vmatprep.subr.mxu0 0.0
        %2447 = vmatpush1.msra.mxu0 0.0
        %2448 = vmatprep.subr.mxu0 0.0
        %2449 = vmatpush1.msra.mxu0 0.0
        %2450 = vmatprep.subr.mxu0 0.0
        %2451 = vmatpush1.msra.mxu0 0.0
        %2452 = vmatprep.subr.mxu0 0.0
        %2453 = vmatpush1.msra.mxu0 0.0
        %2454 = vmatprep.subr.mxu0 0.0
        %2455 = vmatpush1.msra.mxu0 0.0
        %2456 = vmatprep.subr.mxu0 0.0
        %2457 = vmatpush1.msra.mxu0 0.0
        %2458 = vmatprep.subr.mxu0 0.0
        %2459 = vmatpush1.msra.mxu0 0.0
        %2460 = vmatprep.subr.mxu0 0.0
        %2461 = vmatpush1.msra.mxu0 0.0
        %2462 = vmatprep.subr.mxu0 0.0
        %2463 = vmatpush1.msra.mxu0 0.0
        %2464 = vmatprep.subr.mxu0 0.0
        %2465 = vmatpush1.msra.mxu0 0.0
        %2466 = vmatprep.subr.mxu0 0.0
        %2467 = vmatpush1.msra.mxu0 0.0
        %2468 = vmatprep.subr.mxu0 0.0
        %2469 = vmatpush1.msra.mxu0 0.0
        %2470 = vmatprep.mubr.f32.mxu0 0.0
        %2471 = vmatmul.mubr.f32.gmra.mrb[0].mxu0 %v2328
        %v2472 = vpop.f32.mrb[0].mxu0
        %v2473 = vadd.f32 0.0, %v2472
        %v2474 = vpop.f32.mrb[0].mxu0
        %2475 = vdwg.mxu0
        %v2477 = vcombine.high %v2400, %v2400
        %v2479 = vunpack.c.l.s4 1966171168
        %v2480 = vunpack.c.0.s8 %v2479
        %v2481 = vlaneseq
        %v2482 = vshrl.u32 %v2481, 7
        %v2483 = vsub.s32 %v2480, %v2482
        %v2484 = vrot.slane %v2400, %v2483
        %v2486 = vunpack.c.l.s4 1966171168
        %v2487 = vunpack.c.0.s8 %v2486
        %v2488 = vlaneseq
        %v2489 = vshrl.u32 %v2488, 7
        %v2490 = vsub.s32 %v2487, %v2489
        %v2491 = vrot.slane %v2477, %v2490
        %v2492 = vcombine.high %v2484, %v2484
        %v2493 = vcombine.high %v2491, %v2491
        %v2495 = vunpack.c.l.s4 1966171168
        %v2496 = vunpack.c.0.s8 %v2495
        %v2497 = vlaneseq
        %v2498 = vshrl.u32 %v2497, 7
        %v2499 = vsub.s32 %v2496, %v2498
        %v2500 = vrot.slane %v2484, %v2499
        %v2502 = vunpack.c.l.s4 1966171168
        %v2503 = vunpack.c.0.s8 %v2502
        %v2504 = vlaneseq
        %v2505 = vshrl.u32 %v2504, 7
        %v2506 = vsub.s32 %v2503, %v2505
        %v2507 = vrot.slane %v2491, %v2506
        %v2509 = vunpack.c.l.s4 1966171168
        %v2510 = vunpack.c.0.s8 %v2509
        %v2511 = vlaneseq
        %v2512 = vshrl.u32 %v2511, 7
        %v2513 = vsub.s32 %v2510, %v2512
        %v2514 = vrot.slane %v2492, %v2513
        %v2516 = vunpack.c.l.s4 1966171168
        %v2517 = vunpack.c.0.s8 %v2516
        %v2518 = vlaneseq
        %v2519 = vshrl.u32 %v2518, 7
        %v2520 = vsub.s32 %v2517, %v2519
        %v2521 = vrot.slane %v2493, %v2520
        %v2522 = vcombine.high %v2500, %v2500
        %v2523 = vcombine.high %v2507, %v2507
        %v2524 = vcombine.high %v2514, %v2514
        %v2525 = vcombine.high %v2521, %v2521
        %v2526 = vlaneseq
        %v2527 = vshrl.u32 %v2526, 7
        %v2528 = vsub.s32 0, %v2527
        %v2529 = vrot.slane %v2500, %v2528
        %v2530 = vlaneseq
        %v2531 = vshrl.u32 %v2530, 7
        %v2532 = vsub.s32 0, %v2531
        %v2533 = vrot.slane %v2514, %v2532
        %v2534 = vlaneseq
        %v2535 = vshrl.u32 %v2534, 7
        %v2536 = vsub.s32 0, %v2535
        %v2537 = vrot.slane %v2522, %v2536
        %v2538 = vlaneseq
        %v2539 = vshrl.u32 %v2538, 7
        %v2540 = vsub.s32 0, %v2539
        %v2541 = vrot.slane %v2524, %v2540
        %v2542 = vlaneseq
        %v2543 = vshrl.u32 %v2542, 7
        %v2544 = vsub.s32 0, %v2543
        %v2545 = vrot.slane %v2507, %v2544
        %v2546 = vlaneseq
        %v2547 = vshrl.u32 %v2546, 7
        %v2548 = vsub.s32 0, %v2547
        %v2549 = vrot.slane %v2521, %v2548
        %v2550 = vlaneseq
        %v2551 = vshrl.u32 %v2550, 7
        %v2552 = vsub.s32 0, %v2551
        %v2553 = vrot.slane %v2523, %v2552
        %v2554 = vlaneseq
        %v2555 = vshrl.u32 %v2554, 7
        %v2556 = vsub.s32 0, %v2555
        %v2557 = vrot.slane %v2525, %v2556
        %v2566 = vadd.f32 %v2529, %v2473
        %v2567 = vadd.f32 %v2533, %v2473
        %v2568 = vadd.f32 %v2537, %v2473
        %v2569 = vadd.f32 %v2541, %v2473
        %v2570 = vadd.f32 %v2545, %v2473
        %v2571 = vadd.f32 %v2549, %v2473
        %v2572 = vadd.f32 %v2553, %v2473
        %v2573 = vadd.f32 %v2557, %v2473
        %v2574 = vlaneseq
        %v2575 = vshrl.u32 %v2574, 7
        %v2576 = vsub.s32 0, %v2575
        %v2577 = vrot.slane %v2325, %v2576
        %2579 = vbcast.lane.b32.xlu0 %v2577, 256
        %v2580 = vpop.permute.xlu0 %2579
        %v2581 = vlaneseq
        %v2582 = vshrl.u32 %v2581, 7
        %v2583 = vsub.s32 1, %v2582
        %v2584 = vrot.slane %v2325, %v2583
        %2586 = vbcast.lane.b32.xlu0 %v2584, 256
        %v2587 = vpop.permute.xlu0 %2586
        %v2588 = vlaneseq
        %v2589 = vshrl.u32 %v2588, 7
        %v2590 = vsub.s32 2, %v2589
        %v2591 = vrot.slane %v2325, %v2590
        %2593 = vbcast.lane.b32.xlu0 %v2591, 256
        %v2594 = vpop.permute.xlu0 %2593
        %v2595 = vlaneseq
        %v2596 = vshrl.u32 %v2595, 7
        %v2597 = vsub.s32 3, %v2596
        %v2598 = vrot.slane %v2325, %v2597
        %2600 = vbcast.lane.b32.xlu0 %v2598, 256
        %v2601 = vpop.permute.xlu0 %2600
        %v2602 = vlaneseq
        %v2603 = vshrl.u32 %v2602, 7
        %v2604 = vsub.s32 4, %v2603
        %v2605 = vrot.slane %v2325, %v2604
        %2607 = vbcast.lane.b32.xlu0 %v2605, 256
        %v2608 = vpop.permute.xlu0 %2607
        %v2609 = vlaneseq
        %v2610 = vshrl.u32 %v2609, 7
        %v2611 = vsub.s32 5, %v2610
        %v2612 = vrot.slane %v2325, %v2611
        %2614 = vbcast.lane.b32.xlu0 %v2612, 256
        %v2615 = vpop.permute.xlu0 %2614
        %v2616 = vlaneseq
        %v2617 = vshrl.u32 %v2616, 7
        %v2618 = vsub.s32 6, %v2617
        %v2619 = vrot.slane %v2325, %v2618
        %2621 = vbcast.lane.b32.xlu0 %v2619, 256
        %v2622 = vpop.permute.xlu0 %2621
        %v2623 = vlaneseq
        %v2624 = vshrl.u32 %v2623, 7
        %v2625 = vsub.s32 7, %v2624
        %v2626 = vrot.slane %v2325, %v2625
        %2628 = vbcast.lane.b32.xlu0 %v2626, 256
        %v2629 = vpop.permute.xlu0 %2628
        %v2631 = vlaneseq
        %v2632 = vshrl.u32 %v2631, 7
        %v2633 = vsub.s32 0, %v2632
        %v2634 = vrot.slane %v2069, %v2633
        %v2636 = vmul.f32 %v2580, %v2634
        %v2637 = vmul.f32 %v2587, %v2634
        %v2638 = vmul.f32 %v2594, %v2634
        %v2639 = vmul.f32 %v2601, %v2634
        %v2640 = vmul.f32 %v2608, %v2634
        %v2641 = vmul.f32 %v2615, %v2634
        %v2642 = vmul.f32 %v2622, %v2634
        %v2643 = vmul.f32 %v2629, %v2634
        %v2644 = vadd.f32 %v2566, %v2636
        %v2645 = vadd.f32 %v2567, %v2637
        %v2646 = vadd.f32 %v2568, %v2638
        %v2647 = vadd.f32 %v2569, %v2639
        %v2648 = vadd.f32 %v2570, %v2640
        %v2649 = vadd.f32 %v2571, %v2641
        %v2650 = vadd.f32 %v2572, %v2642
        %v2651 = vadd.f32 %v2573, %v2643
        %v2652 = vlaneseq
        %v2653 = vshrl.u32 %v2652, 7
        %v2654 = vsub.s32 0, %v2653
        %v2655 = vrot.slane %v2326, %v2654
        %2657 = vbcast.lane.b32.xlu0 %v2655, 256
        %v2658 = vpop.permute.xlu0 %2657
        %v2659 = vlaneseq
        %v2660 = vshrl.u32 %v2659, 7
        %v2661 = vsub.s32 1, %v2660
        %v2662 = vrot.slane %v2326, %v2661
        %2664 = vbcast.lane.b32.xlu0 %v2662, 256
        %v2665 = vpop.permute.xlu0 %2664
        %v2666 = vlaneseq
        %v2667 = vshrl.u32 %v2666, 7
        %v2668 = vsub.s32 2, %v2667
        %v2669 = vrot.slane %v2326, %v2668
        %2671 = vbcast.lane.b32.xlu0 %v2669, 256
        %v2672 = vpop.permute.xlu0 %2671
        %v2673 = vlaneseq
        %v2674 = vshrl.u32 %v2673, 7
        %v2675 = vsub.s32 3, %v2674
        %v2676 = vrot.slane %v2326, %v2675
        %2678 = vbcast.lane.b32.xlu0 %v2676, 256
        %v2679 = vpop.permute.xlu0 %2678
        %v2680 = vlaneseq
        %v2681 = vshrl.u32 %v2680, 7
        %v2682 = vsub.s32 4, %v2681
        %v2683 = vrot.slane %v2326, %v2682
        %2685 = vbcast.lane.b32.xlu0 %v2683, 256
        %v2686 = vpop.permute.xlu0 %2685
        %v2687 = vlaneseq
        %v2688 = vshrl.u32 %v2687, 7
        %v2689 = vsub.s32 5, %v2688
        %v2690 = vrot.slane %v2326, %v2689
        %2692 = vbcast.lane.b32.xlu0 %v2690, 256
        %v2693 = vpop.permute.xlu0 %2692
        %v2694 = vlaneseq
        %v2695 = vshrl.u32 %v2694, 7
        %v2696 = vsub.s32 6, %v2695
        %v2697 = vrot.slane %v2326, %v2696
        %2699 = vbcast.lane.b32.xlu0 %v2697, 256
        %v2700 = vpop.permute.xlu0 %2699
        %v2701 = vlaneseq
        %v2702 = vshrl.u32 %v2701, 7
        %v2703 = vsub.s32 7, %v2702
        %v2704 = vrot.slane %v2326, %v2703
        %2706 = vbcast.lane.b32.xlu0 %v2704, 256
        %v2707 = vpop.permute.xlu0 %2706
        %v2709 = vlaneseq
        %v2710 = vshrl.u32 %v2709, 7
        %v2711 = vsub.s32 0, %v2710
        %v2712 = vrot.slane %v2070, %v2711
        %v2714 = vmul.f32 %v2658, %v2712
        %v2715 = vmul.f32 %v2665, %v2712
        %v2716 = vmul.f32 %v2672, %v2712
        %v2717 = vmul.f32 %v2679, %v2712
        %v2718 = vmul.f32 %v2686, %v2712
        %v2719 = vmul.f32 %v2693, %v2712
        %v2720 = vmul.f32 %v2700, %v2712
        %v2721 = vmul.f32 %v2707, %v2712
        %v2722 = vadd.f32 %v2644, %v2714
        %v2723 = vadd.f32 %v2645, %v2715
        %v2724 = vadd.f32 %v2646, %v2716
        %v2725 = vadd.f32 %v2647, %v2717
        %v2726 = vadd.f32 %v2648, %v2718
        %v2727 = vadd.f32 %v2649, %v2719
        %v2728 = vadd.f32 %v2650, %v2720
        %v2729 = vadd.f32 %v2651, %v2721
        %v2731 = vlaneseq
        %v2732 = vshrl.u32 %v2731, 7
        %v2733 = vsub.s32 0, %v2732
        %v2734 = vrot.slane %v2071, %v2733
        %v2736 = vadd.f32 %v2722, %v2734
        %v2737 = vadd.f32 %v2723, %v2734
        %v2738 = vadd.f32 %v2724, %v2734
        %v2739 = vadd.f32 %v2725, %v2734
        %v2740 = vadd.f32 %v2726, %v2734
        %v2741 = vadd.f32 %v2727, %v2734
        %v2742 = vadd.f32 %v2728, %v2734
        %v2743 = vadd.f32 %v2729, %v2734
        %v2744 = vmul.f32 %v2736, 0.999995
        %v2745 = vmul.f32 %v2737, 0.999995
        %v2746 = vmul.f32 %v2738, 0.999995
        %v2747 = vmul.f32 %v2739, 0.999995
        %v2748 = vmul.f32 %v2740, 0.999995
        %v2749 = vmul.f32 %v2741, 0.999995
        %v2750 = vmul.f32 %v2742, 0.999995
        %v2751 = vmul.f32 %v2743, 0.999995
        %vm2752 = vcmp.gt.f32.partialorder %v2744, 0.0
        %vm2753 = vcmp.gt.f32.partialorder %v2745, 0.0
        %vm2754 = vcmp.gt.f32.partialorder %v2746, 0.0
        %vm2755 = vcmp.gt.f32.partialorder %v2747, 0.0
        %vm2756 = vcmp.gt.f32.partialorder %v2748, 0.0
        %vm2757 = vcmp.gt.f32.partialorder %v2749, 0.0
        %vm2758 = vcmp.gt.f32.partialorder %v2750, 0.0
        %vm2759 = vcmp.gt.f32.partialorder %v2751, 0.0
        %v2760 = vmul.f32 %v2744, 0.01
        %v2761 = vmul.f32 %v2745, 0.01
        %v2762 = vmul.f32 %v2746, 0.01
        %v2763 = vmul.f32 %v2747, 0.01
        %v2764 = vmul.f32 %v2748, 0.01
        %v2765 = vmul.f32 %v2749, 0.01
        %v2766 = vmul.f32 %v2750, 0.01
        %v2767 = vmul.f32 %v2751, 0.01
        %v2768 = vsel %vm2752, %v2744, %v2760
        %v2769 = vsel %vm2753, %v2745, %v2761
        %v2770 = vsel %vm2754, %v2746, %v2762
        %v2771 = vsel %vm2755, %v2747, %v2763
        %v2772 = vsel %vm2756, %v2748, %v2764
        %v2773 = vsel %vm2757, %v2749, %v2765
        %v2774 = vsel %vm2758, %v2750, %v2766
        %v2775 = vsel %vm2759, %v2751, %v2767
        %v2776 = vsel %vm1576, %v2319, 0.0
        %2777 = vadd.xlane.f32.xlu0 %v2776
        %v2778 = vpop.xlane.xlu0 %2777
        %v2779 = vmul.f32 %v1822, %v2778
        %vm2780 = vcmp.gt.f32.partialorder %v2779, 0.0
        %v2781 = vsel %vm2780, %v2779, 1.0
        %v2782 = vrcp.pop %v2781
        %v2783 = vsel %vm2780, %v2782, 0.0
        %v2784 = vmul.f32 %v2783, %v1822
        %2786 = vset.pattern.permute.xlu0 0
        %2787 = vperm.xlu0 %2786, %v2784
        %v2788 = vpop.permute.xlu0 %2787
        %v2790 = vmul.f32 %v2788, %v2319
        %v2791 = vsel %vm1576, %v2790, 0.0
        %2792 = vadd.xlane.f32.xlu0 %v2791
        %v2793 = vpop.xlane.xlu0 %2792
        %v2794 = vlaneseq
        %v2795 = vshrl.u32 %v2794, 7
        %v2796 = vsub.s32 0, %v2795
        %v2797 = vrot.slane %v2790, %v2796
        %2799 = vbcast.lane.b32.xlu0 %v2797, 256
        %v2800 = vpop.permute.xlu0 %2799
        %v2801 = vlaneseq
        %v2802 = vshrl.u32 %v2801, 7
        %v2803 = vsub.s32 1, %v2802
        %v2804 = vrot.slane %v2790, %v2803
        %2806 = vbcast.lane.b32.xlu0 %v2804, 256
        %v2807 = vpop.permute.xlu0 %2806
        %v2808 = vlaneseq
        %v2809 = vshrl.u32 %v2808, 7
        %v2810 = vsub.s32 2, %v2809
        %v2811 = vrot.slane %v2790, %v2810
        %2813 = vbcast.lane.b32.xlu0 %v2811, 256
        %v2814 = vpop.permute.xlu0 %2813
        %v2815 = vlaneseq
        %v2816 = vshrl.u32 %v2815, 7
        %v2817 = vsub.s32 3, %v2816
        %v2818 = vrot.slane %v2790, %v2817
        %2820 = vbcast.lane.b32.xlu0 %v2818, 256
        %v2821 = vpop.permute.xlu0 %2820
        %v2822 = vlaneseq
        %v2823 = vshrl.u32 %v2822, 7
        %v2824 = vsub.s32 4, %v2823
        %v2825 = vrot.slane %v2790, %v2824
        %2827 = vbcast.lane.b32.xlu0 %v2825, 256
        %v2828 = vpop.permute.xlu0 %2827
        %v2829 = vlaneseq
        %v2830 = vshrl.u32 %v2829, 7
        %v2831 = vsub.s32 5, %v2830
        %v2832 = vrot.slane %v2790, %v2831
        %2834 = vbcast.lane.b32.xlu0 %v2832, 256
        %v2835 = vpop.permute.xlu0 %2834
        %v2836 = vlaneseq
        %v2837 = vshrl.u32 %v2836, 7
        %v2838 = vsub.s32 6, %v2837
        %v2839 = vrot.slane %v2790, %v2838
        %2841 = vbcast.lane.b32.xlu0 %v2839, 256
        %v2842 = vpop.permute.xlu0 %2841
        %v2843 = vlaneseq
        %v2844 = vshrl.u32 %v2843, 7
        %v2845 = vsub.s32 7, %v2844
        %v2846 = vrot.slane %v2790, %v2845
        %2848 = vbcast.lane.b32.xlu0 %v2846, 256
        %v2849 = vpop.permute.xlu0 %2848
        %v2850 = vmul.f32 %v2800, %v2768
        %v2851 = vmul.f32 %v2807, %v2769
        %v2852 = vmul.f32 %v2814, %v2770
        %v2853 = vmul.f32 %v2821, %v2771
        %v2854 = vmul.f32 %v2828, %v2772
        %v2855 = vmul.f32 %v2835, %v2773
        %v2856 = vmul.f32 %v2842, %v2774
        %v2857 = vmul.f32 %v2849, %v2775
        %v2858 = vsel %vm1659, %v2850, 0.0
        %v2859 = vrot.slane %v2858, 4
        %v2860 = vadd.f32 %v2858, %v2859
        %v2861 = vrot.slane %v2860, 2
        %v2862 = vadd.f32 %v2860, %v2861
        %v2863 = vrot.slane %v2862, 1
        %v2864 = vadd.f32 %v2862, %v2863
        %v2865 = vsel %vm1659, %v2851, 0.0
        %v2866 = vrot.slane %v2865, 4
        %v2867 = vadd.f32 %v2865, %v2866
        %v2868 = vrot.slane %v2867, 2
        %v2869 = vadd.f32 %v2867, %v2868
        %v2870 = vrot.slane %v2869, 1
        %v2871 = vadd.f32 %v2869, %v2870
        %v2872 = vsel %vm1659, %v2852, 0.0
        %v2873 = vrot.slane %v2872, 4
        %v2874 = vadd.f32 %v2872, %v2873
        %v2875 = vrot.slane %v2874, 2
        %v2876 = vadd.f32 %v2874, %v2875
        %v2877 = vrot.slane %v2876, 1
        %v2878 = vadd.f32 %v2876, %v2877
        %v2879 = vsel %vm1659, %v2853, 0.0
        %v2880 = vrot.slane %v2879, 4
        %v2881 = vadd.f32 %v2879, %v2880
        %v2882 = vrot.slane %v2881, 2
        %v2883 = vadd.f32 %v2881, %v2882
        %v2884 = vrot.slane %v2883, 1
        %v2885 = vadd.f32 %v2883, %v2884
        %v2886 = vsel %vm1659, %v2854, 0.0
        %v2887 = vrot.slane %v2886, 4
        %v2888 = vadd.f32 %v2886, %v2887
        %v2889 = vrot.slane %v2888, 2
        %v2890 = vadd.f32 %v2888, %v2889
        %v2891 = vrot.slane %v2890, 1
        %v2892 = vadd.f32 %v2890, %v2891
        %v2893 = vsel %vm1659, %v2855, 0.0
        %v2894 = vrot.slane %v2893, 4
        %v2895 = vadd.f32 %v2893, %v2894
        %v2896 = vrot.slane %v2895, 2
        %v2897 = vadd.f32 %v2895, %v2896
        %v2898 = vrot.slane %v2897, 1
        %v2899 = vadd.f32 %v2897, %v2898
        %v2900 = vsel %vm1659, %v2856, 0.0
        %v2901 = vrot.slane %v2900, 4
        %v2902 = vadd.f32 %v2900, %v2901
        %v2903 = vrot.slane %v2902, 2
        %v2904 = vadd.f32 %v2902, %v2903
        %v2905 = vrot.slane %v2904, 1
        %v2906 = vadd.f32 %v2904, %v2905
        %v2907 = vsel %vm1659, %v2857, 0.0
        %v2908 = vrot.slane %v2907, 4
        %v2909 = vadd.f32 %v2907, %v2908
        %v2910 = vrot.slane %v2909, 2
        %v2911 = vadd.f32 %v2909, %v2910
        %v2912 = vrot.slane %v2911, 1
        %v2913 = vadd.f32 %v2911, %v2912
        %v2922 = vsel %vm1724, %v2871, %v2864
        %v2923 = vsel %vm1726, %v2878, %v2922
        %v2924 = vsel %vm1728, %v2885, %v2923
        %v2925 = vsel %vm1730, %v2892, %v2924
        %v2926 = vsel %vm1732, %v2899, %v2925
        %v2927 = vsel %vm1734, %v2906, %v2926
        %v2928 = vsel %vm1736, %v2913, %v2927
        %v2929 = vsel %vm1659, %v2928, 0
        %v2932 = vsel %vm1740, %v2073, 0
        %2934 = vmatprep.subr.mxu0 0.0
        %2935 = vmatpush1.msra.mxu0 %v2072
        %2936 = vmatprep.subr.mxu0 0.0
        %2937 = vmatpush1.msra.mxu0 %v2932
        %2938 = vmatprep.subr.mxu0 0.0
        %2939 = vmatpush1.msra.mxu0 0.0
        %2940 = vmatprep.subr.mxu0 0.0
        %2941 = vmatpush1.msra.mxu0 0.0
        %2942 = vmatprep.subr.mxu0 0.0
        %2943 = vmatpush1.msra.mxu0 0.0
        %2944 = vmatprep.subr.mxu0 0.0
        %2945 = vmatpush1.msra.mxu0 0.0
        %2946 = vmatprep.subr.mxu0 0.0
        %2947 = vmatpush1.msra.mxu0 0.0
        %2948 = vmatprep.subr.mxu0 0.0
        %2949 = vmatpush1.msra.mxu0 0.0
        %2950 = vmatprep.subr.mxu0 0.0
        %2951 = vmatpush1.msra.mxu0 0.0
        %2952 = vmatprep.subr.mxu0 0.0
        %2953 = vmatpush1.msra.mxu0 0.0
        %2954 = vmatprep.subr.mxu0 0.0
        %2955 = vmatpush1.msra.mxu0 0.0
        %2956 = vmatprep.subr.mxu0 0.0
        %2957 = vmatpush1.msra.mxu0 0.0
        %2958 = vmatprep.subr.mxu0 0.0
        %2959 = vmatpush1.msra.mxu0 0.0
        %2960 = vmatprep.subr.mxu0 0.0
        %2961 = vmatpush1.msra.mxu0 0.0
        %2962 = vmatprep.subr.mxu0 0.0
        %2963 = vmatpush1.msra.mxu0 0.0
        %2964 = vmatprep.subr.mxu0 0.0
        %2965 = vmatpush1.msra.mxu0 0.0
        %2966 = vmatprep.subr.mxu0 0.0
        %2967 = vmatpush1.msra.mxu0 0.0
        %2968 = vmatprep.subr.mxu0 0.0
        %2969 = vmatpush1.msra.mxu0 0.0
        %2970 = vmatprep.subr.mxu0 0.0
        %2971 = vmatpush1.msra.mxu0 0.0
        %2972 = vmatprep.subr.mxu0 0.0
        %2973 = vmatpush1.msra.mxu0 0.0
        %2974 = vmatprep.subr.mxu0 0.0
        %2975 = vmatpush1.msra.mxu0 0.0
        %2976 = vmatprep.subr.mxu0 0.0
        %2977 = vmatpush1.msra.mxu0 0.0
        %2978 = vmatprep.subr.mxu0 0.0
        %2979 = vmatpush1.msra.mxu0 0.0
        %2980 = vmatprep.subr.mxu0 0.0
        %2981 = vmatpush1.msra.mxu0 0.0
        %2982 = vmatprep.subr.mxu0 0.0
        %2983 = vmatpush1.msra.mxu0 0.0
        %2984 = vmatprep.subr.mxu0 0.0
        %2985 = vmatpush1.msra.mxu0 0.0
        %2986 = vmatprep.subr.mxu0 0.0
        %2987 = vmatpush1.msra.mxu0 0.0
        %2988 = vmatprep.subr.mxu0 0.0
        %2989 = vmatpush1.msra.mxu0 0.0
        %2990 = vmatprep.subr.mxu0 0.0
        %2991 = vmatpush1.msra.mxu0 0.0
        %2992 = vmatprep.subr.mxu0 0.0
        %2993 = vmatpush1.msra.mxu0 0.0
        %2994 = vmatprep.subr.mxu0 0.0
        %2995 = vmatpush1.msra.mxu0 0.0
        %2996 = vmatprep.subr.mxu0 0.0
        %2997 = vmatpush1.msra.mxu0 0.0
        %2998 = vmatprep.mubr.f32.mxu0 0.0
        %2999 = vmatmul.mubr.f32.gmra.mrb[0].mxu0 %v2929
        %v3000 = vpop.f32.mrb[0].mxu0
        %v3001 = vadd.f32 0.0, %v3000
        %v3002 = vpop.f32.mrb[0].mxu0
        %3003 = vdwg.mxu0
        %v3005 = vlaneseq
        %v3006 = vshrl.u32 %v3005, 7
        %v3007 = vsub.s32 0, %v3006
        %v3008 = vrot.slane %v2074, %v3007
        %v3010 = vmul.f32 %v2793, %v3008
        %v3011 = vadd.f32 %v3001, %v3010
        %v3012 = vmul.f32 %v1822, %v2793
        %v3013 = vmul.f32 %v2064, %v2793
        %v3014 = vmul.f32 %v3011, 6.2831855
        %v3015 = vand.u32 2147483647, %v3014
        %vm3016 = vcmp.le.f32.partialorder %v3015, 0.7853982
        %vm3017 = vcmp.lt.s32.totalorder %v3014, 0
        %v3018 = vand.u32 %v3014, 2139095040
        %v3019 = vshrl.u32 %v3018, 23
        %v3020 = vsub.s32 %v3019, 127
        %v3021 = vand.u32 2147483647, %v3014
        %v3022 = vand.u32 %v3021, 8388607
        %v3023 = vor.u32 %v3022, 8388608
        %v3024 = vsub.s32 0, %v3023
        %v3025 = vadd.s32 %v3020, 1
        %vm3026 = vcmp.gt.s32.totalorder %v3025, 0
        %v3027 = vsel %vm3026, %v3025, 0
        %v3028 = vshrl.u32 %v3027, 5
        %v3029 = vand.u32 %v3027, 31
        %v3030 = vsub.s32 32, %v3029
        %v3031 = vshrl.u32 683565275, %v3030
        %v3032 = vshll.u32 683565275, %v3029
        %v3033 = vshrl.u32 2475754826, %v3030
        %v3034 = vor.u32 %v3032, %v3033
        %v3035 = vshll.u32 2475754826, %v3029
        %v3036 = vshrl.u32 2131351028, %v3030
        %v3037 = vor.u32 %v3035, %v3036
        %v3038 = vshll.u32 2131351028, %v3029
        %v3039 = vshrl.u32 2102212464, %v3030
        %v3040 = vor.u32 %v3038, %v3039
        %v3041 = vshll.u32 2102212464, %v3029
        %v3042 = vshrl.u32 920167782, %v3030
        %v3043 = vor.u32 %v3041, %v3042
        %v3044 = vshll.u32 920167782, %v3029
        %v3045 = vshrl.u32 1326507024, %v3030
        %v3046 = vor.u32 %v3044, %v3045
        %vm3047 = vcmp.lt.s32.totalorder %v3028, 1
        %vm3048 = vcmp.lt.s32.totalorder %v3028, 2
        %vm3049 = vcmp.lt.s32.totalorder %v3028, 3
        %vm3050 = vcmp.lt.s32.totalorder %v3028, 4
        %v3051 = vsel %vm3047, %v3031, %v3034
        %v3052 = vsel %vm3050, %v3040, 2102212464
        %v3053 = vsel %vm3049, %v3037, %v3052
        %v3054 = vsel %vm3048, %v3051, %v3053
        %v3055 = vsel %vm3047, %v3034, %v3037
        %v3056 = vsel %vm3050, %v3043, 920167782
        %v3057 = vsel %vm3049, %v3040, %v3056
        %v3058 = vsel %vm3048, %v3055, %v3057
        %v3059 = vsel %vm3047, %v3037, %v3040
        %v3060 = vsel %vm3050, %v3046, 1326507024
        %v3061 = vsel %vm3049, %v3043, %v3060
        %v3062 = vsel %vm3048, %v3059, %v3061
        %v3063 = vshll.u32 %v3023, 8
        %v3064 = vmul.u32.u64.compose %v3063, %v3062
        %v3065 = vextract.low.u32 %v3064
        %v3066 = vextract.high.u32 %v3064
        %v3067 = vmul.u32.u64.compose %v3063, %v3058
        %v3068 = vextract.low.u32 %v3067
        %v3069 = vextract.high.u32 %v3067
        %v3070 = vmul.u32 %v3063, %v3054
        %v3071 = vadd.s32 %v3066, %v3068
        %vm3072 = vc.u32 %v3066, %v3068
        %v3073 = vadd.s32 %v3069, 1
        %v3074 = vsel %vm3072, %v3073, %v3069
        %v3075 = vadd.s32 %v3070, %v3074
        %v3076 = vadd.s32 %v3075, 536870912
        %v3077 = vshrl.u32 %v3076, 30
        %v3078 = vshll.u32 %v3077, 30
        %v3079 = vsub.s32 %v3075, %v3078
        %vm3080 = vcmp.lt.s32.totalorder %v3079, 0
        %v3081 = vsub.s32 0, %v3079
        %v3082 = vsel %vm3080, %v3081, %v3079
        %v3083 = vclz %v3082
        %v3084 = vsub.s32 %v3083, 2
        %vm3085 = vcmp.gt.s32.totalorder 0, %v3084
        %v3086 = vsel %vm3085, 0, %v3084
        %v3087 = vsub.s32 32, %v3086
        %v3088 = vshll.u32 %v3079, %v3086
        %v3089 = vshrl.u32 %v3071, %v3087
        %v3090 = vor.u32 %v3088, %v3089
        %v3091 = vsub.s32 4294967266, %v3086
        %v3092 = vadd.s32 %v3091, 127
        %v3093 = vshll.u32 %v3092, 23
        %v3094 = vor.u32 4788187, %v3093
        %v3095 = vand.u32 2147483647, %v3094
        %v3097 = vcvt.s32.f32 %v3090
        %v3098 = vmul.f32 %v3097, %v3095
        %v3099 = vxor.u32 %v3098, 2147483648
        %v3100 = vsel %vm3017, %v3099, %v3098
        %v3101 = vsub.s32 4, %v3077
        %v3102 = vsel %vm3017, %v3101, %v3077
        %v3103 = vsel %vm3016, %v3014, %v3100
        %v3104 = vsel %vm3016, 0, %v3102
        %v3105 = vcosq.f32.pop %v3103
        %v3106 = vsinq.f32.pop %v3103
        %vm3107 = vweird.f32 %v3014
        %v3108 = vand.u32 %v3104, 3
        %vm3109 = vcmp.lt.s32.totalorder %v3108, 2
        %vm3110 = vcmp.eq.s32.totalorder %v3108, 0
        %v3111 = vxor.u32 %v3106, 2147483648
        %v3112 = vsel %vm3110, %v3105, %v3111
        %vm3113 = vcmp.eq.s32.totalorder %v3108, 2
        %v3114 = vxor.u32 %v3105, 2147483648
        %v3115 = vsel %vm3113, %v3114, %v3106
        %v3116 = vsel %vm3109, %v3112, %v3115
        %v3117 = vsel %vm3107, nan, %v3116
        %v3118 = vand.u32 2147483647, %v3014
        %vm3119 = vcmp.le.f32.partialorder %v3118, 0.7853982
        %vm3120 = vcmp.lt.s32.totalorder %v3014, 0
        %v3121 = vand.u32 %v3014, 2139095040
        %v3122 = vshrl.u32 %v3121, 23
        %v3123 = vsub.s32 %v3122, 127
        %v3124 = vand.u32 2147483647, %v3014
        %v3125 = vand.u32 %v3124, 8388607
        %v3126 = vor.u32 %v3125, 8388608
        %v3127 = vsub.s32 0, %v3126
        %v3128 = vadd.s32 %v3123, 1
        %vm3129 = vcmp.gt.s32.totalorder %v3128, 0
        %v3130 = vsel %vm3129, %v3128, 0
        %v3131 = vshrl.u32 %v3130, 5
        %v3132 = vand.u32 %v3130, 31
        %v3133 = vsub.s32 32, %v3132
        %v3134 = vshrl.u32 683565275, %v3133
        %v3135 = vshll.u32 683565275, %v3132
        %v3136 = vshrl.u32 2475754826, %v3133
        %v3137 = vor.u32 %v3135, %v3136
        %v3138 = vshll.u32 2475754826, %v3132
        %v3139 = vshrl.u32 2131351028, %v3133
        %v3140 = vor.u32 %v3138, %v3139
        %v3141 = vshll.u32 2131351028, %v3132
        %v3142 = vshrl.u32 2102212464, %v3133
        %v3143 = vor.u32 %v3141, %v3142
        %v3144 = vshll.u32 2102212464, %v3132
        %v3145 = vshrl.u32 920167782, %v3133
        %v3146 = vor.u32 %v3144, %v3145
        %v3147 = vshll.u32 920167782, %v3132
        %v3148 = vshrl.u32 1326507024, %v3133
        %v3149 = vor.u32 %v3147, %v3148
        %vm3150 = vcmp.lt.s32.totalorder %v3131, 1
        %vm3151 = vcmp.lt.s32.totalorder %v3131, 2
        %vm3152 = vcmp.lt.s32.totalorder %v3131, 3
        %vm3153 = vcmp.lt.s32.totalorder %v3131, 4
        %v3154 = vsel %vm3150, %v3134, %v3137
        %v3155 = vsel %vm3153, %v3143, 2102212464
        %v3156 = vsel %vm3152, %v3140, %v3155
        %v3157 = vsel %vm3151, %v3154, %v3156
        %v3158 = vsel %vm3150, %v3137, %v3140
        %v3159 = vsel %vm3153, %v3146, 920167782
        %v3160 = vsel %vm3152, %v3143, %v3159
        %v3161 = vsel %vm3151, %v3158, %v3160
        %v3162 = vsel %vm3150, %v3140, %v3143
        %v3163 = vsel %vm3153, %v3149, 1326507024
        %v3164 = vsel %vm3152, %v3146, %v3163
        %v3165 = vsel %vm3151, %v3162, %v3164
        %v3166 = vshll.u32 %v3126, 8
        %v3167 = vmul.u32.u64.compose %v3166, %v3165
        %v3168 = vextract.low.u32 %v3167
        %v3169 = vextract.high.u32 %v3167
        %v3170 = vmul.u32.u64.compose %v3166, %v3161
        %v3171 = vextract.low.u32 %v3170
        %v3172 = vextract.high.u32 %v3170
        %v3173 = vmul.u32 %v3166, %v3157
        %v3174 = vadd.s32 %v3169, %v3171
        %vm3175 = vc.u32 %v3169, %v3171
        %v3176 = vadd.s32 %v3172, 1
        %v3177 = vsel %vm3175, %v3176, %v3172
        %v3178 = vadd.s32 %v3173, %v3177
        %v3179 = vadd.s32 %v3178, 536870912
        %v3180 = vshrl.u32 %v3179, 30
        %v3181 = vshll.u32 %v3180, 30
        %v3182 = vsub.s32 %v3178, %v3181
        %vm3183 = vcmp.lt.s32.totalorder %v3182, 0
        %v3184 = vsub.s32 0, %v3182
        %v3185 = vsel %vm3183, %v3184, %v3182
        %v3186 = vclz %v3185
        %v3187 = vsub.s32 %v3186, 2
        %vm3188 = vcmp.gt.s32.totalorder 0, %v3187
        %v3189 = vsel %vm3188, 0, %v3187
        %v3190 = vsub.s32 32, %v3189
        %v3191 = vshll.u32 %v3182, %v3189
        %v3192 = vshrl.u32 %v3174, %v3190
        %v3193 = vor.u32 %v3191, %v3192
        %v3194 = vsub.s32 4294967266, %v3189
        %v3195 = vadd.s32 %v3194, 127
        %v3196 = vshll.u32 %v3195, 23
        %v3197 = vor.u32 4788187, %v3196
        %v3198 = vand.u32 2147483647, %v3197
        %v3200 = vcvt.s32.f32 %v3193
        %v3201 = vmul.f32 %v3200, %v3198
        %v3202 = vxor.u32 %v3201, 2147483648
        %v3203 = vsel %vm3120, %v3202, %v3201
        %v3204 = vsub.s32 4, %v3180
        %v3205 = vsel %vm3120, %v3204, %v3180
        %v3206 = vsel %vm3119, %v3014, %v3203
        %v3207 = vsel %vm3119, 0, %v3205
        %v3208 = vcosq.f32.pop %v3206
        %v3209 = vsinq.f32.pop %v3206
        %vm3210 = vweird.f32 %v3014
        %v3211 = vadd.s32 %v3207, 3
        %v3212 = vand.u32 %v3211, 3
        %vm3213 = vcmp.lt.s32.totalorder %v3212, 2
        %vm3214 = vcmp.eq.s32.totalorder %v3212, 0
        %v3215 = vxor.u32 %v3209, 2147483648
        %v3216 = vsel %vm3214, %v3208, %v3215
        %vm3217 = vcmp.eq.s32.totalorder %v3212, 2
        %v3218 = vxor.u32 %v3208, 2147483648
        %v3219 = vsel %vm3217, %v3218, %v3209
        %v3220 = vsel %vm3213, %v3216, %v3219
        %v3221 = vsel %vm3210, nan, %v3220
        %3223 = vrot.lane.b32.xlu0 %v3117, 118
        %v3224 = vpop.permute.xlu0 %3223
        %v3226 = vmul.f32 %v3013, %v3224
        %3228 = vrot.lane.b32.xlu0 %v3221, 119
        %v3229 = vpop.permute.xlu0 %3228
        %v3231 = vmul.f32 %v3013, %v3229
        %3233 = vrot.lane.b32.xlu0 %v3231, 127
        %v3234 = vpop.permute.xlu0 %3233
        %v3236 = vsub.f32 %v3226, %v3234
        %3237 = vrot.lane.b32.xlu0 %v3221, 118
        %v3238 = vpop.permute.xlu0 %3237
        %v3240 = vmul.f32 %v3013, %v3238
        %3241 = vrot.lane.b32.xlu0 %v3117, 119
        %v3242 = vpop.permute.xlu0 %3241
        %v3244 = vmul.f32 %v3013, %v3242
        %3246 = vrot.lane.b32.xlu0 %v3244, 127
        %v3247 = vpop.permute.xlu0 %3246
        %v3249 = vadd.f32 %v3240, %v3247
        %3251 = vrot.lane.b32.xlu0 %v3249, 1
        %v3252 = vpop.permute.xlu0 %3251
        %v3254 = vsel %vm782, %v3236, %v3252
        %v3255 = vmul.f32 %v3012, %v752
        %v3256 = vsel %vm782, %v3255, 0.0
        %v3257 = vrot.slane %v3256, 4
        %v3258 = vadd.f32 %v3256, %v3257
        %v3259 = vrot.slane %v3258, 2
        %v3260 = vadd.f32 %v3258, %v3259
        %v3261 = vrot.slane %v3260, 1
        %v3262 = vadd.f32 %v3260, %v3261
        %vm3263 = vcmp.gt.f32.partialorder %v3262, 0.0
        %v3264 = vsel %vm3263, %v3262, 1.0
        %v3265 = vrcp.pop %v3264
        %v3266 = vsel %vm3263, %v3265, 0.0
        %v3267 = vmul.f32 %v3266, %v3255
        %3269 = vset.pattern.permute.xlu0 0
        %3270 = vperm.xlu0 %3269, %v3267
        %v3271 = vpop.permute.xlu0 %3270
        %v3273 = vmul.f32 %v3271, %v3011
        %v3274 = vsel %vm1659, %v3273, 0.0
        %v3275 = vrot.slane %v3274, 4
        %v3276 = vadd.f32 %v3274, %v3275
        %v3277 = vrot.slane %v3276, 2
        %v3278 = vadd.f32 %v3276, %v3277
        %v3279 = vrot.slane %v3278, 1
        %v3280 = vadd.f32 %v3278, %v3279
        %v3281 = vmul.f32 %v3271, %v3254
        %v3282 = vsel %vm808, %v3281, 0.0
        %v3283 = vrot.slane %v3282, 4
        %v3284 = vadd.f32 %v3282, %v3283
        %v3285 = vrot.slane %v3284, 2
        %v3286 = vadd.f32 %v3284, %v3285
        %v3287 = vrot.slane %v3286, 1
        %v3288 = vadd.f32 %v3286, %v3287
        %v3289 = vld [vmem:[%s15] sm:$0xff]
        %v3290 = vld [vmem:[%s15 + $0x8] sm:$0x3]
        %v3291 = vld [vmem:[%s16] sm:$0x1]
        %v3293 = vsel %vm1659, %v3280, 0
        %v3296 = vsel %vm1740, %v3290, 0
        %3298 = vmatprep.subr.mxu0 0.0
        %3299 = vmatpush1.msra.mxu0 %v3289
        %3300 = vmatprep.subr.mxu0 0.0
        %3301 = vmatpush1.msra.mxu0 %v3296
        %3302 = vmatprep.subr.mxu0 0.0
        %3303 = vmatpush1.msra.mxu0 0.0
        %3304 = vmatprep.subr.mxu0 0.0
        %3305 = vmatpush1.msra.mxu0 0.0
        %3306 = vmatprep.subr.mxu0 0.0
        %3307 = vmatpush1.msra.mxu0 0.0
        %3308 = vmatprep.subr.mxu0 0.0
        %3309 = vmatpush1.msra.mxu0 0.0
        %3310 = vmatprep.subr.mxu0 0.0
        %3311 = vmatpush1.msra.mxu0 0.0
        %3312 = vmatprep.subr.mxu0 0.0
        %3313 = vmatpush1.msra.mxu0 0.0
        %3314 = vmatprep.subr.mxu0 0.0
        %3315 = vmatpush1.msra.mxu0 0.0
        %3316 = vmatprep.subr.mxu0 0.0
        %3317 = vmatpush1.msra.mxu0 0.0
        %3318 = vmatprep.subr.mxu0 0.0
        %3319 = vmatpush1.msra.mxu0 0.0
        %3320 = vmatprep.subr.mxu0 0.0
        %3321 = vmatpush1.msra.mxu0 0.0
        %3322 = vmatprep.subr.mxu0 0.0
        %3323 = vmatpush1.msra.mxu0 0.0
        %3324 = vmatprep.subr.mxu0 0.0
        %3325 = vmatpush1.msra.mxu0 0.0
        %3326 = vmatprep.subr.mxu0 0.0
        %3327 = vmatpush1.msra.mxu0 0.0
        %3328 = vmatprep.subr.mxu0 0.0
        %3329 = vmatpush1.msra.mxu0 0.0
        %3330 = vmatprep.subr.mxu0 0.0
        %3331 = vmatpush1.msra.mxu0 0.0
        %3332 = vmatprep.subr.mxu0 0.0
        %3333 = vmatpush1.msra.mxu0 0.0
        %3334 = vmatprep.subr.mxu0 0.0
        %3335 = vmatpush1.msra.mxu0 0.0
        %3336 = vmatprep.subr.mxu0 0.0
        %3337 = vmatpush1.msra.mxu0 0.0
        %3338 = vmatprep.subr.mxu0 0.0
        %3339 = vmatpush1.msra.mxu0 0.0
        %3340 = vmatprep.subr.mxu0 0.0
        %3341 = vmatpush1.msra.mxu0 0.0
        %3342 = vmatprep.subr.mxu0 0.0
        %3343 = vmatpush1.msra.mxu0 0.0
        %3344 = vmatprep.subr.mxu0 0.0
        %3345 = vmatpush1.msra.mxu0 0.0
        %3346 = vmatprep.subr.mxu0 0.0
        %3347 = vmatpush1.msra.mxu0 0.0
        %3348 = vmatprep.subr.mxu0 0.0
        %3349 = vmatpush1.msra.mxu0 0.0
        %3350 = vmatprep.subr.mxu0 0.0
        %3351 = vmatpush1.msra.mxu0 0.0
        %3352 = vmatprep.subr.mxu0 0.0
        %3353 = vmatpush1.msra.mxu0 0.0
        %3354 = vmatprep.subr.mxu0 0.0
        %3355 = vmatpush1.msra.mxu0 0.0
        %3356 = vmatprep.subr.mxu0 0.0
        %3357 = vmatpush1.msra.mxu0 0.0
        %3358 = vmatprep.subr.mxu0 0.0
        %3359 = vmatpush1.msra.mxu0 0.0
        %3360 = vmatprep.subr.mxu0 0.0
        %3361 = vmatpush1.msra.mxu0 0.0
        %3362 = vmatprep.mubr.f32.mxu0 0.0
        %3363 = vmatmul.mubr.f32.gmra.mrb[0].mxu0 %v3293
        %v3364 = vpop.f32.mrb[0].mxu0
        %v3365 = vadd.f32 %v3291, %v3364
        %v3366 = vpop.f32.mrb[0].mxu0
        %3367 = vdwg.mxu0
        %v3368 = vmul.f32 %v3365, 0.999995
        %vm3369 = vcmp.gt.f32.partialorder %v3368, 0.0
        %v3370 = vmul.f32 %v3368, 0.01
        %v3371 = vsel %vm3369, %v3368, %v3370
        %v3372 = vld [vmem:[%s17] sm:$0xff]
        %v3373 = vld [vmem:[%s17 + $0x8] sm:$0xff]
        %v3374 = vld [vmem:[%s17 + $0x10] sm:$0xff]
        %v3375 = vld [vmem:[%s17 + $0x18] sm:$0xff]
        %v3376 = vld [vmem:[%s18] sm:$0x1]
        %vm3377 = vcmask 261120
        %v3379 = vsel %vm3377, %v3371, 0
        %3381 = vmatprep.subr.mxu0 0.0
        %3382 = vmatpush1.msra.mxu0 %v3372
        %3383 = vmatprep.subr.mxu0 0.0
        %3384 = vmatpush1.msra.mxu0 %v3373
        %3385 = vmatprep.subr.mxu0 0.0
        %3386 = vmatpush1.msra.mxu0 %v3374
        %3387 = vmatprep.subr.mxu0 0.0
        %3388 = vmatpush1.msra.mxu0 %v3375
        %3389 = vmatprep.subr.mxu0 0.0
        %3390 = vmatpush1.msra.mxu0 0.0
        %3391 = vmatprep.subr.mxu0 0.0
        %3392 = vmatpush1.msra.mxu0 0.0
        %3393 = vmatprep.subr.mxu0 0.0
        %3394 = vmatpush1.msra.mxu0 0.0
        %3395 = vmatprep.subr.mxu0 0.0
        %3396 = vmatpush1.msra.mxu0 0.0
        %3397 = vmatprep.subr.mxu0 0.0
        %3398 = vmatpush1.msra.mxu0 0.0
        %3399 = vmatprep.subr.mxu0 0.0
        %3400 = vmatpush1.msra.mxu0 0.0
        %3401 = vmatprep.subr.mxu0 0.0
        %3402 = vmatpush1.msra.mxu0 0.0
        %3403 = vmatprep.subr.mxu0 0.0
        %3404 = vmatpush1.msra.mxu0 0.0
        %3405 = vmatprep.subr.mxu0 0.0
        %3406 = vmatpush1.msra.mxu0 0.0
        %3407 = vmatprep.subr.mxu0 0.0
        %3408 = vmatpush1.msra.mxu0 0.0
        %3409 = vmatprep.subr.mxu0 0.0
        %3410 = vmatpush1.msra.mxu0 0.0
        %3411 = vmatprep.subr.mxu0 0.0
        %3412 = vmatpush1.msra.mxu0 0.0
        %3413 = vmatprep.subr.mxu0 0.0
        %3414 = vmatpush1.msra.mxu0 0.0
        %3415 = vmatprep.subr.mxu0 0.0
        %3416 = vmatpush1.msra.mxu0 0.0
        %3417 = vmatprep.subr.mxu0 0.0
        %3418 = vmatpush1.msra.mxu0 0.0
        %3419 = vmatprep.subr.mxu0 0.0
        %3420 = vmatpush1.msra.mxu0 0.0
        %3421 = vmatprep.subr.mxu0 0.0
        %3422 = vmatpush1.msra.mxu0 0.0
        %3423 = vmatprep.subr.mxu0 0.0
        %3424 = vmatpush1.msra.mxu0 0.0
        %3425 = vmatprep.subr.mxu0 0.0
        %3426 = vmatpush1.msra.mxu0 0.0
        %3427 = vmatprep.subr.mxu0 0.0
        %3428 = vmatpush1.msra.mxu0 0.0
        %3429 = vmatprep.subr.mxu0 0.0
        %3430 = vmatpush1.msra.mxu0 0.0
        %3431 = vmatprep.subr.mxu0 0.0
        %3432 = vmatpush1.msra.mxu0 0.0
        %3433 = vmatprep.subr.mxu0 0.0
        %3434 = vmatpush1.msra.mxu0 0.0
        %3435 = vmatprep.subr.mxu0 0.0
        %3436 = vmatpush1.msra.mxu0 0.0
        %3437 = vmatprep.subr.mxu0 0.0
        %3438 = vmatpush1.msra.mxu0 0.0
        %3439 = vmatprep.subr.mxu0 0.0
        %3440 = vmatpush1.msra.mxu0 0.0
        %3441 = vmatprep.subr.mxu0 0.0
        %3442 = vmatpush1.msra.mxu0 0.0
        %3443 = vmatprep.subr.mxu0 0.0
        %3444 = vmatpush1.msra.mxu0 0.0
        %3445 = vmatprep.mubr.f32.mxu0 0.0
        %3446 = vmatmul.mubr.f32.gmra.mrb[0].mxu0 %v3379
        %v3447 = vpop.f32.mrb[0].mxu0
        %v3448 = vadd.f32 %v3376, %v3447
        %v3449 = vpop.f32.mrb[0].mxu0
        %3450 = vdwg.mxu0
        %v3451 = vmul.f32 %v3448, 0.999995
        %vm3452 = vcmp.gt.f32.partialorder %v3451, 0.0
        %v3453 = vmul.f32 %v3451, 0.01
        %v3454 = vsel %vm3452, %v3451, %v3453
        %v3455 = vld [vmem:[%s19] sm:$0xff]
        %v3456 = vld [vmem:[%s19 + $0x8] sm:$0xff]
        %v3457 = vld [vmem:[%s19 + $0x10] sm:$0xff]
        %v3458 = vld [vmem:[%s19 + $0x18] sm:$0xff]
        %v3459 = vld [vmem:[#allocation2] sm:$0x1]
        %v3461 = vsel %vm3377, %v3454, 0
        %3463 = vmatprep.subr.mxu0 0.0
        %3464 = vmatpush1.msra.mxu0 %v3455
        %3465 = vmatprep.subr.mxu0 0.0
        %3466 = vmatpush1.msra.mxu0 %v3456
        %3467 = vmatprep.subr.mxu0 0.0
        %3468 = vmatpush1.msra.mxu0 %v3457
        %3469 = vmatprep.subr.mxu0 0.0
        %3470 = vmatpush1.msra.mxu0 %v3458
        %3471 = vmatprep.subr.mxu0 0.0
        %3472 = vmatpush1.msra.mxu0 0.0
        %3473 = vmatprep.subr.mxu0 0.0
        %3474 = vmatpush1.msra.mxu0 0.0
        %3475 = vmatprep.subr.mxu0 0.0
        %3476 = vmatpush1.msra.mxu0 0.0
        %3477 = vmatprep.subr.mxu0 0.0
        %3478 = vmatpush1.msra.mxu0 0.0
        %3479 = vmatprep.subr.mxu0 0.0
        %3480 = vmatpush1.msra.mxu0 0.0
        %3481 = vmatprep.subr.mxu0 0.0
        %3482 = vmatpush1.msra.mxu0 0.0
        %3483 = vmatprep.subr.mxu0 0.0
        %3484 = vmatpush1.msra.mxu0 0.0
        %3485 = vmatprep.subr.mxu0 0.0
        %3486 = vmatpush1.msra.mxu0 0.0
        %3487 = vmatprep.subr.mxu0 0.0
        %3488 = vmatpush1.msra.mxu0 0.0
        %3489 = vmatprep.subr.mxu0 0.0
        %3490 = vmatpush1.msra.mxu0 0.0
        %3491 = vmatprep.subr.mxu0 0.0
        %3492 = vmatpush1.msra.mxu0 0.0
        %3493 = vmatprep.subr.mxu0 0.0
        %3494 = vmatpush1.msra.mxu0 0.0
        %3495 = vmatprep.subr.mxu0 0.0
        %3496 = vmatpush1.msra.mxu0 0.0
        %3497 = vmatprep.subr.mxu0 0.0
        %3498 = vmatpush1.msra.mxu0 0.0
        %3499 = vmatprep.subr.mxu0 0.0
        %3500 = vmatpush1.msra.mxu0 0.0
        %3501 = vmatprep.subr.mxu0 0.0
        %3502 = vmatpush1.msra.mxu0 0.0
        %3503 = vmatprep.subr.mxu0 0.0
        %3504 = vmatpush1.msra.mxu0 0.0
        %3505 = vmatprep.subr.mxu0 0.0
        %3506 = vmatpush1.msra.mxu0 0.0
        %3507 = vmatprep.subr.mxu0 0.0
        %3508 = vmatpush1.msra.mxu0 0.0
        %3509 = vmatprep.subr.mxu0 0.0
        %3510 = vmatpush1.msra.mxu0 0.0
        %3511 = vmatprep.subr.mxu0 0.0
        %3512 = vmatpush1.msra.mxu0 0.0
        %3513 = vmatprep.subr.mxu0 0.0
        %3514 = vmatpush1.msra.mxu0 0.0
        %3515 = vmatprep.subr.mxu0 0.0
        %3516 = vmatpush1.msra.mxu0 0.0
        %3517 = vmatprep.subr.mxu0 0.0
        %3518 = vmatpush1.msra.mxu0 0.0
        %3519 = vmatprep.subr.mxu0 0.0
        %3520 = vmatpush1.msra.mxu0 0.0
        %3521 = vmatprep.subr.mxu0 0.0
        %3522 = vmatpush1.msra.mxu0 0.0
        %3523 = vmatprep.subr.mxu0 0.0
        %3524 = vmatpush1.msra.mxu0 0.0
        %3525 = vmatprep.subr.mxu0 0.0
        %3526 = vmatpush1.msra.mxu0 0.0
        %3527 = vmatprep.mubr.f32.mxu0 0.0
        %3528 = vmatmul.mubr.f32.gmra.mrb[0].mxu0 %v3461
        %v3529 = vpop.f32.mrb[0].mxu0
        %v3530 = vadd.f32 %v3459, %v3529
        %v3531 = vpop.f32.mrb[0].mxu0
        %3532 = vdwg.mxu0
        %v3533 = vsub.f32 0.0, %v3530
        %v3534 = vmul.f32 %v3533, 1.442695
        %v3535 = vpow.pop %v3534
        %v3536 = vadd.f32 %v3535, 1.0
        %v3537 = vrcp.pop %v3536
        %v3538 = vmul.f32 1.0, %v3537
        %3540 = vrot.lane.b32.xlu0 %v3288, 1
        %v3541 = vpop.permute.xlu0 %3540
        %v3543 = vsel %vm782, %v3538, %v3541
        %vm3544 = vcmask 23552
        %v3545 = vsel %vm3544, %v3543, 0.0
        %3546 = vst [vmem:[%s736] sm:$0x1] %v3545
        %s3547 = sand.u32 %s495, 1
        %s3548 = scalar_lea.sflag [#allocation5], %s3547
        %s3549 = sand.u32 %s495, 1
        %s3550 = scalar_lea.vmem [#allocation15], %s3549
        // Predicated region
        $region133: #{tpu_custom_call.1} parent=103 // pred_check
          %p3551 = pneg %p505
        $region134: #{tpu_custom_call.1} parent=103 // pred_check_branch
          %3553 = sbr.rel (%p3551) target = $region136
        $region135: #{tpu_custom_call.1} parent=103 // pred_region
          %s3555 = ssub.s32 16, 16
          %3556 = vsyncadd %s3548, %s3555
          %s3557 = smul.addr %s41, 16
          %s3558 = scalar_lea.hbm %s21, %s3557
          %s3560 = sshll.u32 %s3550, 4
          %s3561 = int_to_ptr.vmem [resolvable:$true] %s3560
          %3563 = dma.vmem_to_hbm [thread:$0]  %s3561, 16, %s3558, %s3548
        $region136: #{tpu_custom_call.1} parent=103 // pred_fallthru
          _
      $region104: #{tpu_custom_call.1} parent=5 // pred_fallthru
        _
      %p3564 = scmp.le.s32.totalorder 2, %s36
      // Predicated region
      $region137: #{tpu_custom_call.1} parent=5 // pred_check
        %p3565 = pneg %p3564
      $region138: #{tpu_custom_call.1} parent=5 // pred_check_branch
        %3567 = sbr.rel (%p3565) target = $region140
      $region139: #{tpu_custom_call.1} parent=5 // pred_region
        %s3568 = ssub.s32 %s36, 2
        // Predicated region
        $region141: #{tpu_custom_call.1} parent=139 // pred_check
          %p3569 = pneg %p511
        $region142: #{tpu_custom_call.1} parent=139 // pred_check_branch
          %3571 = sbr.rel (%p3569) target = $region144
        $region143: #{tpu_custom_call.1} parent=139 // pred_region
          %s3572 = sand.u32 %s496, 1
          %s3573 = scalar_lea.sflag [#allocation5], %s3572
          %s3574 = sand.u32 %s496, 1
          %s3575 = scalar_lea.vmem [#allocation15], %s3574
          %3576 = dma.done %s3573, 16
        $region144: #{tpu_custom_call.1} parent=139 // pred_fallthru
          _
      $region140: #{tpu_custom_call.1} parent=5 // pred_fallthru
        _
    $region6: #{tpu_custom_call.1} parent=1 // loop_footer
      %s40 = sadd.s32 1, %s36
    $region7: #{tpu_custom_call.1} parent=1 // loop_footer_branch
      %35 = sbr.rel target = $region3
    $region8: #{tpu_custom_call.1} parent=1 // loop_exit
      _
    %3577 = vsyncpa [#allocation4], 1
    %s3578 = scalar_lea.sflag [#allocation4], 1
    %3579 = vsyncpa %s3578, 1
    %3580 = vsyncpa [#allocation7], 1
    %3581 = vsyncpa [#allocation10], 1
    %3582 = vsyncpa [#allocation13], 1
    %3583 = vsyncpa [#allocation5], 1
    %s3584 = scalar_lea.sflag [#allocation5], 1
    %3585 = vsyncpa %s3584, 1

</llo_original>
